<compile_context>
chip_gen: v6e
topology: v6e:2x2x1
jax: 0.10.0
libtpu: 0.0.40
codegen_flags: <defaults>
</compile_context>

<pallas_src>
import functools

import numpy as np
import jax
import jax.numpy as jnp
from jax import lax
from jax.experimental import pallas as pl
from jax.experimental.pallas import tpu as pltpu

BN_EPS = 1e-5
NEG_SLOPE = 0.2
COUT_PAD = 128          # lane-dense padding of the final Conv1d output channels


def _round8(n):
    return (n + 7) // 8 * 8


# ----------------------------------------------------------------------------
# Fused Pallas kernel: whole generator for one batch element
# ----------------------------------------------------------------------------
def _generator_kernel(x1_ref, w1_ref, s1_ref, w2_ref, s2_ref, w3_ref, s3_ref,
                      w4_ref, b4_ref, o_ref, *, dims):
    (M1, L1, P2, M2, L2, P3, M3, L3, P4) = dims
    f32 = jnp.float32

    def leaky(z):
        return jnp.where(z > 0, z, NEG_SLOPE * z)

    def interleave_pad(z, P, L_out):
        """Phase-joint activations z (M, 2*C) -> padded interleaved (P, C).

        Result row p is: 0 for p < 2, even[(p-2)//2] for even p-2,
        odd[(p-3)//2] for odd p-2, and 0 for p >= L_out + 2.  Implemented with
        two tiny 0/1 selection matmuls on the MXU — no strided stores and no
        sublane reshapes needed for the stride-2 interleave.
        """
        M = z.shape[0]
        C = z.shape[1] // 2
        even, odd = z[:, :C], z[:, C:]
        p = lax.broadcasted_iota(jnp.int32, (P, M), 0)
        m = lax.broadcasted_iota(jnp.int32, (P, M), 1)
        sel_e = (p == 2 * m + 2).astype(f32)
        sel_o = (p == 2 * m + 3).astype(f32)
        y = (jnp.dot(sel_e, even, preferred_element_type=f32) +
             jnp.dot(sel_o, odd, preferred_element_type=f32))
        rows = lax.broadcasted_iota(jnp.int32, (P, 1), 0)
        return jnp.where(rows < L_out + 2, y, 0.0)

    # ---- layer 1: ConvTranspose1d(1 -> 128, K=5, s=2) + BN + LeakyReLU ------
    # Cin == 1: outer products on the VPU (no 128-padded matmul, no MXU waste).
    xp = x1_ref[0]                                        # (P1, 1) padded noise
    acc = jnp.zeros((M1, s1_ref.shape[1]), f32)
    for d in range(3):                                    # 3 polyphase taps
        acc = acc + xp[d:d + M1, :] * w1_ref[d]           # (M1,1)*(1,2C) bcast
    y1 = interleave_pad(leaky(acc + s1_ref[...]), P2, L1)          # (P2, 128)

    # ---- layer 2: ConvTranspose1d(128 -> 256) + BN + LeakyReLU --------------
    acc = jnp.zeros((M2, s2_ref.shape[1]), f32)
    for d in range(3):
        acc = acc + jnp.dot(y1[d:d + M2, :], w2_ref[d],
                            preferred_element_type=f32)
    y2 = interleave_pad(leaky(acc + s2_ref[...]), P3, L2)          # (P3, 256)

    # ---- layer 3: ConvTranspose1d(256 -> 128) + BN + LeakyReLU --------------
    acc = jnp.zeros((M3, s3_ref.shape[1]), f32)
    for d in range(3):
        acc = acc + jnp.dot(y2[d:d + M3, :], w3_ref[d],
                            preferred_element_type=f32)
    y3 = interleave_pad(leaky(acc + s3_ref[...]), P4, L3)          # (P4, 128)

    # ---- layer 4: Conv1d(128 -> 4 padded to 128, K=5, s=1, pad=2) + tanh ----
    M4 = o_ref.shape[1]
    acc = jnp.zeros((M4, o_ref.shape[2]), f32)
    for d in range(5):
        acc = acc + jnp.dot(y3[d:d + M4, :], w4_ref[d],
                            preferred_element_type=f32)
    o_ref[0] = jnp.tanh(acc + b4_ref[...]).astype(o_ref.dtype)


# ----------------------------------------------------------------------------
# Hoisted weight preparation (BN fold, PyTorch layout -> polyphase gather form)
# ----------------------------------------------------------------------------
def _prep_convtranspose(w_pt, b, gamma, beta, mean, var):
    """ConvTranspose1d weight (Cin, Cout, 5) + eval-BN -> polyphase taps.

    Returns
      w_z     (3, Cin, 2*Cout): tap-d weights; columns [:Cout] produce the even
              output phase, columns [Cout:] the odd phase (BN scale folded in).
      shift_z (1, 2*Cout):      folded BN shift (+ conv bias), duplicated.
    """
    Cin, Cout, K = w_pt.shape
    assert K == 5
    scale = gamma / jnp.sqrt(var + BN_EPS)
    shift = scale * (b - mean) + beta
    wf = w_pt * scale[None, :, None]                      # (Cin, Cout, 5)
    zeros = jnp.zeros((Cin, Cout), wf.dtype)
    # even[m] = xp[m]@W4 + xp[m+1]@W2 + xp[m+2]@W0
    # odd [m] =            xp[m+1]@W3 + xp[m+2]@W1
    we = [wf[:, :, 4], wf[:, :, 2], wf[:, :, 0]]
    wo = [zeros,       wf[:, :, 3], wf[:, :, 1]]
    w_z = jnp.stack(
        [jnp.concatenate([we[d], wo[d]], axis=1) for d in range(3)], axis=0)
    shift_z = jnp.concatenate([shift, shift])[None, :]
    return w_z.astype(jnp.float32), shift_z.astype(jnp.float32)


def _prep_conv1d(w_pt, b, cout_pad=COUT_PAD):
    """Conv1d weight (Cout, Cin, 5) -> gather taps with lane-dense Cout pad."""
    Cout, Cin, K = w_pt.shape
    assert K == 5 and Cout <= cout_pad
    w_eff = jnp.transpose(w_pt, (2, 1, 0))                # (5, Cin, Cout)
    w_eff = jnp.pad(w_eff, ((0, 0), (0, 0), (0, cout_pad - Cout)))
    b_pad = jnp.pad(b, (0, cout_pad - Cout))[None, :]
    return w_eff.astype(jnp.float32), b_pad.astype(jnp.float32)


def prepare_weights(params):
    w1, s1 = _prep_convtranspose(params["ct1_w"], params["ct1_b"],
                                 params["bn1_g"], params["bn1_b"],
                                 params["bn1_m"], params["bn1_v"])
    w2, s2 = _prep_convtranspose(params["ct2_w"], params["ct2_b"],
                                 params["bn2_g"], params["bn2_b"],
                                 params["bn2_m"], params["bn2_v"])
    w3, s3 = _prep_convtranspose(params["ct3_w"], params["ct3_b"],
                                 params["bn3_g"], params["bn3_b"],
                                 params["bn3_m"], params["bn3_v"])
    w4, b4 = _prep_conv1d(params["c4_w"], params["c4_b"])
    return w1, s1, w2, s2, w3, s3, w4, b4


# ----------------------------------------------------------------------------
# Forward wrapper: single fused pallas_call
# ----------------------------------------------------------------------------
@functools.partial(jax.jit, static_argnums=(2, 3))
def generator_forward(noise, params, output_dim, sample_size):
    """noise: (B, L0, 1) channels-last.  Returns (B, sample_size, output_dim)."""
    B, L0, _ = noise.shape
    # Static length bookkeeping (ConvTranspose1d K=5 s=2 x3; Conv1d pad=2).
    M1, L1 = L0 + 2, 2 * L0 + 3
    M2, L2 = L1 + 2, 2 * L1 + 3
    M3, L3 = L2 + 2, 2 * L2 + 3
    P1 = _round8(M1 + 2)
    P2 = _round8(M2 + 2)
    P3 = _round8(M3 + 2)
    M4 = _round8(L3)                      # 8-aligned output rows
    P4 = _round8(M4 + 4)
    assert sample_size <= L3

    w1, s1, w2, s2, w3, s3, w4, b4 = prepare_weights(params)

    # Zero-padded latent sequence: rows [2, 2+L0) hold the noise samples.
    x1 = jnp.pad(noise.astype(jnp.float32), ((0, 0), (2, P1 - 2 - L0), (0, 0)))

    kern = functools.partial(
        _generator_kernel, dims=(M1, L1, P2, M2, L2, P3, M3, L3, P4))
    out = pl.pallas_call(
        kern,
        out_shape=jax.ShapeDtypeStruct((B, M4, COUT_PAD), jnp.float32),
        grid_spec=pltpu.PrefetchScalarGridSpec(
            num_scalar_prefetch=0,
            grid=(B,),
            in_specs=[
                pl.BlockSpec((1, P1, 1), lambda b: (b, 0, 0)),
                pl.BlockSpec(w1.shape, lambda b: (0, 0, 0)),
                pl.BlockSpec(s1.shape, lambda b: (0, 0)),
                pl.BlockSpec(w2.shape, lambda b: (0, 0, 0)),
                pl.BlockSpec(s2.shape, lambda b: (0, 0)),
                pl.BlockSpec(w3.shape, lambda b: (0, 0, 0)),
                pl.BlockSpec(s3.shape, lambda b: (0, 0)),
                pl.BlockSpec(w4.shape, lambda b: (0, 0, 0)),
                pl.BlockSpec(b4.shape, lambda b: (0, 0)),
            ],
            out_specs=pl.BlockSpec((1, M4, COUT_PAD), lambda b: (b, 0, 0)),
        ),
        compiler_params=pltpu.CompilerParams(
            dimension_semantics=("parallel",)),   # v7x: one batch element per TC
    )(x1, w1, s1, w2, s2, w3, s3, w4, b4)

    return out[:, :sample_size, :output_dim]


# ----------------------------------------------------------------------------
# Pure-JAX reference (NCL layout, mirrors PyTorch semantics in eval mode)
# ----------------------------------------------------------------------------
def ref_forward(noise, params, output_dim, sample_size):
    x = jnp.transpose(noise, (0, 2, 1)).astype(jnp.float32)   # (B, 1, L)

    def conv_t(x, w, b, stride=2):                            # w (Cin, Cout, K)
        B, Cin, L = x.shape
        _, Cout, K = w.shape
        Lout = (L - 1) * stride + K
        out = jnp.zeros((B, Cout, Lout), x.dtype)
        for tau in range(K):
            contrib = jnp.einsum("bcl,cd->bdl", x, w[:, :, tau])
            out = out.at[:, :, tau:tau + (L - 1) * stride + 1:stride].add(contrib)
        return out + b[None, :, None]

    def bn_lrelu(x, g, bta, m, v):
        y = (x - m[None, :, None]) / jnp.sqrt(v[None, :, None] + BN_EPS)
        y = y * g[None, :, None] + bta[None, :, None]
        return jnp.where(y > 0, y, NEG_SLOPE * y)

    def conv1d(x, w, b, pad):                                 # w (Cout, Cin, K)
        B, Cin, L = x.shape
        Cout, _, K = w.shape
        xp = jnp.pad(x, ((0, 0), (0, 0), (pad, pad)))
        out = jnp.zeros((B, Cout, L), x.dtype)
        for tau in range(K):
            out = out + jnp.einsum("bcl,dc->bdl", xp[:, :, tau:tau + L], w[:, :, tau])
        return out + b[None, :, None]

    x = bn_lrelu(conv_t(x, params["ct1_w"], params["ct1_b"]),
                 params["bn1_g"], params["bn1_b"], params["bn1_m"], params["bn1_v"])
    x = bn_lrelu(conv_t(x, params["ct2_w"], params["ct2_b"]),
                 params["bn2_g"], params["bn2_b"], params["bn2_m"], params["bn2_v"])
    x = bn_lrelu(conv_t(x, params["ct3_w"], params["ct3_b"]),
                 params["bn3_g"], params["bn3_b"], params["bn3_m"], params["bn3_v"])
    x = jnp.tanh(conv1d(x, params["c4_w"], params["c4_b"], pad=2))
    x = x[:, :, :sample_size]
    return jnp.transpose(x, (0, 2, 1))


# ----------------------------------------------------------------------------
# Deterministic parameter init (matches PyTorch layer shapes)
# ----------------------------------------------------------------------------
def init_params(key, output_dim):
    ks = jax.random.split(key, 20)

    def n(k, shape, s=0.1):
        return (jax.random.normal(k, shape) * s).astype(jnp.float32)

    return {
        # ConvTranspose1d(1, 128, 5, stride=2): weight (Cin, Cout, K)
        "ct1_w": n(ks[0], (1, 128, 5)), "ct1_b": n(ks[1], (128,), 0.05),
        "bn1_g": 1.0 + n(ks[2], (128,), 0.05), "bn1_b": n(ks[3], (128,), 0.05),
        "bn1_m": n(ks[4], (128,), 0.05),
        "bn1_v": 1.0 + jnp.abs(n(ks[5], (128,), 0.05)),
        # ConvTranspose1d(128, 256, 5, stride=2)
        "ct2_w": n(ks[6], (128, 256, 5)), "ct2_b": n(ks[7], (256,), 0.05),
        "bn2_g": 1.0 + n(ks[8], (256,), 0.05), "bn2_b": n(ks[9], (256,), 0.05),
        "bn2_m": n(ks[10], (256,), 0.05),
        "bn2_v": 1.0 + jnp.abs(n(ks[11], (256,), 0.05)),
        # ConvTranspose1d(256, 128, 5, stride=2)
        "ct3_w": n(ks[12], (256, 128, 5)), "ct3_b": n(ks[13], (128,), 0.05),
        "bn3_g": 1.0 + n(ks[14], (128,), 0.05), "bn3_b": n(ks[15], (128,), 0.05),
        "bn3_m": n(ks[16], (128,), 0.05),
        "bn3_v": 1.0 + jnp.abs(n(ks[17], (128,), 0.05)),
        # Conv1d(128, output_dim, 5, stride=1, padding=2): weight (Cout, Cin, K)
        "c4_w": n(ks[18], (output_dim, 128, 5)),
        "c4_b": n(ks[19], (output_dim,), 0.05),
    }


if __name__ == "__main__":
    B = 2
    L0 = 8            # latent sequence length
    OUTPUT_DIM = 4
    SAMPLE_SIZE = 64  # must be <= 8*L0 + 21 = 85

    key = jax.random.PRNGKey(0)
    pkey, nkey = jax.random.split(key)
    params = init_params(pkey, OUTPUT_DIM)
    noise = jax.random.normal(nkey, (B, L0, 1), dtype=jnp.float32)

    out = generator_forward(noise, params, OUTPUT_DIM, SAMPLE_SIZE)
    out = jax.block_until_ready(out)

    ref = jax.block_until_ready(ref_forward(noise, params, OUTPUT_DIM, SAMPLE_SIZE))

    assert out.shape == (B, SAMPLE_SIZE, OUTPUT_DIM), out.shape
    np.testing.assert_allclose(np.asarray(out), np.asarray(ref),
                               rtol=2e-3, atol=2e-3)
    print("KERNEL_OK")
</pallas_src>

<mosaic_0001>
module attributes {stable_mosaic.version = 11 : i64} {
  func.func @_generator_kernel(%arg0: i32, %arg1: memref<1x16x1xf32, #tpu.memory_space<vmem>>, %arg2: memref<3x1x256xf32, #tpu.memory_space<vmem>>, %arg3: memref<1x256xf32, #tpu.memory_space<vmem>>, %arg4: memref<3x128x512xf32, #tpu.memory_space<vmem>>, %arg5: memref<1x512xf32, #tpu.memory_space<vmem>>, %arg6: memref<3x256x256xf32, #tpu.memory_space<vmem>>, %arg7: memref<1x256xf32, #tpu.memory_space<vmem>>, %arg8: memref<5x128x128xf32, #tpu.memory_space<vmem>>, %arg9: memref<1x128xf32, #tpu.memory_space<vmem>>, %arg10: memref<1x88x128xf32, #tpu.memory_space<vmem>>) attributes {dimension_semantics = [#tpu.dimension_semantics<parallel>], iteration_bounds = array<i64: 2>, scalar_prefetch = 0 : i64, scratch_operands = 0 : i64, tpu.core_type = #tpu.core_type<tc>, window_params = [{transform_indices = @transform_0, window_bounds = array<i64: 1, 16, 1>}, {pipeline_mode = #tpu.pipeline_mode<synchronous>, transform_indices = @transform_1, window_bounds = array<i64: 3, 1, 256>}, {pipeline_mode = #tpu.pipeline_mode<synchronous>, transform_indices = @transform_2, window_bounds = array<i64: 1, 256>}, {pipeline_mode = #tpu.pipeline_mode<synchronous>, transform_indices = @transform_3, window_bounds = array<i64: 3, 128, 512>}, {pipeline_mode = #tpu.pipeline_mode<synchronous>, transform_indices = @transform_4, window_bounds = array<i64: 1, 512>}, {pipeline_mode = #tpu.pipeline_mode<synchronous>, transform_indices = @transform_5, window_bounds = array<i64: 3, 256, 256>}, {pipeline_mode = #tpu.pipeline_mode<synchronous>, transform_indices = @transform_6, window_bounds = array<i64: 1, 256>}, {pipeline_mode = #tpu.pipeline_mode<synchronous>, transform_indices = @transform_7, window_bounds = array<i64: 5, 128, 128>}, {pipeline_mode = #tpu.pipeline_mode<synchronous>, transform_indices = @transform_8, window_bounds = array<i64: 1, 128>}, {transform_indices = @transform_9, window_bounds = array<i64: 1, 88, 128>}]} {
    %c0 = arith.constant 0 : index
    %c0_0 = arith.constant 0 : index
    %c0_1 = arith.constant 0 : index
    %0 = vector.load %arg1[%c0, %c0_0, %c0_1] : memref<1x16x1xf32, #tpu.memory_space<vmem>>, vector<1x16x1xf32>
    %1 = vector.shape_cast %0 : vector<1x16x1xf32> to vector<16x1xf32>
    %cst = arith.constant 0.000000e+00 : f32
    %2 = vector.broadcast %cst : f32 to vector<10x256xf32>
    %3 = vector.extract_strided_slice %1 {offsets = [0, 0], sizes = [10, 1], strides = [1, 1]} : vector<16x1xf32> to vector<10x1xf32>
    %c0_2 = arith.constant 0 : index
    %c0_3 = arith.constant 0 : index
    %c0_4 = arith.constant 0 : index
    %4 = vector.load %arg2[%c0_2, %c0_3, %c0_4] : memref<3x1x256xf32, #tpu.memory_space<vmem>>, vector<1x1x256xf32>
    %5 = vector.shape_cast %4 : vector<1x1x256xf32> to vector<1x256xf32>
    %6 = vector.broadcast %3 : vector<10x1xf32> to vector<10x256xf32>
    %7 = vector.broadcast %5 : vector<1x256xf32> to vector<10x256xf32>
    %8 = arith.mulf %6, %7 : vector<10x256xf32>
    %9 = arith.addf %2, %8 : vector<10x256xf32>
    %10 = vector.extract_strided_slice %1 {offsets = [1, 0], sizes = [10, 1], strides = [1, 1]} : vector<16x1xf32> to vector<10x1xf32>
    %c1 = arith.constant 1 : index
    %c0_5 = arith.constant 0 : index
    %c0_6 = arith.constant 0 : index
    %11 = vector.load %arg2[%c1, %c0_5, %c0_6] : memref<3x1x256xf32, #tpu.memory_space<vmem>>, vector<1x1x256xf32>
    %12 = vector.shape_cast %11 : vector<1x1x256xf32> to vector<1x256xf32>
    %13 = vector.broadcast %10 : vector<10x1xf32> to vector<10x256xf32>
    %14 = vector.broadcast %12 : vector<1x256xf32> to vector<10x256xf32>
    %15 = arith.mulf %13, %14 : vector<10x256xf32>
    %16 = arith.addf %9, %15 : vector<10x256xf32>
    %17 = vector.extract_strided_slice %1 {offsets = [2, 0], sizes = [10, 1], strides = [1, 1]} : vector<16x1xf32> to vector<10x1xf32>
    %c2 = arith.constant 2 : index
    %c0_7 = arith.constant 0 : index
    %c0_8 = arith.constant 0 : index
    %18 = vector.load %arg2[%c2, %c0_7, %c0_8] : memref<3x1x256xf32, #tpu.memory_space<vmem>>, vector<1x1x256xf32>
    %19 = vector.shape_cast %18 : vector<1x1x256xf32> to vector<1x256xf32>
    %20 = vector.broadcast %17 : vector<10x1xf32> to vector<10x256xf32>
    %21 = vector.broadcast %19 : vector<1x256xf32> to vector<10x256xf32>
    %22 = arith.mulf %20, %21 : vector<10x256xf32>
    %23 = arith.addf %16, %22 : vector<10x256xf32>
    %c0_9 = arith.constant 0 : index
    %c0_10 = arith.constant 0 : index
    %24 = vector.load %arg3[%c0_9, %c0_10] : memref<1x256xf32, #tpu.memory_space<vmem>>, vector<1x256xf32>
    %25 = vector.broadcast %24 : vector<1x256xf32> to vector<10x256xf32>
    %26 = arith.addf %23, %25 : vector<10x256xf32>
    %cst_11 = arith.constant 0.000000e+00 : f32
    %27 = vector.broadcast %cst_11 : f32 to vector<10x256xf32>
    %28 = arith.cmpf ogt, %26, %27 : vector<10x256xf32>
    %cst_12 = arith.constant 2.000000e-01 : f32
    %29 = vector.broadcast %cst_12 : f32 to vector<10x256xf32>
    %30 = arith.mulf %29, %26 : vector<10x256xf32>
    %31 = arith.select %28, %26, %30 : vector<10x256xi1>, vector<10x256xf32>
    %32 = vector.extract_strided_slice %31 {offsets = [0, 0], sizes = [10, 128], strides = [1, 1]} : vector<10x256xf32> to vector<10x128xf32>
    %33 = vector.extract_strided_slice %31 {offsets = [0, 128], sizes = [10, 128], strides = [1, 1]} : vector<10x256xf32> to vector<10x128xf32>
    %34 = tpu.iota {dimensions = array<i32: 0>} : vector<24x10xi32>
    %35 = tpu.iota {dimensions = array<i32: 1>} : vector<24x10xi32>
    %c2_i32 = arith.constant 2 : i32
    %36 = vector.broadcast %c2_i32 : i32 to vector<24x10xi32>
    %37 = arith.muli %36, %35 : vector<24x10xi32>
    %c2_i32_13 = arith.constant 2 : i32
    %38 = vector.broadcast %c2_i32_13 : i32 to vector<24x10xi32>
    %39 = arith.addi %37, %38 : vector<24x10xi32>
    %40 = arith.cmpi eq, %34, %39 : vector<24x10xi32>
    %41 = arith.extui %40 : vector<24x10xi1> to vector<24x10xi32>
    %42 = arith.sitofp %41 : vector<24x10xi32> to vector<24x10xf32>
    %c2_i32_14 = arith.constant 2 : i32
    %43 = vector.broadcast %c2_i32_14 : i32 to vector<24x10xi32>
    %44 = arith.muli %43, %35 : vector<24x10xi32>
    %c3_i32 = arith.constant 3 : i32
    %45 = vector.broadcast %c3_i32 : i32 to vector<24x10xi32>
    %46 = arith.addi %44, %45 : vector<24x10xi32>
    %47 = arith.cmpi eq, %34, %46 : vector<24x10xi32>
    %48 = arith.extui %47 : vector<24x10xi1> to vector<24x10xi32>
    %49 = arith.sitofp %48 : vector<24x10xi32> to vector<24x10xf32>
    %cst_15 = arith.constant dense<0.000000e+00> : vector<24x128xf32>
    %50 = tpu.matmul %42, %32, %cst_15 {dimension_numbers = #tpu.dot_dimension_numbers<[1], [0], [0], [1], [0, 0, 1, 1], [], []>} : vector<24x10xf32>, vector<10x128xf32>, vector<24x128xf32> -> vector<24x128xf32>
    %cst_16 = arith.constant dense<0.000000e+00> : vector<24x128xf32>
    %51 = tpu.matmul %49, %33, %cst_16 {dimension_numbers = #tpu.dot_dimension_numbers<[1], [0], [0], [1], [0, 0, 1, 1], [], []>} : vector<24x10xf32>, vector<10x128xf32>, vector<24x128xf32> -> vector<24x128xf32>
    %52 = arith.addf %50, %51 : vector<24x128xf32>
    %53 = tpu.iota {dimensions = array<i32: 0>} : vector<24x1xi32>
    %c21_i32 = arith.constant 21 : i32
    %54 = vector.broadcast %c21_i32 : i32 to vector<24x1xi32>
    %55 = arith.cmpi slt, %53, %54 : vector<24x1xi32>
    %cst_17 = arith.constant 0.000000e+00 : f32
    %56 = vector.shape_cast %55 : vector<24x1xi1> to vector<24x1xi1>
    %57 = vector.broadcast %56 : vector<24x1xi1> to vector<24x128xi1>
    %58 = vector.broadcast %cst_17 : f32 to vector<24x128xf32>
    %59 = arith.select %57, %52, %58 : vector<24x128xi1>, vector<24x128xf32>
    %cst_18 = arith.constant 0.000000e+00 : f32
    %60 = vector.broadcast %cst_18 : f32 to vector<21x512xf32>
    %61 = vector.extract_strided_slice %59 {offsets = [0, 0], sizes = [21, 128], strides = [1, 1]} : vector<24x128xf32> to vector<21x128xf32>
    %c0_19 = arith.constant 0 : index
    %c0_20 = arith.constant 0 : index
    %c0_21 = arith.constant 0 : index
    %62 = vector.load %arg4[%c0_19, %c0_20, %c0_21] : memref<3x128x512xf32, #tpu.memory_space<vmem>>, vector<1x128x512xf32>
    %63 = vector.shape_cast %62 : vector<1x128x512xf32> to vector<128x512xf32>
    %cst_22 = arith.constant dense<0.000000e+00> : vector<21x512xf32>
    %64 = tpu.matmul %61, %63, %cst_22 {dimension_numbers = #tpu.dot_dimension_numbers<[1], [0], [0], [1], [0, 0, 1, 1], [], []>} : vector<21x128xf32>, vector<128x512xf32>, vector<21x512xf32> -> vector<21x512xf32>
    %65 = arith.addf %60, %64 : vector<21x512xf32>
    %66 = vector.extract_strided_slice %59 {offsets = [1, 0], sizes = [21, 128], strides = [1, 1]} : vector<24x128xf32> to vector<21x128xf32>
    %c1_23 = arith.constant 1 : index
    %c0_24 = arith.constant 0 : index
    %c0_25 = arith.constant 0 : index
    %67 = vector.load %arg4[%c1_23, %c0_24, %c0_25] : memref<3x128x512xf32, #tpu.memory_space<vmem>>, vector<1x128x512xf32>
    %68 = vector.shape_cast %67 : vector<1x128x512xf32> to vector<128x512xf32>
    %cst_26 = arith.constant dense<0.000000e+00> : vector<21x512xf32>
    %69 = tpu.matmul %66, %68, %cst_26 {dimension_numbers = #tpu.dot_dimension_numbers<[1], [0], [0], [1], [0, 0, 1, 1], [], []>} : vector<21x128xf32>, vector<128x512xf32>, vector<21x512xf32> -> vector<21x512xf32>
    %70 = arith.addf %65, %69 : vector<21x512xf32>
    %71 = vector.extract_strided_slice %59 {offsets = [2, 0], sizes = [21, 128], strides = [1, 1]} : vector<24x128xf32> to vector<21x128xf32>
    %c2_27 = arith.constant 2 : index
    %c0_28 = arith.constant 0 : index
    %c0_29 = arith.constant 0 : index
    %72 = vector.load %arg4[%c2_27, %c0_28, %c0_29] : memref<3x128x512xf32, #tpu.memory_space<vmem>>, vector<1x128x512xf32>
    %73 = vector.shape_cast %72 : vector<1x128x512xf32> to vector<128x512xf32>
    %cst_30 = arith.constant dense<0.000000e+00> : vector<21x512xf32>
    %74 = tpu.matmul %71, %73, %cst_30 {dimension_numbers = #tpu.dot_dimension_numbers<[1], [0], [0], [1], [0, 0, 1, 1], [], []>} : vector<21x128xf32>, vector<128x512xf32>, vector<21x512xf32> -> vector<21x512xf32>
    %75 = arith.addf %70, %74 : vector<21x512xf32>
    %c0_31 = arith.constant 0 : index
    %c0_32 = arith.constant 0 : index
    %76 = vector.load %arg5[%c0_31, %c0_32] : memref<1x512xf32, #tpu.memory_space<vmem>>, vector<1x512xf32>
    %77 = vector.broadcast %76 : vector<1x512xf32> to vector<21x512xf32>
    %78 = arith.addf %75, %77 : vector<21x512xf32>
    %cst_33 = arith.constant 0.000000e+00 : f32
    %79 = vector.broadcast %cst_33 : f32 to vector<21x512xf32>
    %80 = arith.cmpf ogt, %78, %79 : vector<21x512xf32>
    %cst_34 = arith.constant 2.000000e-01 : f32
    %81 = vector.broadcast %cst_34 : f32 to vector<21x512xf32>
    %82 = arith.mulf %81, %78 : vector<21x512xf32>
    %83 = arith.select %80, %78, %82 : vector<21x512xi1>, vector<21x512xf32>
    %84 = vector.extract_strided_slice %83 {offsets = [0, 0], sizes = [21, 256], strides = [1, 1]} : vector<21x512xf32> to vector<21x256xf32>
    %85 = vector.extract_strided_slice %83 {offsets = [0, 256], sizes = [21, 256], strides = [1, 1]} : vector<21x512xf32> to vector<21x256xf32>
    %86 = tpu.iota {dimensions = array<i32: 0>} : vector<48x21xi32>
    %87 = tpu.iota {dimensions = array<i32: 1>} : vector<48x21xi32>
    %c2_i32_35 = arith.constant 2 : i32
    %88 = vector.broadcast %c2_i32_35 : i32 to vector<48x21xi32>
    %89 = arith.muli %88, %87 : vector<48x21xi32>
    %c2_i32_36 = arith.constant 2 : i32
    %90 = vector.broadcast %c2_i32_36 : i32 to vector<48x21xi32>
    %91 = arith.addi %89, %90 : vector<48x21xi32>
    %92 = arith.cmpi eq, %86, %91 : vector<48x21xi32>
    %93 = arith.extui %92 : vector<48x21xi1> to vector<48x21xi32>
    %94 = arith.sitofp %93 : vector<48x21xi32> to vector<48x21xf32>
    %c2_i32_37 = arith.constant 2 : i32
    %95 = vector.broadcast %c2_i32_37 : i32 to vector<48x21xi32>
    %96 = arith.muli %95, %87 : vector<48x21xi32>
    %c3_i32_38 = arith.constant 3 : i32
    %97 = vector.broadcast %c3_i32_38 : i32 to vector<48x21xi32>
    %98 = arith.addi %96, %97 : vector<48x21xi32>
    %99 = arith.cmpi eq, %86, %98 : vector<48x21xi32>
    %100 = arith.extui %99 : vector<48x21xi1> to vector<48x21xi32>
    %101 = arith.sitofp %100 : vector<48x21xi32> to vector<48x21xf32>
    %cst_39 = arith.constant dense<0.000000e+00> : vector<48x256xf32>
    %102 = tpu.matmul %94, %84, %cst_39 {dimension_numbers = #tpu.dot_dimension_numbers<[1], [0], [0], [1], [0, 0, 1, 1], [], []>} : vector<48x21xf32>, vector<21x256xf32>, vector<48x256xf32> -> vector<48x256xf32>
    %cst_40 = arith.constant dense<0.000000e+00> : vector<48x256xf32>
    %103 = tpu.matmul %101, %85, %cst_40 {dimension_numbers = #tpu.dot_dimension_numbers<[1], [0], [0], [1], [0, 0, 1, 1], [], []>} : vector<48x21xf32>, vector<21x256xf32>, vector<48x256xf32> -> vector<48x256xf32>
    %104 = arith.addf %102, %103 : vector<48x256xf32>
    %105 = tpu.iota {dimensions = array<i32: 0>} : vector<48x1xi32>
    %c43_i32 = arith.constant 43 : i32
    %106 = vector.broadcast %c43_i32 : i32 to vector<48x1xi32>
    %107 = arith.cmpi slt, %105, %106 : vector<48x1xi32>
    %cst_41 = arith.constant 0.000000e+00 : f32
    %108 = vector.shape_cast %107 : vector<48x1xi1> to vector<48x1xi1>
    %109 = vector.broadcast %108 : vector<48x1xi1> to vector<48x256xi1>
    %110 = vector.broadcast %cst_41 : f32 to vector<48x256xf32>
    %111 = arith.select %109, %104, %110 : vector<48x256xi1>, vector<48x256xf32>
    %cst_42 = arith.constant 0.000000e+00 : f32
    %112 = vector.broadcast %cst_42 : f32 to vector<43x256xf32>
    %113 = vector.extract_strided_slice %111 {offsets = [0, 0], sizes = [43, 256], strides = [1, 1]} : vector<48x256xf32> to vector<43x256xf32>
    %c0_43 = arith.constant 0 : index
    %c0_44 = arith.constant 0 : index
    %c0_45 = arith.constant 0 : index
    %114 = vector.load %arg6[%c0_43, %c0_44, %c0_45] : memref<3x256x256xf32, #tpu.memory_space<vmem>>, vector<1x256x256xf32>
    %115 = vector.shape_cast %114 : vector<1x256x256xf32> to vector<256x256xf32>
    %cst_46 = arith.constant dense<0.000000e+00> : vector<43x256xf32>
    %116 = tpu.matmul %113, %115, %cst_46 {dimension_numbers = #tpu.dot_dimension_numbers<[1], [0], [0], [1], [0, 0, 1, 1], [], []>} : vector<43x256xf32>, vector<256x256xf32>, vector<43x256xf32> -> vector<43x256xf32>
    %117 = arith.addf %112, %116 : vector<43x256xf32>
    %118 = vector.extract_strided_slice %111 {offsets = [1, 0], sizes = [43, 256], strides = [1, 1]} : vector<48x256xf32> to vector<43x256xf32>
    %c1_47 = arith.constant 1 : index
    %c0_48 = arith.constant 0 : index
    %c0_49 = arith.constant 0 : index
    %119 = vector.load %arg6[%c1_47, %c0_48, %c0_49] : memref<3x256x256xf32, #tpu.memory_space<vmem>>, vector<1x256x256xf32>
    %120 = vector.shape_cast %119 : vector<1x256x256xf32> to vector<256x256xf32>
    %cst_50 = arith.constant dense<0.000000e+00> : vector<43x256xf32>
    %121 = tpu.matmul %118, %120, %cst_50 {dimension_numbers = #tpu.dot_dimension_numbers<[1], [0], [0], [1], [0, 0, 1, 1], [], []>} : vector<43x256xf32>, vector<256x256xf32>, vector<43x256xf32> -> vector<43x256xf32>
    %122 = arith.addf %117, %121 : vector<43x256xf32>
    %123 = vector.extract_strided_slice %111 {offsets = [2, 0], sizes = [43, 256], strides = [1, 1]} : vector<48x256xf32> to vector<43x256xf32>
    %c2_51 = arith.constant 2 : index
    %c0_52 = arith.constant 0 : index
    %c0_53 = arith.constant 0 : index
    %124 = vector.load %arg6[%c2_51, %c0_52, %c0_53] : memref<3x256x256xf32, #tpu.memory_space<vmem>>, vector<1x256x256xf32>
    %125 = vector.shape_cast %124 : vector<1x256x256xf32> to vector<256x256xf32>
    %cst_54 = arith.constant dense<0.000000e+00> : vector<43x256xf32>
    %126 = tpu.matmul %123, %125, %cst_54 {dimension_numbers = #tpu.dot_dimension_numbers<[1], [0], [0], [1], [0, 0, 1, 1], [], []>} : vector<43x256xf32>, vector<256x256xf32>, vector<43x256xf32> -> vector<43x256xf32>
    %127 = arith.addf %122, %126 : vector<43x256xf32>
    %c0_55 = arith.constant 0 : index
    %c0_56 = arith.constant 0 : index
    %128 = vector.load %arg7[%c0_55, %c0_56] : memref<1x256xf32, #tpu.memory_space<vmem>>, vector<1x256xf32>
    %129 = vector.broadcast %128 : vector<1x256xf32> to vector<43x256xf32>
    %130 = arith.addf %127, %129 : vector<43x256xf32>
    %cst_57 = arith.constant 0.000000e+00 : f32
    %131 = vector.broadcast %cst_57 : f32 to vector<43x256xf32>
    %132 = arith.cmpf ogt, %130, %131 : vector<43x256xf32>
    %cst_58 = arith.constant 2.000000e-01 : f32
    %133 = vector.broadcast %cst_58 : f32 to vector<43x256xf32>
    %134 = arith.mulf %133, %130 : vector<43x256xf32>
    %135 = arith.select %132, %130, %134 : vector<43x256xi1>, vector<43x256xf32>
    %136 = vector.extract_strided_slice %135 {offsets = [0, 0], sizes = [43, 128], strides = [1, 1]} : vector<43x256xf32> to vector<43x128xf32>
    %137 = vector.extract_strided_slice %135 {offsets = [0, 128], sizes = [43, 128], strides = [1, 1]} : vector<43x256xf32> to vector<43x128xf32>
    %138 = tpu.iota {dimensions = array<i32: 0>} : vector<96x43xi32>
    %139 = tpu.iota {dimensions = array<i32: 1>} : vector<96x43xi32>
    %c2_i32_59 = arith.constant 2 : i32
    %140 = vector.broadcast %c2_i32_59 : i32 to vector<96x43xi32>
    %141 = arith.muli %140, %139 : vector<96x43xi32>
    %c2_i32_60 = arith.constant 2 : i32
    %142 = vector.broadcast %c2_i32_60 : i32 to vector<96x43xi32>
    %143 = arith.addi %141, %142 : vector<96x43xi32>
    %144 = arith.cmpi eq, %138, %143 : vector<96x43xi32>
    %145 = arith.extui %144 : vector<96x43xi1> to vector<96x43xi32>
    %146 = arith.sitofp %145 : vector<96x43xi32> to vector<96x43xf32>
    %c2_i32_61 = arith.constant 2 : i32
    %147 = vector.broadcast %c2_i32_61 : i32 to vector<96x43xi32>
    %148 = arith.muli %147, %139 : vector<96x43xi32>
    %c3_i32_62 = arith.constant 3 : i32
    %149 = vector.broadcast %c3_i32_62 : i32 to vector<96x43xi32>
    %150 = arith.addi %148, %149 : vector<96x43xi32>
    %151 = arith.cmpi eq, %138, %150 : vector<96x43xi32>
    %152 = arith.extui %151 : vector<96x43xi1> to vector<96x43xi32>
    %153 = arith.sitofp %152 : vector<96x43xi32> to vector<96x43xf32>
    %cst_63 = arith.constant dense<0.000000e+00> : vector<96x128xf32>
    %154 = tpu.matmul %146, %136, %cst_63 {dimension_numbers = #tpu.dot_dimension_numbers<[1], [0], [0], [1], [0, 0, 1, 1], [], []>} : vector<96x43xf32>, vector<43x128xf32>, vector<96x128xf32> -> vector<96x128xf32>
    %cst_64 = arith.constant dense<0.000000e+00> : vector<96x128xf32>
    %155 = tpu.matmul %153, %137, %cst_64 {dimension_numbers = #tpu.dot_dimension_numbers<[1], [0], [0], [1], [0, 0, 1, 1], [], []>} : vector<96x43xf32>, vector<43x128xf32>, vector<96x128xf32> -> vector<96x128xf32>
    %156 = arith.addf %154, %155 : vector<96x128xf32>
    %157 = tpu.iota {dimensions = array<i32: 0>} : vector<96x1xi32>
    %c87_i32 = arith.constant 87 : i32
    %158 = vector.broadcast %c87_i32 : i32 to vector<96x1xi32>
    %159 = arith.cmpi slt, %157, %158 : vector<96x1xi32>
    %cst_65 = arith.constant 0.000000e+00 : f32
    %160 = vector.shape_cast %159 : vector<96x1xi1> to vector<96x1xi1>
    %161 = vector.broadcast %160 : vector<96x1xi1> to vector<96x128xi1>
    %162 = vector.broadcast %cst_65 : f32 to vector<96x128xf32>
    %163 = arith.select %161, %156, %162 : vector<96x128xi1>, vector<96x128xf32>
    %cst_66 = arith.constant 0.000000e+00 : f32
    %164 = vector.broadcast %cst_66 : f32 to vector<88x128xf32>
    %165 = vector.extract_strided_slice %163 {offsets = [0, 0], sizes = [88, 128], strides = [1, 1]} : vector<96x128xf32> to vector<88x128xf32>
    %c0_67 = arith.constant 0 : index
    %c0_68 = arith.constant 0 : index
    %c0_69 = arith.constant 0 : index
    %166 = vector.load %arg8[%c0_67, %c0_68, %c0_69] : memref<5x128x128xf32, #tpu.memory_space<vmem>>, vector<1x128x128xf32>
    %167 = vector.shape_cast %166 : vector<1x128x128xf32> to vector<128x128xf32>
    %cst_70 = arith.constant dense<0.000000e+00> : vector<88x128xf32>
    %168 = tpu.matmul %165, %167, %cst_70 {dimension_numbers = #tpu.dot_dimension_numbers<[1], [0], [0], [1], [0, 0, 1, 1], [], []>} : vector<88x128xf32>, vector<128x128xf32>, vector<88x128xf32> -> vector<88x128xf32>
    %169 = arith.addf %164, %168 : vector<88x128xf32>
    %170 = vector.extract_strided_slice %163 {offsets = [1, 0], sizes = [88, 128], strides = [1, 1]} : vector<96x128xf32> to vector<88x128xf32>
    %c1_71 = arith.constant 1 : index
    %c0_72 = arith.constant 0 : index
    %c0_73 = arith.constant 0 : index
    %171 = vector.load %arg8[%c1_71, %c0_72, %c0_73] : memref<5x128x128xf32, #tpu.memory_space<vmem>>, vector<1x128x128xf32>
    %172 = vector.shape_cast %171 : vector<1x128x128xf32> to vector<128x128xf32>
    %cst_74 = arith.constant dense<0.000000e+00> : vector<88x128xf32>
    %173 = tpu.matmul %170, %172, %cst_74 {dimension_numbers = #tpu.dot_dimension_numbers<[1], [0], [0], [1], [0, 0, 1, 1], [], []>} : vector<88x128xf32>, vector<128x128xf32>, vector<88x128xf32> -> vector<88x128xf32>
    %174 = arith.addf %169, %173 : vector<88x128xf32>
    %175 = vector.extract_strided_slice %163 {offsets = [2, 0], sizes = [88, 128], strides = [1, 1]} : vector<96x128xf32> to vector<88x128xf32>
    %c2_75 = arith.constant 2 : index
    %c0_76 = arith.constant 0 : index
    %c0_77 = arith.constant 0 : index
    %176 = vector.load %arg8[%c2_75, %c0_76, %c0_77] : memref<5x128x128xf32, #tpu.memory_space<vmem>>, vector<1x128x128xf32>
    %177 = vector.shape_cast %176 : vector<1x128x128xf32> to vector<128x128xf32>
    %cst_78 = arith.constant dense<0.000000e+00> : vector<88x128xf32>
    %178 = tpu.matmul %175, %177, %cst_78 {dimension_numbers = #tpu.dot_dimension_numbers<[1], [0], [0], [1], [0, 0, 1, 1], [], []>} : vector<88x128xf32>, vector<128x128xf32>, vector<88x128xf32> -> vector<88x128xf32>
    %179 = arith.addf %174, %178 : vector<88x128xf32>
    %180 = vector.extract_strided_slice %163 {offsets = [3, 0], sizes = [88, 128], strides = [1, 1]} : vector<96x128xf32> to vector<88x128xf32>
    %c3 = arith.constant 3 : index
    %c0_79 = arith.constant 0 : index
    %c0_80 = arith.constant 0 : index
    %181 = vector.load %arg8[%c3, %c0_79, %c0_80] : memref<5x128x128xf32, #tpu.memory_space<vmem>>, vector<1x128x128xf32>
    %182 = vector.shape_cast %181 : vector<1x128x128xf32> to vector<128x128xf32>
    %cst_81 = arith.constant dense<0.000000e+00> : vector<88x128xf32>
    %183 = tpu.matmul %180, %182, %cst_81 {dimension_numbers = #tpu.dot_dimension_numbers<[1], [0], [0], [1], [0, 0, 1, 1], [], []>} : vector<88x128xf32>, vector<128x128xf32>, vector<88x128xf32> -> vector<88x128xf32>
    %184 = arith.addf %179, %183 : vector<88x128xf32>
    %185 = vector.extract_strided_slice %163 {offsets = [4, 0], sizes = [88, 128], strides = [1, 1]} : vector<96x128xf32> to vector<88x128xf32>
    %c4 = arith.constant 4 : index
    %c0_82 = arith.constant 0 : index
    %c0_83 = arith.constant 0 : index
    %186 = vector.load %arg8[%c4, %c0_82, %c0_83] : memref<5x128x128xf32, #tpu.memory_space<vmem>>, vector<1x128x128xf32>
    %187 = vector.shape_cast %186 : vector<1x128x128xf32> to vector<128x128xf32>
    %cst_84 = arith.constant dense<0.000000e+00> : vector<88x128xf32>
    %188 = tpu.matmul %185, %187, %cst_84 {dimension_numbers = #tpu.dot_dimension_numbers<[1], [0], [0], [1], [0, 0, 1, 1], [], []>} : vector<88x128xf32>, vector<128x128xf32>, vector<88x128xf32> -> vector<88x128xf32>
    %189 = arith.addf %184, %188 : vector<88x128xf32>
    %c0_85 = arith.constant 0 : index
    %c0_86 = arith.constant 0 : index
    %190 = vector.load %arg9[%c0_85, %c0_86] : memref<1x128xf32, #tpu.memory_space<vmem>>, vector<1x128xf32>
    %191 = vector.broadcast %190 : vector<1x128xf32> to vector<88x128xf32>
    %192 = arith.addf %189, %191 : vector<88x128xf32>
    %193 = math.tanh %192 : vector<88x128xf32>
    %c0_87 = arith.constant 0 : index
    %c0_88 = arith.constant 0 : index
    %c0_89 = arith.constant 0 : index
    %194 = vector.load %arg10[%c0_87, %c0_88, %c0_89] : memref<1x88x128xf32, #tpu.memory_space<vmem>>, vector<1x88x128xf32>
    %195 = vector.shape_cast %194 : vector<1x88x128xf32> to vector<88x128xf32>
    %196 = vector.shape_cast %193 : vector<88x128xf32> to vector<1x88x128xf32>
    tpu.vector_store %arg10[%c0_87, %c0_88, %c0_89], %196 {strides = array<i32>} : memref<1x88x128xf32, #tpu.memory_space<vmem>>, vector<1x88x128xf32>,
    return
  }
  func.func @transform_0(%arg0: i32) -> (i32, i32, i32) {
    %c0_i32 = arith.constant 0 : i32
    %c0_i32_0 = arith.constant 0 : i32
    %c0_i32_1 = arith.constant 0 : i32
    return %arg0, %c0_i32, %c0_i32_0 : i32, i32, i32
  }
  func.func @transform_1(%arg0: i32) -> (i32, i32, i32) {
    %c0_i32 = arith.constant 0 : i32
    %c0_i32_0 = arith.constant 0 : i32
    %c0_i32_1 = arith.constant 0 : i32
    %c0_i32_2 = arith.constant 0 : i32
    return %c0_i32, %c0_i32_0, %c0_i32_1 : i32, i32, i32
  }
  func.func @transform_2(%arg0: i32) -> (i32, i32) {
    %c0_i32 = arith.constant 0 : i32
    %c0_i32_0 = arith.constant 0 : i32
    %c0_i32_1 = arith.constant 0 : i32
    return %c0_i32, %c0_i32_0 : i32, i32
  }
  func.func @transform_3(%arg0: i32) -> (i32, i32, i32) {
    %c0_i32 = arith.constant 0 : i32
    %c0_i32_0 = arith.constant 0 : i32
    %c0_i32_1 = arith.constant 0 : i32
    %c0_i32_2 = arith.constant 0 : i32
    return %c0_i32, %c0_i32_0, %c0_i32_1 : i32, i32, i32
  }
  func.func @transform_4(%arg0: i32) -> (i32, i32) {
    %c0_i32 = arith.constant 0 : i32
    %c0_i32_0 = arith.constant 0 : i32
    %c0_i32_1 = arith.constant 0 : i32
    return %c0_i32, %c0_i32_0 : i32, i32
  }
  func.func @transform_5(%arg0: i32) -> (i32, i32, i32) {
    %c0_i32 = arith.constant 0 : i32
    %c0_i32_0 = arith.constant 0 : i32
    %c0_i32_1 = arith.constant 0 : i32
    %c0_i32_2 = arith.constant 0 : i32
    return %c0_i32, %c0_i32_0, %c0_i32_1 : i32, i32, i32
  }
  func.func @transform_6(%arg0: i32) -> (i32, i32) {
    %c0_i32 = arith.constant 0 : i32
    %c0_i32_0 = arith.constant 0 : i32
    %c0_i32_1 = arith.constant 0 : i32
    return %c0_i32, %c0_i32_0 : i32, i32
  }
  func.func @transform_7(%arg0: i32) -> (i32, i32, i32) {
    %c0_i32 = arith.constant 0 : i32
    %c0_i32_0 = arith.constant 0 : i32
    %c0_i32_1 = arith.constant 0 : i32
    %c0_i32_2 = arith.constant 0 : i32
    return %c0_i32, %c0_i32_0, %c0_i32_1 : i32, i32, i32
  }
  func.func @transform_8(%arg0: i32) -> (i32, i32) {
    %c0_i32 = arith.constant 0 : i32
    %c0_i32_0 = arith.constant 0 : i32
    %c0_i32_1 = arith.constant 0 : i32
    return %c0_i32, %c0_i32_0 : i32, i32
  }
  func.func @transform_9(%arg0: i32) -> (i32, i32, i32) {
    %c0_i32 = arith.constant 0 : i32
    %c0_i32_0 = arith.constant 0 : i32
    %c0_i32_1 = arith.constant 0 : i32
    return %arg0, %c0_i32, %c0_i32_0 : i32, i32, i32
  }
}

</mosaic_0001>

<llo_original>
// kernel: generator_forward.1
$region0: #{generator_forward.1}
  #allocation0 [shape = 'u32[]', space=smem, size = 0x4, offset = 0x4, fixed_abs, tag = 'smem constant byte address 0x4 - core index']
  #allocation1 [shape = 'u32[144,128]{1,0:T(1,128)}', space=vmem, size = 0x12000, scoped, tag = 'internal scratch']
  %s0 = inlined_call_operand.vmem [shape: f32[2,16,1], index: 0, kind: input, shape index: {}]
  %s1 = inlined_call_operand.vmem [shape: f32[3,1,256], index: 1, kind: input, shape index: {}]
  %s2 = inlined_call_operand.vmem [shape: f32[1,256], index: 2, kind: input, shape index: {}]
  %s3 = inlined_call_operand.vmem [shape: f32[3,128,512], index: 3, kind: input, shape index: {}]
  %s4 = inlined_call_operand.vmem [shape: f32[1,512], index: 4, kind: input, shape index: {}]
  %s5 = inlined_call_operand.vmem [shape: f32[3,256,256], index: 5, kind: input, shape index: {}]
  %s6 = inlined_call_operand.vmem [shape: f32[1,256], index: 6, kind: input, shape index: {}]
  %s7 = inlined_call_operand.vmem [shape: f32[5,128,128], index: 7, kind: input, shape index: {}]
  %s8 = inlined_call_operand.vmem [shape: f32[1,128], index: 8, kind: input, shape index: {}]
  %s9 = inlined_call_operand.vmem [shape: f32[2,88,128], index: 9, kind: output, shape index: {}]
  %s10 = sld [smem:[#allocation0]]
  $region69: #{generator_forward.1} parent=0
    _
  %s12 = ssub.s32 1, %s10
  %s13 = scalar_select 0, %s12, %s10
  loop: start=0, step=1, limit=4
  $region2: #{generator_forward.1} parent=0 // loop_pre_header
    _
  $region3: #{generator_forward.1} parent=0 // loop_header
    %s15 = sphi 0, %s19
    %p16 = scmp.ge.s32.totalorder %s15, 4
    %s25 = sphi 0, %s27
    %s28 = sphi 0, %s25
    %s29 = sphi 0, %s28
    %s45 = sphi 0, %s29
    %s49 = sphi 0, %s49
    %s51 = sphi 0, %s49
    %s52 = sphi 0, %s51
    %s66 = sphi 0, %s52
    %s70 = sphi 0, %s70
    %s72 = sphi 0, %s70
    %s73 = sphi 0, %s72
    %s87 = sphi 0, %s73
    %s91 = sphi 0, %s91
    %s93 = sphi 0, %s91
    %s94 = sphi 0, %s93
    %s108 = sphi 0, %s94
    %s112 = sphi 0, %s112
    %s114 = sphi 0, %s112
    %s115 = sphi 0, %s114
    %s129 = sphi 0, %s115
    %s133 = sphi 0, %s133
    %s135 = sphi 0, %s133
    %s136 = sphi 0, %s135
    %s150 = sphi 0, %s136
    %s154 = sphi 0, %s154
    %s156 = sphi 0, %s154
    %s157 = sphi 0, %s156
    %s171 = sphi 0, %s157
    %s175 = sphi 0, %s175
    %s177 = sphi 0, %s175
    %s178 = sphi 0, %s177
    %s192 = sphi 0, %s178
    %s196 = sphi 0, %s196
    %s198 = sphi 0, %s196
    %s199 = sphi 0, %s198
    %s213 = sphi 0, %s199
    %s219 = sphi 0, %s221
    %s222 = sphi 0, %s219
    %s223 = sphi 0, %s222
    %s239 = sphi 0, %s223
  $region4: #{generator_forward.1} parent=0 // loop_header_branch
    %18 = sbr.rel (%p16) target = $region8
  $region5: #{generator_forward.1} parent=0 // loop_body
    %s20 = ssub.s32 %s15, 1
    %s21 = ssub.s32 %s15, 2
    %s22 = sadd.s32 %s15, 1
    %s23 = ssub.s32 %s15, %s22
    %p24 = scmp.eq.s32.totalorder %s23, 0
    %s26 = sadd.s32 %s25, 1
    %s27 = scalar_select %p24, %s25, %s26
    %p30 = pneg %p24
    %p31 = scmp.eq.s32.totalorder %s15, 1
    %p32 = por %p30, %p31
    %p33 = scmp.ne.s32.totalorder %s25, %s28
    %p34 = scmp.eq.s32.totalorder %s15, 0
    %p35 = por %p33, %p34
    %p36 = scmp.ne.s32.totalorder %s25, %s28
    %p37 = scmp.eq.s32.totalorder %s20, 1
    %p38 = por %p36, %p37
    %p39 = scmp.ne.s32.totalorder %s28, %s29
    %p40 = scmp.eq.s32.totalorder %s20, 0
    %p41 = por %p39, %p40
    %p42 = scmp.ne.s32.totalorder %s28, %s29
    %p43 = scmp.eq.s32.totalorder %s21, 1
    %p44 = por %p42, %p43
    %p46 = scmp.ne.s32.totalorder %s29, %s45
    %p47 = scmp.eq.s32.totalorder %s21, 0
    %p48 = por %p46, %p47
    %s50 = sadd.s32 %s49, 1
    %p53 = scmp.eq.s32.totalorder %s15, 1
    %p54 = scmp.ne.s32.totalorder %s49, %s51
    %p55 = scmp.eq.s32.totalorder %s15, 0
    %p56 = por %p54, %p55
    %p57 = scmp.ne.s32.totalorder %s49, %s51
    %p58 = scmp.eq.s32.totalorder %s20, 1
    %p59 = por %p57, %p58
    %p60 = scmp.ne.s32.totalorder %s51, %s52
    %p61 = scmp.eq.s32.totalorder %s20, 0
    %p62 = por %p60, %p61
    %p63 = scmp.ne.s32.totalorder %s51, %s52
    %p64 = scmp.eq.s32.totalorder %s21, 1
    %p65 = por %p63, %p64
    %p67 = scmp.ne.s32.totalorder %s52, %s66
    %p68 = scmp.eq.s32.totalorder %s21, 0
    %p69 = por %p67, %p68
    %s71 = sadd.s32 %s70, 1
    %p74 = scmp.eq.s32.totalorder %s15, 1
    %p75 = scmp.ne.s32.totalorder %s70, %s72
    %p76 = scmp.eq.s32.totalorder %s15, 0
    %p77 = por %p75, %p76
    %p78 = scmp.ne.s32.totalorder %s70, %s72
    %p79 = scmp.eq.s32.totalorder %s20, 1
    %p80 = por %p78, %p79
    %p81 = scmp.ne.s32.totalorder %s72, %s73
    %p82 = scmp.eq.s32.totalorder %s20, 0
    %p83 = por %p81, %p82
    %p84 = scmp.ne.s32.totalorder %s72, %s73
    %p85 = scmp.eq.s32.totalorder %s21, 1
    %p86 = por %p84, %p85
    %p88 = scmp.ne.s32.totalorder %s73, %s87
    %p89 = scmp.eq.s32.totalorder %s21, 0
    %p90 = por %p88, %p89
    %s92 = sadd.s32 %s91, 1
    %p95 = scmp.eq.s32.totalorder %s15, 1
    %p96 = scmp.ne.s32.totalorder %s91, %s93
    %p97 = scmp.eq.s32.totalorder %s15, 0
    %p98 = por %p96, %p97
    %p99 = scmp.ne.s32.totalorder %s91, %s93
    %p100 = scmp.eq.s32.totalorder %s20, 1
    %p101 = por %p99, %p100
    %p102 = scmp.ne.s32.totalorder %s93, %s94
    %p103 = scmp.eq.s32.totalorder %s20, 0
    %p104 = por %p102, %p103
    %p105 = scmp.ne.s32.totalorder %s93, %s94
    %p106 = scmp.eq.s32.totalorder %s21, 1
    %p107 = por %p105, %p106
    %p109 = scmp.ne.s32.totalorder %s94, %s108
    %p110 = scmp.eq.s32.totalorder %s21, 0
    %p111 = por %p109, %p110
    %s113 = sadd.s32 %s112, 1
    %p116 = scmp.eq.s32.totalorder %s15, 1
    %p117 = scmp.ne.s32.totalorder %s112, %s114
    %p118 = scmp.eq.s32.totalorder %s15, 0
    %p119 = por %p117, %p118
    %p120 = scmp.ne.s32.totalorder %s112, %s114
    %p121 = scmp.eq.s32.totalorder %s20, 1
    %p122 = por %p120, %p121
    %p123 = scmp.ne.s32.totalorder %s114, %s115
    %p124 = scmp.eq.s32.totalorder %s20, 0
    %p125 = por %p123, %p124
    %p126 = scmp.ne.s32.totalorder %s114, %s115
    %p127 = scmp.eq.s32.totalorder %s21, 1
    %p128 = por %p126, %p127
    %p130 = scmp.ne.s32.totalorder %s115, %s129
    %p131 = scmp.eq.s32.totalorder %s21, 0
    %p132 = por %p130, %p131
    %s134 = sadd.s32 %s133, 1
    %p137 = scmp.eq.s32.totalorder %s15, 1
    %p138 = scmp.ne.s32.totalorder %s133, %s135
    %p139 = scmp.eq.s32.totalorder %s15, 0
    %p140 = por %p138, %p139
    %p141 = scmp.ne.s32.totalorder %s133, %s135
    %p142 = scmp.eq.s32.totalorder %s20, 1
    %p143 = por %p141, %p142
    %p144 = scmp.ne.s32.totalorder %s135, %s136
    %p145 = scmp.eq.s32.totalorder %s20, 0
    %p146 = por %p144, %p145
    %p147 = scmp.ne.s32.totalorder %s135, %s136
    %p148 = scmp.eq.s32.totalorder %s21, 1
    %p149 = por %p147, %p148
    %p151 = scmp.ne.s32.totalorder %s136, %s150
    %p152 = scmp.eq.s32.totalorder %s21, 0
    %p153 = por %p151, %p152
    %s155 = sadd.s32 %s154, 1
    %p158 = scmp.eq.s32.totalorder %s15, 1
    %p159 = scmp.ne.s32.totalorder %s154, %s156
    %p160 = scmp.eq.s32.totalorder %s15, 0
    %p161 = por %p159, %p160
    %p162 = scmp.ne.s32.totalorder %s154, %s156
    %p163 = scmp.eq.s32.totalorder %s20, 1
    %p164 = por %p162, %p163
    %p165 = scmp.ne.s32.totalorder %s156, %s157
    %p166 = scmp.eq.s32.totalorder %s20, 0
    %p167 = por %p165, %p166
    %p168 = scmp.ne.s32.totalorder %s156, %s157
    %p169 = scmp.eq.s32.totalorder %s21, 1
    %p170 = por %p168, %p169
    %p172 = scmp.ne.s32.totalorder %s157, %s171
    %p173 = scmp.eq.s32.totalorder %s21, 0
    %p174 = por %p172, %p173
    %s176 = sadd.s32 %s175, 1
    %p179 = scmp.eq.s32.totalorder %s15, 1
    %p180 = scmp.ne.s32.totalorder %s175, %s177
    %p181 = scmp.eq.s32.totalorder %s15, 0
    %p182 = por %p180, %p181
    %p183 = scmp.ne.s32.totalorder %s175, %s177
    %p184 = scmp.eq.s32.totalorder %s20, 1
    %p185 = por %p183, %p184
    %p186 = scmp.ne.s32.totalorder %s177, %s178
    %p187 = scmp.eq.s32.totalorder %s20, 0
    %p188 = por %p186, %p187
    %p189 = scmp.ne.s32.totalorder %s177, %s178
    %p190 = scmp.eq.s32.totalorder %s21, 1
    %p191 = por %p189, %p190
    %p193 = scmp.ne.s32.totalorder %s178, %s192
    %p194 = scmp.eq.s32.totalorder %s21, 0
    %p195 = por %p193, %p194
    %s197 = sadd.s32 %s196, 1
    %p200 = scmp.eq.s32.totalorder %s15, 1
    %p201 = scmp.ne.s32.totalorder %s196, %s198
    %p202 = scmp.eq.s32.totalorder %s15, 0
    %p203 = por %p201, %p202
    %p204 = scmp.ne.s32.totalorder %s196, %s198
    %p205 = scmp.eq.s32.totalorder %s20, 1
    %p206 = por %p204, %p205
    %p207 = scmp.ne.s32.totalorder %s198, %s199
    %p208 = scmp.eq.s32.totalorder %s20, 0
    %p209 = por %p207, %p208
    %p210 = scmp.ne.s32.totalorder %s198, %s199
    %p211 = scmp.eq.s32.totalorder %s21, 1
    %p212 = por %p210, %p211
    %p214 = scmp.ne.s32.totalorder %s199, %s213
    %p215 = scmp.eq.s32.totalorder %s21, 0
    %p216 = por %p214, %p215
    %s217 = ssub.s32 %s15, %s22
    %p218 = scmp.eq.s32.totalorder %s217, 0
    %s220 = sadd.s32 %s219, 1
    %s221 = scalar_select %p218, %s219, %s220
    %p224 = pneg %p218
    %p225 = scmp.eq.s32.totalorder %s15, 1
    %p226 = por %p224, %p225
    %p227 = scmp.ne.s32.totalorder %s219, %s222
    %p228 = scmp.eq.s32.totalorder %s15, 0
    %p229 = por %p227, %p228
    %p230 = scmp.ne.s32.totalorder %s219, %s222
    %p231 = scmp.eq.s32.totalorder %s20, 1
    %p232 = por %p230, %p231
    %p233 = scmp.ne.s32.totalorder %s222, %s223
    %p234 = scmp.eq.s32.totalorder %s20, 0
    %p235 = por %p233, %p234
    %p236 = scmp.ne.s32.totalorder %s222, %s223
    %p237 = scmp.eq.s32.totalorder %s21, 1
    %p238 = por %p236, %p237
    %p240 = scmp.ne.s32.totalorder %s223, %s239
    %p241 = scmp.eq.s32.totalorder %s21, 0
    %p242 = por %p240, %p241
    %p243 = scmp.le.s32.totalorder 1, %s15
    %p244 = scmp.lt.s32.totalorder %s15, 3
    %p245 = pnand %p243, %p244
    %p246 = pneg %p245
    // Predicated region
    $region9: #{generator_forward.1} parent=5 // pred_check
      _
    $region10: #{generator_forward.1} parent=5 // pred_check_branch
      %248 = sbr.rel (%p245) target = $region12
    $region11: #{generator_forward.1} parent=5 // pred_region
      %s249 = ssub.s32 %s15, 1
      // Predicated region
      $region13: #{generator_forward.1} parent=11 // pred_check
        %p250 = pneg %p62
      $region14: #{generator_forward.1} parent=11 // pred_check_branch
        %252 = sbr.rel (%p250) target = $region16
      $region15: #{generator_forward.1} parent=11 // pred_region
        _
      $region16: #{generator_forward.1} parent=11 // pred_fallthru
        _
      // Predicated region
      $region17: #{generator_forward.1} parent=11 // pred_check
        %p253 = pneg %p83
      $region18: #{generator_forward.1} parent=11 // pred_check_branch
        %255 = sbr.rel (%p253) target = $region20
      $region19: #{generator_forward.1} parent=11 // pred_region
        _
      $region20: #{generator_forward.1} parent=11 // pred_fallthru
        _
      // Predicated region
      $region21: #{generator_forward.1} parent=11 // pred_check
        %p256 = pneg %p104
      $region22: #{generator_forward.1} parent=11 // pred_check_branch
        %258 = sbr.rel (%p256) target = $region24
      $region23: #{generator_forward.1} parent=11 // pred_region
        _
      $region24: #{generator_forward.1} parent=11 // pred_fallthru
        _
      // Predicated region
      $region25: #{generator_forward.1} parent=11 // pred_check
        %p259 = pneg %p125
      $region26: #{generator_forward.1} parent=11 // pred_check_branch
        %261 = sbr.rel (%p259) target = $region28
      $region27: #{generator_forward.1} parent=11 // pred_region
        _
      $region28: #{generator_forward.1} parent=11 // pred_fallthru
        _
      // Predicated region
      $region29: #{generator_forward.1} parent=11 // pred_check
        %p262 = pneg %p146
      $region30: #{generator_forward.1} parent=11 // pred_check_branch
        %264 = sbr.rel (%p262) target = $region32
      $region31: #{generator_forward.1} parent=11 // pred_region
        _
      $region32: #{generator_forward.1} parent=11 // pred_fallthru
        _
      // Predicated region
      $region33: #{generator_forward.1} parent=11 // pred_check
        %p265 = pneg %p167
      $region34: #{generator_forward.1} parent=11 // pred_check_branch
        %267 = sbr.rel (%p265) target = $region36
      $region35: #{generator_forward.1} parent=11 // pred_region
        _
      $region36: #{generator_forward.1} parent=11 // pred_fallthru
        _
      // Predicated region
      $region37: #{generator_forward.1} parent=11 // pred_check
        %p268 = pneg %p188
      $region38: #{generator_forward.1} parent=11 // pred_check_branch
        %270 = sbr.rel (%p268) target = $region40
      $region39: #{generator_forward.1} parent=11 // pred_region
        _
      $region40: #{generator_forward.1} parent=11 // pred_fallthru
        _
      // Predicated region
      $region41: #{generator_forward.1} parent=11 // pred_check
        %p271 = pneg %p209
      $region42: #{generator_forward.1} parent=11 // pred_check_branch
        %273 = sbr.rel (%p271) target = $region44
      $region43: #{generator_forward.1} parent=11 // pred_region
        _
      $region44: #{generator_forward.1} parent=11 // pred_fallthru
        _
    $region12: #{generator_forward.1} parent=5 // pred_fallthru
      _
    %p274 = scmp.lt.s32.totalorder %s15, 2
    // Predicated region
    $region45: #{generator_forward.1} parent=5 // pred_check
      %p275 = pneg %p274
    $region46: #{generator_forward.1} parent=5 // pred_check_branch
      %277 = sbr.rel (%p275) target = $region48
    $region47: #{generator_forward.1} parent=5 // pred_region
      // Predicated region
      $region49: #{generator_forward.1} parent=47 // pred_check
        %p278 = pneg %p35
      $region50: #{generator_forward.1} parent=47 // pred_check_branch
        %280 = sbr.rel (%p278) target = $region52
      $region51: #{generator_forward.1} parent=47 // pred_region
        %p281 = scmp.lt.s32.totalorder %s15, 1
        %s282 = scalar_select %p281, %s15, 1
        %s283 = smul.addr %s282, 2
        %s284 = smul.addr %s283, 8
        %s285 = scalar_lea.vmem %s0, %s284
      $region52: #{generator_forward.1} parent=47 // pred_fallthru
        _
    $region48: #{generator_forward.1} parent=5 // pred_fallthru
      _
    %p286 = scmp.le.s32.totalorder 1, %s15
    %p287 = scmp.lt.s32.totalorder %s15, 3
    %p288 = pnand %p286, %p287
    %p289 = pneg %p288
    // Predicated region
    $region53: #{generator_forward.1} parent=5 // pred_check
      _
    $region54: #{generator_forward.1} parent=5 // pred_check_branch
      %291 = sbr.rel (%p288) target = $region56
    $region55: #{generator_forward.1} parent=5 // pred_region
      %s292 = ssub.s32 %s15, 1
      %p293 = scmp.lt.s32.totalorder %s20, 1
      %s294 = scalar_select %p293, %s20, 1
      %s295 = smul.addr %s294, 2
      %s296 = smul.addr %s295, 8
      %s297 = scalar_lea.vmem %s0, %s296
      %p298 = pneg %p41
      %p299 = pneg %p38
      %p300 = pneg %p62
      %p301 = pneg %p59
      %p302 = pneg %p83
      %p303 = pneg %p80
      %p304 = pneg %p104
      %p305 = pneg %p101
      %p306 = pneg %p125
      %p307 = pneg %p122
      %p308 = pneg %p146
      %p309 = pneg %p143
      %p310 = pneg %p167
      %p311 = pneg %p164
      %p312 = pneg %p188
      %p313 = pneg %p185
      %p314 = pneg %p209
      %p315 = pneg %p206
      %p316 = pneg %p235
      %p317 = pneg %p232
      %p318 = scmp.lt.s32.totalorder %s20, 1
      %s319 = scalar_select %p318, %s20, 1
      %s320 = smul.addr %s319, 11
      %s321 = smul.addr %s320, 8
      %s322 = scalar_lea.vmem %s9, %s321
      %p323 = scmp.lt.s32.totalorder %s20, 1
      %s324 = scalar_select %p323, %s20, 1
      %s325 = smul.addr %s324, 2
      %s326 = smul.addr %s325, 8
      %s327 = scalar_lea.vmem %s0, %s326
      %p328 = scmp.lt.s32.totalorder %s20, 1
      %s329 = scalar_select %p328, %s20, 1
      %s330 = smul.addr %s329, 11
      %s331 = smul.addr %s330, 8
      %s332 = scalar_lea.vmem %s9, %s331
      %v333 = vld [vmem:[%s327] sm:$0xff]
      %v334 = vld [vmem:[%s327 + $0x8] sm:$0xff]
      %v335 = vld [vmem:[%s1] sm:$0x3]
      %337 = vset.pattern.permute.xlu0 0
      %338 = vperm.xlu0 %337, %v333
      %v339 = vpop.permute.xlu0 %338
      %342 = vset.pattern.permute.xlu0 0
      %343 = vperm.xlu0 %342, %v334
      %v344 = vpop.permute.xlu0 %343
      %v347 = vlaneseq
      %v348 = vshrl.u32 %v347, 7
      %v349 = vsub.s32 0, %v348
      %v350 = vrot.slane %v335, %v349
      %v351 = vlaneseq
      %v352 = vshrl.u32 %v351, 7
      %v353 = vsub.s32 1, %v352
      %v354 = vrot.slane %v335, %v353
      %v357 = vmul.f32 %v339, %v350
      %v358 = vmul.f32 %v339, %v354
      %v359 = vmul.f32 %v344, %v350
      %v360 = vmul.f32 %v344, %v354
      %v361 = vadd.f32 %v357, 0.0
      %v362 = vadd.f32 %v358, 0.0
      %v363 = vadd.f32 %v359, 0.0
      %v364 = vadd.f32 %v360, 0.0
      %s365 = scalar_lea.vmem %s1, 2
      %v366 = vld [vmem:[%s365] sm:$0x3]
      %v368 = vlaneseq
      %v369 = vshrl.u32 %v368, 7
      %v370 = vsub.s32 0, %v369
      %v371 = vrot.slane %v366, %v370
      %v372 = vlaneseq
      %v373 = vshrl.u32 %v372, 7
      %v374 = vsub.s32 1, %v373
      %v375 = vrot.slane %v366, %v374
      %v378 = vmul.f32 %v339, %v371
      %v379 = vmul.f32 %v339, %v375
      %v380 = vmul.f32 %v344, %v371
      %v381 = vmul.f32 %v344, %v375
      %vm386 = vcmask 1046528
      %v387 = vrot.slane %v378, 1
      %v388 = vrot.slane %v380, 1
      %v389 = vsel %vm386, %v387, %v388
      %v390 = vrot.slane %v379, 1
      %v391 = vrot.slane %v381, 1
      %v392 = vsel %vm386, %v390, %v391
      %v397 = vadd.f32 %v361, %v389
      %v398 = vadd.f32 %v362, %v392
      %v399 = vadd.f32 %v363, %v388
      %v400 = vadd.f32 %v364, %v391
      %s401 = scalar_lea.vmem %s1, 4
      %v402 = vld [vmem:[%s401] sm:$0x3]
      %v404 = vlaneseq
      %v405 = vshrl.u32 %v404, 7
      %v406 = vsub.s32 0, %v405
      %v407 = vrot.slane %v402, %v406
      %v408 = vlaneseq
      %v409 = vshrl.u32 %v408, 7
      %v410 = vsub.s32 1, %v409
      %v411 = vrot.slane %v402, %v410
      %v414 = vmul.f32 %v339, %v407
      %v415 = vmul.f32 %v339, %v411
      %v416 = vmul.f32 %v344, %v407
      %v417 = vmul.f32 %v344, %v411
      %vm422 = vcmask 1045504
      %v423 = vrot.slane %v414, 2
      %v424 = vrot.slane %v416, 2
      %v425 = vsel %vm422, %v423, %v424
      %v426 = vrot.slane %v415, 2
      %v427 = vrot.slane %v417, 2
      %v428 = vsel %vm422, %v426, %v427
      %v433 = vadd.f32 %v397, %v425
      %v434 = vadd.f32 %v398, %v428
      %v435 = vadd.f32 %v399, %v424
      %v436 = vadd.f32 %v400, %v427
      %v437 = vld [vmem:[%s2] sm:$0x3]
      %v439 = vlaneseq
      %v440 = vshrl.u32 %v439, 7
      %v441 = vsub.s32 0, %v440
      %v442 = vrot.slane %v437, %v441
      %v443 = vlaneseq
      %v444 = vshrl.u32 %v443, 7
      %v445 = vsub.s32 1, %v444
      %v446 = vrot.slane %v437, %v445
      %v449 = vadd.f32 %v433, %v442
      %v450 = vadd.f32 %v434, %v446
      %v451 = vadd.f32 %v435, %v442
      %v452 = vadd.f32 %v436, %v446
      %vm453 = vcmp.gt.f32.partialorder %v449, 0.0
      %vm454 = vcmp.gt.f32.partialorder %v450, 0.0
      %vm455 = vcmp.gt.f32.partialorder %v451, 0.0
      %vm456 = vcmp.gt.f32.partialorder %v452, 0.0
      %v457 = vmul.f32 %v449, 0.2
      %v458 = vmul.f32 %v450, 0.2
      %v459 = vmul.f32 %v451, 0.2
      %v460 = vmul.f32 %v452, 0.2
      %v461 = vsel %vm453, %v449, %v457
      %v462 = vsel %vm454, %v450, %v458
      %v463 = vsel %vm455, %v451, %v459
      %v464 = vsel %vm456, %v452, %v460
      %v465 = vlaneseq
      %v466 = vshrl.u32 %v465, 7
      %v467 = vadd.s32 %v466, 8
      %v468 = vadd.s32 %v466, 16
      %v469 = vlaneseq
      %v470 = vand.u32 %v469, 127
      %v471 = vmul.u32 %v470, 2
      %v472 = vadd.s32 %v471, 2
      %vm473 = vcmp.eq.s32.totalorder %v466, %v472
      %vm474 = vcmp.eq.s32.totalorder %v467, %v472
      %vm475 = vcmp.eq.s32.totalorder %v468, %v472
      %v476 = vsel %vm473, 1, 0
      %v477 = vsel %vm474, 1, 0
      %v478 = vsel %vm475, 1, 0
      %v479 = vcvt.s32.f32 %v476
      %v480 = vcvt.s32.f32 %v477
      %v481 = vcvt.s32.f32 %v478
      %v482 = vadd.s32 %v471, 3
      %vm483 = vcmp.eq.s32.totalorder %v466, %v482
      %vm484 = vcmp.eq.s32.totalorder %v467, %v482
      %vm485 = vcmp.eq.s32.totalorder %v468, %v482
      %v486 = vsel %vm483, 1, 0
      %v487 = vsel %vm484, 1, 0
      %v488 = vsel %vm485, 1, 0
      %v489 = vcvt.s32.f32 %v486
      %v490 = vcvt.s32.f32 %v487
      %v491 = vcvt.s32.f32 %v488
      %vm492 = vcmask 80896
      %v494 = vsel %vm492, %v489, 0
      %v497 = vsel %vm492, %v490, 0
      %v500 = vsel %vm492, %v491, 0
      %vm502 = vcmask 1041408
      %v504 = vsel %vm502, %v464, 0
      %506 = vmatprep.subr.mxu0 0.0
      %507 = vmatpush1.msra.mxu0 0.0
      %508 = vmatprep.subr.mxu0 0.0
      %509 = vmatpush1.msra.mxu0 0.0
      %510 = vmatprep.subr.mxu0 0.0
      %511 = vmatpush1.msra.mxu0 0.0
      %512 = vmatprep.subr.mxu0 0.0
      %513 = vmatpush1.msra.mxu0 0.0
      %514 = vmatprep.subr.mxu0 0.0
      %515 = vmatpush1.msra.mxu0 0.0
      %516 = vmatprep.subr.mxu0 0.0
      %517 = vmatpush1.msra.mxu0 0.0
      %518 = vmatprep.subr.mxu0 0.0
      %519 = vmatpush1.msra.mxu0 0.0
      %520 = vmatprep.subr.mxu0 0.0
      %521 = vmatpush1.msra.mxu0 0.0
      %522 = vmatprep.subr.mxu0 0.0
      %523 = vmatpush1.msra.mxu0 0.0
      %524 = vmatprep.subr.mxu0 0.0
      %525 = vmatpush1.msra.mxu0 0.0
      %526 = vmatprep.subr.mxu0 0.0
      %527 = vmatpush1.msra.mxu0 0.0
      %528 = vmatprep.subr.mxu0 0.0
      %529 = vmatpush1.msra.mxu0 0.0
      %530 = vmatprep.subr.mxu0 0.0
      %531 = vmatpush1.msra.mxu0 0.0
      %532 = vmatprep.subr.mxu0 0.0
      %533 = vmatpush1.msra.mxu0 0.0
      %534 = vmatprep.subr.mxu0 0.0
      %535 = vmatpush1.msra.mxu0 %v504
      %536 = vmatprep.subr.mxu0 0.0
      %537 = vmatpush1.msra.mxu0 %v462
      %538 = vmatprep.subr.mxu0 0.0
      %539 = vmatpush2.msra.mxu0 0.0
      %540 = vmatprep.subr.mxu0 0.0
      %541 = vmatpush2.msra.mxu0 0.0
      %542 = vmatprep.subr.mxu0 0.0
      %543 = vmatpush2.msra.mxu0 0.0
      %544 = vmatprep.subr.mxu0 0.0
      %545 = vmatpush2.msra.mxu0 0.0
      %546 = vmatprep.subr.mxu0 0.0
      %547 = vmatpush2.msra.mxu0 0.0
      %548 = vmatprep.subr.mxu0 0.0
      %549 = vmatpush2.msra.mxu0 0.0
      %550 = vmatprep.subr.mxu0 0.0
      %551 = vmatpush2.msra.mxu0 0.0
      %552 = vmatprep.subr.mxu0 0.0
      %553 = vmatpush2.msra.mxu0 0.0
      %554 = vmatprep.subr.mxu0 0.0
      %555 = vmatpush2.msra.mxu0 0.0
      %556 = vmatprep.subr.mxu0 0.0
      %557 = vmatpush2.msra.mxu0 0.0
      %558 = vmatprep.subr.mxu0 0.0
      %559 = vmatpush2.msra.mxu0 0.0
      %560 = vmatprep.subr.mxu0 0.0
      %561 = vmatpush2.msra.mxu0 0.0
      %562 = vmatprep.subr.mxu0 0.0
      %563 = vmatpush2.msra.mxu0 0.0
      %564 = vmatprep.subr.mxu0 0.0
      %565 = vmatpush2.msra.mxu0 0.0
      %566 = vmatprep.subr.mxu0 0.0
      %567 = vmatpush2.msra.mxu0 0.0
      %568 = vmatprep.subr.mxu0 0.0
      %569 = vmatpush2.msra.mxu0 0.0
      %570 = vmatprep.mubr.f32.mxu0 0.0
      %571 = vmatmul.mubr.f32.gmra.mxu0 %v494
      %v572 = vpop.f32.mrf.mxu0
      %v573 = vadd.f32 0.0, %v572
      %v574 = vpop.f32.mrf.mxu0
      %575 = vmatprep.mubr.f32.mxu0 0.0
      %576 = vmatmul.mubr.f32.gmra.mxu0 %v497
      %v577 = vpop.f32.mrf.mxu0
      %v578 = vadd.f32 0.0, %v577
      %v579 = vpop.f32.mrf.mxu0
      %580 = vmatprep.mubr.f32.mxu0 0.0
      %581 = vmatmul.mubr.f32.gmra.mxu0 %v500
      %v582 = vpop.f32.mrf.mxu0
      %v583 = vadd.f32 0.0, %v582
      %v584 = vpop.f32.mrf.mxu0
      %585 = vdwg.mxu0
      %v587 = vsel %vm492, %v479, 0
      %v590 = vsel %vm492, %v480, 0
      %v593 = vsel %vm492, %v481, 0
      %v596 = vsel %vm502, %v463, 0
      %598 = vmatprep.subr.mxu0 0.0
      %599 = vmatpush1.msra.mxu0 0.0
      %600 = vmatprep.subr.mxu0 0.0
      %601 = vmatpush1.msra.mxu0 0.0
      %602 = vmatprep.subr.mxu0 0.0
      %603 = vmatpush1.msra.mxu0 0.0
      %604 = vmatprep.subr.mxu0 0.0
      %605 = vmatpush1.msra.mxu0 0.0
      %606 = vmatprep.subr.mxu0 0.0
      %607 = vmatpush1.msra.mxu0 0.0
      %608 = vmatprep.subr.mxu0 0.0
      %609 = vmatpush1.msra.mxu0 0.0
      %610 = vmatprep.subr.mxu0 0.0
      %611 = vmatpush1.msra.mxu0 0.0
      %612 = vmatprep.subr.mxu0 0.0
      %613 = vmatpush1.msra.mxu0 0.0
      %614 = vmatprep.subr.mxu0 0.0
      %615 = vmatpush1.msra.mxu0 0.0
      %616 = vmatprep.subr.mxu0 0.0
      %617 = vmatpush1.msra.mxu0 0.0
      %618 = vmatprep.subr.mxu0 0.0
      %619 = vmatpush1.msra.mxu0 0.0
      %620 = vmatprep.subr.mxu0 0.0
      %621 = vmatpush1.msra.mxu0 0.0
      %622 = vmatprep.subr.mxu0 0.0
      %623 = vmatpush1.msra.mxu0 0.0
      %624 = vmatprep.subr.mxu0 0.0
      %625 = vmatpush1.msra.mxu0 0.0
      %626 = vmatprep.subr.mxu0 0.0
      %627 = vmatpush1.msra.mxu0 %v596
      %628 = vmatprep.subr.mxu0 0.0
      %629 = vmatpush1.msra.mxu0 %v461
      %630 = vmatprep.subr.mxu0 0.0
      %631 = vmatpush2.msra.mxu0 0.0
      %632 = vmatprep.subr.mxu0 0.0
      %633 = vmatpush2.msra.mxu0 0.0
      %634 = vmatprep.subr.mxu0 0.0
      %635 = vmatpush2.msra.mxu0 0.0
      %636 = vmatprep.subr.mxu0 0.0
      %637 = vmatpush2.msra.mxu0 0.0
      %638 = vmatprep.subr.mxu0 0.0
      %639 = vmatpush2.msra.mxu0 0.0
      %640 = vmatprep.subr.mxu0 0.0
      %641 = vmatpush2.msra.mxu0 0.0
      %642 = vmatprep.subr.mxu0 0.0
      %643 = vmatpush2.msra.mxu0 0.0
      %644 = vmatprep.subr.mxu0 0.0
      %645 = vmatpush2.msra.mxu0 0.0
      %646 = vmatprep.subr.mxu0 0.0
      %647 = vmatpush2.msra.mxu0 0.0
      %648 = vmatprep.subr.mxu0 0.0
      %649 = vmatpush2.msra.mxu0 0.0
      %650 = vmatprep.subr.mxu0 0.0
      %651 = vmatpush2.msra.mxu0 0.0
      %652 = vmatprep.subr.mxu0 0.0
      %653 = vmatpush2.msra.mxu0 0.0
      %654 = vmatprep.subr.mxu0 0.0
      %655 = vmatpush2.msra.mxu0 0.0
      %656 = vmatprep.subr.mxu0 0.0
      %657 = vmatpush2.msra.mxu0 0.0
      %658 = vmatprep.subr.mxu0 0.0
      %659 = vmatpush2.msra.mxu0 0.0
      %660 = vmatprep.subr.mxu0 0.0
      %661 = vmatpush2.msra.mxu0 0.0
      %662 = vmatprep.mubr.f32.mxu0 0.0
      %663 = vmatmul.mubr.f32.gmra.mxu0 %v587
      %v664 = vpop.f32.mrf.mxu0
      %v665 = vadd.f32 %v573, %v664
      %v666 = vpop.f32.mrf.mxu0
      %667 = vmatprep.mubr.f32.mxu0 0.0
      %668 = vmatmul.mubr.f32.gmra.mxu0 %v590
      %v669 = vpop.f32.mrf.mxu0
      %v670 = vadd.f32 %v578, %v669
      %v671 = vpop.f32.mrf.mxu0
      %672 = vmatprep.mubr.f32.mxu0 0.0
      %673 = vmatmul.mubr.f32.gmra.mxu0 %v593
      %v674 = vpop.f32.mrf.mxu0
      %v675 = vadd.f32 %v583, %v674
      %v676 = vpop.f32.mrf.mxu0
      %677 = vdwg.mxu0
      %vm678 = vcmp.lt.s32.totalorder %v466, 21
      %vm679 = vcmp.lt.s32.totalorder %v467, 21
      %vm680 = vcmp.lt.s32.totalorder %v468, 21
      %v681 = vsel %vm678, 1, 0
      %v682 = vsel %vm679, 1, 0
      %v683 = vsel %vm680, 1, 0
      %vm684 = vcmp.eq.s32.totalorder %v681, 1
      %vm685 = vcmp.eq.s32.totalorder %v682, 1
      %vm686 = vcmp.eq.s32.totalorder %v683, 1
      %v687 = vsel %vm684, %v665, 0.0
      %v688 = vsel %vm685, %v670, 0.0
      %v689 = vsel %vm686, %v675, 0.0
      %v690 = vld [vmem:[%s3] sm:$0xff]
      %v691 = vld [vmem:[%s3 + $0x8] sm:$0xff]
      %v692 = vld [vmem:[%s3 + $0x10] sm:$0xff]
      %v693 = vld [vmem:[%s3 + $0x18] sm:$0xff]
      %v694 = vld [vmem:[%s3 + $0x20] sm:$0xff]
      %v695 = vld [vmem:[%s3 + $0x28] sm:$0xff]
      %v696 = vld [vmem:[%s3 + $0x30] sm:$0xff]
      %v697 = vld [vmem:[%s3 + $0x38] sm:$0xff]
      %v698 = vld [vmem:[%s3 + $0x40] sm:$0xff]
      %v699 = vld [vmem:[%s3 + $0x48] sm:$0xff]
      %v700 = vld [vmem:[%s3 + $0x50] sm:$0xff]
      %v701 = vld [vmem:[%s3 + $0x58] sm:$0xff]
      %v702 = vld [vmem:[%s3 + $0x60] sm:$0xff]
      %v703 = vld [vmem:[%s3 + $0x68] sm:$0xff]
      %v704 = vld [vmem:[%s3 + $0x70] sm:$0xff]
      %v705 = vld [vmem:[%s3 + $0x78] sm:$0xff]
      %v706 = vld [vmem:[%s3 + $0x80] sm:$0xff]
      %v707 = vld [vmem:[%s3 + $0x88] sm:$0xff]
      %v708 = vld [vmem:[%s3 + $0x90] sm:$0xff]
      %v709 = vld [vmem:[%s3 + $0x98] sm:$0xff]
      %v710 = vld [vmem:[%s3 + $0xa0] sm:$0xff]
      %v711 = vld [vmem:[%s3 + $0xa8] sm:$0xff]
      %v712 = vld [vmem:[%s3 + $0xb0] sm:$0xff]
      %v713 = vld [vmem:[%s3 + $0xb8] sm:$0xff]
      %v714 = vld [vmem:[%s3 + $0xc0] sm:$0xff]
      %v715 = vld [vmem:[%s3 + $0xc8] sm:$0xff]
      %v716 = vld [vmem:[%s3 + $0xd0] sm:$0xff]
      %v717 = vld [vmem:[%s3 + $0xd8] sm:$0xff]
      %v718 = vld [vmem:[%s3 + $0xe0] sm:$0xff]
      %v719 = vld [vmem:[%s3 + $0xe8] sm:$0xff]
      %v720 = vld [vmem:[%s3 + $0xf0] sm:$0xff]
      %v721 = vld [vmem:[%s3 + $0xf8] sm:$0xff]
      %v722 = vld [vmem:[%s3 + $0x100] sm:$0xff]
      %v723 = vld [vmem:[%s3 + $0x108] sm:$0xff]
      %v724 = vld [vmem:[%s3 + $0x110] sm:$0xff]
      %v725 = vld [vmem:[%s3 + $0x118] sm:$0xff]
      %v726 = vld [vmem:[%s3 + $0x120] sm:$0xff]
      %v727 = vld [vmem:[%s3 + $0x128] sm:$0xff]
      %v728 = vld [vmem:[%s3 + $0x130] sm:$0xff]
      %v729 = vld [vmem:[%s3 + $0x138] sm:$0xff]
      %v730 = vld [vmem:[%s3 + $0x140] sm:$0xff]
      %v731 = vld [vmem:[%s3 + $0x148] sm:$0xff]
      %v732 = vld [vmem:[%s3 + $0x150] sm:$0xff]
      %v733 = vld [vmem:[%s3 + $0x158] sm:$0xff]
      %v734 = vld [vmem:[%s3 + $0x160] sm:$0xff]
      %v735 = vld [vmem:[%s3 + $0x168] sm:$0xff]
      %v736 = vld [vmem:[%s3 + $0x170] sm:$0xff]
      %v737 = vld [vmem:[%s3 + $0x178] sm:$0xff]
      %v738 = vld [vmem:[%s3 + $0x180] sm:$0xff]
      %v739 = vld [vmem:[%s3 + $0x188] sm:$0xff]
      %v740 = vld [vmem:[%s3 + $0x190] sm:$0xff]
      %v741 = vld [vmem:[%s3 + $0x198] sm:$0xff]
      %v742 = vld [vmem:[%s3 + $0x1a0] sm:$0xff]
      %v743 = vld [vmem:[%s3 + $0x1a8] sm:$0xff]
      %v744 = vld [vmem:[%s3 + $0x1b0] sm:$0xff]
      %v745 = vld [vmem:[%s3 + $0x1b8] sm:$0xff]
      %v746 = vld [vmem:[%s3 + $0x1c0] sm:$0xff]
      %v747 = vld [vmem:[%s3 + $0x1c8] sm:$0xff]
      %v748 = vld [vmem:[%s3 + $0x1d0] sm:$0xff]
      %v749 = vld [vmem:[%s3 + $0x1d8] sm:$0xff]
      %v750 = vld [vmem:[%s3 + $0x1e0] sm:$0xff]
      %v751 = vld [vmem:[%s3 + $0x1e8] sm:$0xff]
      %v752 = vld [vmem:[%s3 + $0x1f0] sm:$0xff]
      %v753 = vld [vmem:[%s3 + $0x1f8] sm:$0xff]
      %s754 = scalar_lea.vmem %s3, 512
      %v755 = vld [vmem:[%s754] sm:$0xff]
      %v756 = vld [vmem:[%s754 + $0x8] sm:$0xff]
      %v757 = vld [vmem:[%s754 + $0x10] sm:$0xff]
      %v758 = vld [vmem:[%s754 + $0x18] sm:$0xff]
      %v759 = vld [vmem:[%s754 + $0x20] sm:$0xff]
      %v760 = vld [vmem:[%s754 + $0x28] sm:$0xff]
      %v761 = vld [vmem:[%s754 + $0x30] sm:$0xff]
      %v762 = vld [vmem:[%s754 + $0x38] sm:$0xff]
      %v763 = vld [vmem:[%s754 + $0x40] sm:$0xff]
      %v764 = vld [vmem:[%s754 + $0x48] sm:$0xff]
      %v765 = vld [vmem:[%s754 + $0x50] sm:$0xff]
      %v766 = vld [vmem:[%s754 + $0x58] sm:$0xff]
      %v767 = vld [vmem:[%s754 + $0x60] sm:$0xff]
      %v768 = vld [vmem:[%s754 + $0x68] sm:$0xff]
      %v769 = vld [vmem:[%s754 + $0x70] sm:$0xff]
      %v770 = vld [vmem:[%s754 + $0x78] sm:$0xff]
      %v771 = vld [vmem:[%s754 + $0x80] sm:$0xff]
      %v772 = vld [vmem:[%s754 + $0x88] sm:$0xff]
      %v773 = vld [vmem:[%s754 + $0x90] sm:$0xff]
      %v774 = vld [vmem:[%s754 + $0x98] sm:$0xff]
      %v775 = vld [vmem:[%s754 + $0xa0] sm:$0xff]
      %v776 = vld [vmem:[%s754 + $0xa8] sm:$0xff]
      %v777 = vld [vmem:[%s754 + $0xb0] sm:$0xff]
      %v778 = vld [vmem:[%s754 + $0xb8] sm:$0xff]
      %v779 = vld [vmem:[%s754 + $0xc0] sm:$0xff]
      %v780 = vld [vmem:[%s754 + $0xc8] sm:$0xff]
      %v781 = vld [vmem:[%s754 + $0xd0] sm:$0xff]
      %v782 = vld [vmem:[%s754 + $0xd8] sm:$0xff]
      %v783 = vld [vmem:[%s754 + $0xe0] sm:$0xff]
      %v784 = vld [vmem:[%s754 + $0xe8] sm:$0xff]
      %v785 = vld [vmem:[%s754 + $0xf0] sm:$0xff]
      %v786 = vld [vmem:[%s754 + $0xf8] sm:$0xff]
      %v787 = vld [vmem:[%s754 + $0x100] sm:$0xff]
      %v788 = vld [vmem:[%s754 + $0x108] sm:$0xff]
      %v789 = vld [vmem:[%s754 + $0x110] sm:$0xff]
      %v790 = vld [vmem:[%s754 + $0x118] sm:$0xff]
      %v791 = vld [vmem:[%s754 + $0x120] sm:$0xff]
      %v792 = vld [vmem:[%s754 + $0x128] sm:$0xff]
      %v793 = vld [vmem:[%s754 + $0x130] sm:$0xff]
      %v794 = vld [vmem:[%s754 + $0x138] sm:$0xff]
      %v795 = vld [vmem:[%s754 + $0x140] sm:$0xff]
      %v796 = vld [vmem:[%s754 + $0x148] sm:$0xff]
      %v797 = vld [vmem:[%s754 + $0x150] sm:$0xff]
      %v798 = vld [vmem:[%s754 + $0x158] sm:$0xff]
      %v799 = vld [vmem:[%s754 + $0x160] sm:$0xff]
      %v800 = vld [vmem:[%s754 + $0x168] sm:$0xff]
      %v801 = vld [vmem:[%s754 + $0x170] sm:$0xff]
      %v802 = vld [vmem:[%s754 + $0x178] sm:$0xff]
      %v803 = vld [vmem:[%s754 + $0x180] sm:$0xff]
      %v804 = vld [vmem:[%s754 + $0x188] sm:$0xff]
      %v805 = vld [vmem:[%s754 + $0x190] sm:$0xff]
      %v806 = vld [vmem:[%s754 + $0x198] sm:$0xff]
      %v807 = vld [vmem:[%s754 + $0x1a0] sm:$0xff]
      %v808 = vld [vmem:[%s754 + $0x1a8] sm:$0xff]
      %v809 = vld [vmem:[%s754 + $0x1b0] sm:$0xff]
      %v810 = vld [vmem:[%s754 + $0x1b8] sm:$0xff]
      %v811 = vld [vmem:[%s754 + $0x1c0] sm:$0xff]
      %v812 = vld [vmem:[%s754 + $0x1c8] sm:$0xff]
      %v813 = vld [vmem:[%s754 + $0x1d0] sm:$0xff]
      %v814 = vld [vmem:[%s754 + $0x1d8] sm:$0xff]
      %v815 = vld [vmem:[%s754 + $0x1e0] sm:$0xff]
      %v816 = vld [vmem:[%s754 + $0x1e8] sm:$0xff]
      %v817 = vld [vmem:[%s754 + $0x1f0] sm:$0xff]
      %v818 = vld [vmem:[%s754 + $0x1f8] sm:$0xff]
      %v822 = vrot.slane %v687, 1
      %v823 = vrot.slane %v688, 1
      %v824 = vsel %vm386, %v822, %v823
      %v825 = vrot.slane %v689, 1
      %v826 = vsel %vm386, %v823, %v825
      %830 = vmatprep.subr.mxu0 %v816
      %831 = vmatpush1.msra.mxu0 %v815
      %832 = vmatprep.subr.mxu0 %v812
      %833 = vmatpush1.msra.mxu0 %v811
      %834 = vmatprep.subr.mxu0 %v808
      %835 = vmatpush1.msra.mxu0 %v807
      %836 = vmatprep.subr.mxu0 %v804
      %837 = vmatpush1.msra.mxu0 %v803
      %838 = vmatprep.subr.mxu0 %v800
      %839 = vmatpush1.msra.mxu0 %v799
      %840 = vmatprep.subr.mxu0 %v796
      %841 = vmatpush1.msra.mxu0 %v795
      %842 = vmatprep.subr.mxu0 %v792
      %843 = vmatpush1.msra.mxu0 %v791
      %844 = vmatprep.subr.mxu0 %v788
      %845 = vmatpush1.msra.mxu0 %v787
      %846 = vmatprep.subr.mxu0 %v784
      %847 = vmatpush1.msra.mxu0 %v783
      %848 = vmatprep.subr.mxu0 %v780
      %849 = vmatpush1.msra.mxu0 %v779
      %850 = vmatprep.subr.mxu0 %v776
      %851 = vmatpush1.msra.mxu0 %v775
      %852 = vmatprep.subr.mxu0 %v772
      %853 = vmatpush1.msra.mxu0 %v771
      %854 = vmatprep.subr.mxu0 %v768
      %855 = vmatpush1.msra.mxu0 %v767
      %856 = vmatprep.subr.mxu0 %v764
      %857 = vmatpush1.msra.mxu0 %v763
      %858 = vmatprep.subr.mxu0 %v760
      %859 = vmatpush1.msra.mxu0 %v759
      %860 = vmatprep.subr.mxu0 %v756
      %861 = vmatpush1.msra.mxu0 %v755
      %862 = vmatprep.subr.mxu0 0.0
      %863 = vmatpush2.msra.mxu0 0.0
      %864 = vmatprep.subr.mxu0 0.0
      %865 = vmatpush2.msra.mxu0 0.0
      %866 = vmatprep.subr.mxu0 0.0
      %867 = vmatpush2.msra.mxu0 0.0
      %868 = vmatprep.subr.mxu0 0.0
      %869 = vmatpush2.msra.mxu0 0.0
      %870 = vmatprep.subr.mxu0 0.0
      %871 = vmatpush2.msra.mxu0 0.0
      %872 = vmatprep.subr.mxu0 0.0
      %873 = vmatpush2.msra.mxu0 0.0
      %874 = vmatprep.subr.mxu0 0.0
      %875 = vmatpush2.msra.mxu0 0.0
      %876 = vmatprep.subr.mxu0 0.0
      %877 = vmatpush2.msra.mxu0 0.0
      %878 = vmatprep.subr.mxu0 0.0
      %879 = vmatpush2.msra.mxu0 0.0
      %880 = vmatprep.subr.mxu0 0.0
      %881 = vmatpush2.msra.mxu0 0.0
      %882 = vmatprep.subr.mxu0 0.0
      %883 = vmatpush2.msra.mxu0 0.0
      %884 = vmatprep.subr.mxu0 0.0
      %885 = vmatpush2.msra.mxu0 0.0
      %886 = vmatprep.subr.mxu0 0.0
      %887 = vmatpush2.msra.mxu0 0.0
      %888 = vmatprep.subr.mxu0 0.0
      %889 = vmatpush2.msra.mxu0 0.0
      %890 = vmatprep.subr.mxu0 0.0
      %891 = vmatpush2.msra.mxu0 0.0
      %892 = vmatprep.subr.mxu0 0.0
      %893 = vmatpush2.msra.mxu0 0.0
      %894 = vmatprep.mubr.f32.mxu0 0.0
      %895 = vmatmul.mubr.f32.gmra.mxu0 %v824
      %v896 = vpop.f32.mrf.mxu0
      %v897 = vadd.f32 0.0, %v896
      %v898 = vpop.f32.mrf.mxu0
      %v899 = vadd.f32 0.0, %v898
      %900 = vmatprep.mubr.f32.mxu0 0.0
      %901 = vmatmul.mubr.f32.gmra.mxu0 %v826
      %v902 = vpop.f32.mrf.mxu0
      %v903 = vadd.f32 0.0, %v902
      %v904 = vpop.f32.mrf.mxu0
      %v905 = vadd.f32 0.0, %v904
      %906 = vmatprep.mubr.f32.mxu0 0.0
      %907 = vmatmul.mubr.f32.gmra.mxu0 %v825
      %v908 = vpop.f32.mrf.mxu0
      %v909 = vadd.f32 0.0, %v908
      %v910 = vpop.f32.mrf.mxu0
      %v911 = vadd.f32 0.0, %v910
      %912 = vdwg.mxu0
      %913 = vmatprep.subr.mxu0 %v818
      %914 = vmatpush1.msra.mxu0 %v817
      %915 = vmatprep.subr.mxu0 %v814
      %916 = vmatpush1.msra.mxu0 %v813
      %917 = vmatprep.subr.mxu0 %v810
      %918 = vmatpush1.msra.mxu0 %v809
      %919 = vmatprep.subr.mxu0 %v806
      %920 = vmatpush1.msra.mxu0 %v805
      %921 = vmatprep.subr.mxu0 %v802
      %922 = vmatpush1.msra.mxu0 %v801
      %923 = vmatprep.subr.mxu0 %v798
      %924 = vmatpush1.msra.mxu0 %v797
      %925 = vmatprep.subr.mxu0 %v794
      %926 = vmatpush1.msra.mxu0 %v793
      %927 = vmatprep.subr.mxu0 %v790
      %928 = vmatpush1.msra.mxu0 %v789
      %929 = vmatprep.subr.mxu0 %v786
      %930 = vmatpush1.msra.mxu0 %v785
      %931 = vmatprep.subr.mxu0 %v782
      %932 = vmatpush1.msra.mxu0 %v781
      %933 = vmatprep.subr.mxu0 %v778
      %934 = vmatpush1.msra.mxu0 %v777
      %935 = vmatprep.subr.mxu0 %v774
      %936 = vmatpush1.msra.mxu0 %v773
      %937 = vmatprep.subr.mxu0 %v770
      %938 = vmatpush1.msra.mxu0 %v769
      %939 = vmatprep.subr.mxu0 %v766
      %940 = vmatpush1.msra.mxu0 %v765
      %941 = vmatprep.subr.mxu0 %v762
      %942 = vmatpush1.msra.mxu0 %v761
      %943 = vmatprep.subr.mxu0 %v758
      %944 = vmatpush1.msra.mxu0 %v757
      %945 = vmatprep.subr.mxu0 0.0
      %946 = vmatpush2.msra.mxu0 0.0
      %947 = vmatprep.subr.mxu0 0.0
      %948 = vmatpush2.msra.mxu0 0.0
      %949 = vmatprep.subr.mxu0 0.0
      %950 = vmatpush2.msra.mxu0 0.0
      %951 = vmatprep.subr.mxu0 0.0
      %952 = vmatpush2.msra.mxu0 0.0
      %953 = vmatprep.subr.mxu0 0.0
      %954 = vmatpush2.msra.mxu0 0.0
      %955 = vmatprep.subr.mxu0 0.0
      %956 = vmatpush2.msra.mxu0 0.0
      %957 = vmatprep.subr.mxu0 0.0
      %958 = vmatpush2.msra.mxu0 0.0
      %959 = vmatprep.subr.mxu0 0.0
      %960 = vmatpush2.msra.mxu0 0.0
      %961 = vmatprep.subr.mxu0 0.0
      %962 = vmatpush2.msra.mxu0 0.0
      %963 = vmatprep.subr.mxu0 0.0
      %964 = vmatpush2.msra.mxu0 0.0
      %965 = vmatprep.subr.mxu0 0.0
      %966 = vmatpush2.msra.mxu0 0.0
      %967 = vmatprep.subr.mxu0 0.0
      %968 = vmatpush2.msra.mxu0 0.0
      %969 = vmatprep.subr.mxu0 0.0
      %970 = vmatpush2.msra.mxu0 0.0
      %971 = vmatprep.subr.mxu0 0.0
      %972 = vmatpush2.msra.mxu0 0.0
      %973 = vmatprep.subr.mxu0 0.0
      %974 = vmatpush2.msra.mxu0 0.0
      %975 = vmatprep.subr.mxu0 0.0
      %976 = vmatpush2.msra.mxu0 0.0
      %977 = vmatprep.mubr.f32.mxu0 0.0
      %978 = vmatmul.mubr.f32.gmra.mxu0 %v824
      %v979 = vpop.f32.mrf.mxu0
      %v980 = vadd.f32 0.0, %v979
      %v981 = vpop.f32.mrf.mxu0
      %v982 = vadd.f32 0.0, %v981
      %983 = vmatprep.mubr.f32.mxu0 0.0
      %984 = vmatmul.mubr.f32.gmra.mxu0 %v826
      %v985 = vpop.f32.mrf.mxu0
      %v986 = vadd.f32 0.0, %v985
      %v987 = vpop.f32.mrf.mxu0
      %v988 = vadd.f32 0.0, %v987
      %989 = vmatprep.mubr.f32.mxu0 0.0
      %990 = vmatmul.mubr.f32.gmra.mxu0 %v825
      %v991 = vpop.f32.mrf.mxu0
      %v992 = vadd.f32 0.0, %v991
      %v993 = vpop.f32.mrf.mxu0
      %v994 = vadd.f32 0.0, %v993
      %995 = vdwg.mxu0
      %996 = vmatprep.subr.mxu0 %v751
      %997 = vmatpush1.msra.mxu0 %v750
      %998 = vmatprep.subr.mxu0 %v747
      %999 = vmatpush1.msra.mxu0 %v746
      %1000 = vmatprep.subr.mxu0 %v743
      %1001 = vmatpush1.msra.mxu0 %v742
      %1002 = vmatprep.subr.mxu0 %v739
      %1003 = vmatpush1.msra.mxu0 %v738
      %1004 = vmatprep.subr.mxu0 %v735
      %1005 = vmatpush1.msra.mxu0 %v734
      %1006 = vmatprep.subr.mxu0 %v731
      %1007 = vmatpush1.msra.mxu0 %v730
      %1008 = vmatprep.subr.mxu0 %v727
      %1009 = vmatpush1.msra.mxu0 %v726
      %1010 = vmatprep.subr.mxu0 %v723
      %1011 = vmatpush1.msra.mxu0 %v722
      %1012 = vmatprep.subr.mxu0 %v719
      %1013 = vmatpush1.msra.mxu0 %v718
      %1014 = vmatprep.subr.mxu0 %v715
      %1015 = vmatpush1.msra.mxu0 %v714
      %1016 = vmatprep.subr.mxu0 %v711
      %1017 = vmatpush1.msra.mxu0 %v710
      %1018 = vmatprep.subr.mxu0 %v707
      %1019 = vmatpush1.msra.mxu0 %v706
      %1020 = vmatprep.subr.mxu0 %v703
      %1021 = vmatpush1.msra.mxu0 %v702
      %1022 = vmatprep.subr.mxu0 %v699
      %1023 = vmatpush1.msra.mxu0 %v698
      %1024 = vmatprep.subr.mxu0 %v695
      %1025 = vmatpush1.msra.mxu0 %v694
      %1026 = vmatprep.subr.mxu0 %v691
      %1027 = vmatpush1.msra.mxu0 %v690
      %1028 = vmatprep.subr.mxu0 0.0
      %1029 = vmatpush2.msra.mxu0 0.0
      %1030 = vmatprep.subr.mxu0 0.0
      %1031 = vmatpush2.msra.mxu0 0.0
      %1032 = vmatprep.subr.mxu0 0.0
      %1033 = vmatpush2.msra.mxu0 0.0
      %1034 = vmatprep.subr.mxu0 0.0
      %1035 = vmatpush2.msra.mxu0 0.0
      %1036 = vmatprep.subr.mxu0 0.0
      %1037 = vmatpush2.msra.mxu0 0.0
      %1038 = vmatprep.subr.mxu0 0.0
      %1039 = vmatpush2.msra.mxu0 0.0
      %1040 = vmatprep.subr.mxu0 0.0
      %1041 = vmatpush2.msra.mxu0 0.0
      %1042 = vmatprep.subr.mxu0 0.0
      %1043 = vmatpush2.msra.mxu0 0.0
      %1044 = vmatprep.subr.mxu0 0.0
      %1045 = vmatpush2.msra.mxu0 0.0
      %1046 = vmatprep.subr.mxu0 0.0
      %1047 = vmatpush2.msra.mxu0 0.0
      %1048 = vmatprep.subr.mxu0 0.0
      %1049 = vmatpush2.msra.mxu0 0.0
      %1050 = vmatprep.subr.mxu0 0.0
      %1051 = vmatpush2.msra.mxu0 0.0
      %1052 = vmatprep.subr.mxu0 0.0
      %1053 = vmatpush2.msra.mxu0 0.0
      %1054 = vmatprep.subr.mxu0 0.0
      %1055 = vmatpush2.msra.mxu0 0.0
      %1056 = vmatprep.subr.mxu0 0.0
      %1057 = vmatpush2.msra.mxu0 0.0
      %1058 = vmatprep.subr.mxu0 0.0
      %1059 = vmatpush2.msra.mxu0 0.0
      %1060 = vmatprep.mubr.f32.mxu0 0.0
      %1061 = vmatmul.mubr.f32.gmra.mxu0 %v687
      %v1062 = vpop.f32.mrf.mxu0
      %v1063 = vadd.f32 %v897, %v1062
      %v1064 = vpop.f32.mrf.mxu0
      %v1065 = vadd.f32 %v899, %v1064
      %1066 = vmatprep.mubr.f32.mxu0 0.0
      %1067 = vmatmul.mubr.f32.gmra.mxu0 %v688
      %v1068 = vpop.f32.mrf.mxu0
      %v1069 = vadd.f32 %v903, %v1068
      %v1070 = vpop.f32.mrf.mxu0
      %v1071 = vadd.f32 %v905, %v1070
      %1072 = vmatprep.mubr.f32.mxu0 0.0
      %1073 = vmatmul.mubr.f32.gmra.mxu0 %v689
      %v1074 = vpop.f32.mrf.mxu0
      %v1075 = vadd.f32 %v909, %v1074
      %v1076 = vpop.f32.mrf.mxu0
      %v1077 = vadd.f32 %v911, %v1076
      %1078 = vdwg.mxu0
      %1079 = vmatprep.subr.mxu0 %v753
      %1080 = vmatpush1.msra.mxu0 %v752
      %1081 = vmatprep.subr.mxu0 %v749
      %1082 = vmatpush1.msra.mxu0 %v748
      %1083 = vmatprep.subr.mxu0 %v745
      %1084 = vmatpush1.msra.mxu0 %v744
      %1085 = vmatprep.subr.mxu0 %v741
      %1086 = vmatpush1.msra.mxu0 %v740
      %1087 = vmatprep.subr.mxu0 %v737
      %1088 = vmatpush1.msra.mxu0 %v736
      %1089 = vmatprep.subr.mxu0 %v733
      %1090 = vmatpush1.msra.mxu0 %v732
      %1091 = vmatprep.subr.mxu0 %v729
      %1092 = vmatpush1.msra.mxu0 %v728
      %1093 = vmatprep.subr.mxu0 %v725
      %1094 = vmatpush1.msra.mxu0 %v724
      %1095 = vmatprep.subr.mxu0 %v721
      %1096 = vmatpush1.msra.mxu0 %v720
      %1097 = vmatprep.subr.mxu0 %v717
      %1098 = vmatpush1.msra.mxu0 %v716
      %1099 = vmatprep.subr.mxu0 %v713
      %1100 = vmatpush1.msra.mxu0 %v712
      %1101 = vmatprep.subr.mxu0 %v709
      %1102 = vmatpush1.msra.mxu0 %v708
      %1103 = vmatprep.subr.mxu0 %v705
      %1104 = vmatpush1.msra.mxu0 %v704
      %1105 = vmatprep.subr.mxu0 %v701
      %1106 = vmatpush1.msra.mxu0 %v700
      %1107 = vmatprep.subr.mxu0 %v697
      %1108 = vmatpush1.msra.mxu0 %v696
      %1109 = vmatprep.subr.mxu0 %v693
      %1110 = vmatpush1.msra.mxu0 %v692
      %1111 = vmatprep.subr.mxu0 0.0
      %1112 = vmatpush2.msra.mxu0 0.0
      %1113 = vmatprep.subr.mxu0 0.0
      %1114 = vmatpush2.msra.mxu0 0.0
      %1115 = vmatprep.subr.mxu0 0.0
      %1116 = vmatpush2.msra.mxu0 0.0
      %1117 = vmatprep.subr.mxu0 0.0
      %1118 = vmatpush2.msra.mxu0 0.0
      %1119 = vmatprep.subr.mxu0 0.0
      %1120 = vmatpush2.msra.mxu0 0.0
      %1121 = vmatprep.subr.mxu0 0.0
      %1122 = vmatpush2.msra.mxu0 0.0
      %1123 = vmatprep.subr.mxu0 0.0
      %1124 = vmatpush2.msra.mxu0 0.0
      %1125 = vmatprep.subr.mxu0 0.0
      %1126 = vmatpush2.msra.mxu0 0.0
      %1127 = vmatprep.subr.mxu0 0.0
      %1128 = vmatpush2.msra.mxu0 0.0
      %1129 = vmatprep.subr.mxu0 0.0
      %1130 = vmatpush2.msra.mxu0 0.0
      %1131 = vmatprep.subr.mxu0 0.0
      %1132 = vmatpush2.msra.mxu0 0.0
      %1133 = vmatprep.subr.mxu0 0.0
      %1134 = vmatpush2.msra.mxu0 0.0
      %1135 = vmatprep.subr.mxu0 0.0
      %1136 = vmatpush2.msra.mxu0 0.0
      %1137 = vmatprep.subr.mxu0 0.0
      %1138 = vmatpush2.msra.mxu0 0.0
      %1139 = vmatprep.subr.mxu0 0.0
      %1140 = vmatpush2.msra.mxu0 0.0
      %1141 = vmatprep.subr.mxu0 0.0
      %1142 = vmatpush2.msra.mxu0 0.0
      %1143 = vmatprep.mubr.f32.mxu0 0.0
      %1144 = vmatmul.mubr.f32.gmra.mxu0 %v687
      %v1145 = vpop.f32.mrf.mxu0
      %v1146 = vadd.f32 %v980, %v1145
      %v1147 = vpop.f32.mrf.mxu0
      %v1148 = vadd.f32 %v982, %v1147
      %1149 = vmatprep.mubr.f32.mxu0 0.0
      %1150 = vmatmul.mubr.f32.gmra.mxu0 %v688
      %v1151 = vpop.f32.mrf.mxu0
      %v1152 = vadd.f32 %v986, %v1151
      %v1153 = vpop.f32.mrf.mxu0
      %v1154 = vadd.f32 %v988, %v1153
      %1155 = vmatprep.mubr.f32.mxu0 0.0
      %1156 = vmatmul.mubr.f32.gmra.mxu0 %v689
      %v1157 = vpop.f32.mrf.mxu0
      %v1158 = vadd.f32 %v992, %v1157
      %v1159 = vpop.f32.mrf.mxu0
      %v1160 = vadd.f32 %v994, %v1159
      %1161 = vdwg.mxu0
      %s1162 = scalar_lea.vmem %s3, 1024
      %v1163 = vld [vmem:[%s1162] sm:$0xff]
      %v1164 = vld [vmem:[%s1162 + $0x8] sm:$0xff]
      %v1165 = vld [vmem:[%s1162 + $0x10] sm:$0xff]
      %v1166 = vld [vmem:[%s1162 + $0x18] sm:$0xff]
      %v1167 = vld [vmem:[%s1162 + $0x20] sm:$0xff]
      %v1168 = vld [vmem:[%s1162 + $0x28] sm:$0xff]
      %v1169 = vld [vmem:[%s1162 + $0x30] sm:$0xff]
      %v1170 = vld [vmem:[%s1162 + $0x38] sm:$0xff]
      %v1171 = vld [vmem:[%s1162 + $0x40] sm:$0xff]
      %v1172 = vld [vmem:[%s1162 + $0x48] sm:$0xff]
      %v1173 = vld [vmem:[%s1162 + $0x50] sm:$0xff]
      %v1174 = vld [vmem:[%s1162 + $0x58] sm:$0xff]
      %v1175 = vld [vmem:[%s1162 + $0x60] sm:$0xff]
      %v1176 = vld [vmem:[%s1162 + $0x68] sm:$0xff]
      %v1177 = vld [vmem:[%s1162 + $0x70] sm:$0xff]
      %v1178 = vld [vmem:[%s1162 + $0x78] sm:$0xff]
      %v1179 = vld [vmem:[%s1162 + $0x80] sm:$0xff]
      %v1180 = vld [vmem:[%s1162 + $0x88] sm:$0xff]
      %v1181 = vld [vmem:[%s1162 + $0x90] sm:$0xff]
      %v1182 = vld [vmem:[%s1162 + $0x98] sm:$0xff]
      %v1183 = vld [vmem:[%s1162 + $0xa0] sm:$0xff]
      %v1184 = vld [vmem:[%s1162 + $0xa8] sm:$0xff]
      %v1185 = vld [vmem:[%s1162 + $0xb0] sm:$0xff]
      %v1186 = vld [vmem:[%s1162 + $0xb8] sm:$0xff]
      %v1187 = vld [vmem:[%s1162 + $0xc0] sm:$0xff]
      %v1188 = vld [vmem:[%s1162 + $0xc8] sm:$0xff]
      %v1189 = vld [vmem:[%s1162 + $0xd0] sm:$0xff]
      %v1190 = vld [vmem:[%s1162 + $0xd8] sm:$0xff]
      %v1191 = vld [vmem:[%s1162 + $0xe0] sm:$0xff]
      %v1192 = vld [vmem:[%s1162 + $0xe8] sm:$0xff]
      %v1193 = vld [vmem:[%s1162 + $0xf0] sm:$0xff]
      %v1194 = vld [vmem:[%s1162 + $0xf8] sm:$0xff]
      %v1195 = vld [vmem:[%s1162 + $0x100] sm:$0xff]
      %v1196 = vld [vmem:[%s1162 + $0x108] sm:$0xff]
      %v1197 = vld [vmem:[%s1162 + $0x110] sm:$0xff]
      %v1198 = vld [vmem:[%s1162 + $0x118] sm:$0xff]
      %v1199 = vld [vmem:[%s1162 + $0x120] sm:$0xff]
      %v1200 = vld [vmem:[%s1162 + $0x128] sm:$0xff]
      %v1201 = vld [vmem:[%s1162 + $0x130] sm:$0xff]
      %v1202 = vld [vmem:[%s1162 + $0x138] sm:$0xff]
      %v1203 = vld [vmem:[%s1162 + $0x140] sm:$0xff]
      %v1204 = vld [vmem:[%s1162 + $0x148] sm:$0xff]
      %v1205 = vld [vmem:[%s1162 + $0x150] sm:$0xff]
      %v1206 = vld [vmem:[%s1162 + $0x158] sm:$0xff]
      %v1207 = vld [vmem:[%s1162 + $0x160] sm:$0xff]
      %v1208 = vld [vmem:[%s1162 + $0x168] sm:$0xff]
      %v1209 = vld [vmem:[%s1162 + $0x170] sm:$0xff]
      %v1210 = vld [vmem:[%s1162 + $0x178] sm:$0xff]
      %v1211 = vld [vmem:[%s1162 + $0x180] sm:$0xff]
      %v1212 = vld [vmem:[%s1162 + $0x188] sm:$0xff]
      %v1213 = vld [vmem:[%s1162 + $0x190] sm:$0xff]
      %v1214 = vld [vmem:[%s1162 + $0x198] sm:$0xff]
      %v1215 = vld [vmem:[%s1162 + $0x1a0] sm:$0xff]
      %v1216 = vld [vmem:[%s1162 + $0x1a8] sm:$0xff]
      %v1217 = vld [vmem:[%s1162 + $0x1b0] sm:$0xff]
      %v1218 = vld [vmem:[%s1162 + $0x1b8] sm:$0xff]
      %v1219 = vld [vmem:[%s1162 + $0x1c0] sm:$0xff]
      %v1220 = vld [vmem:[%s1162 + $0x1c8] sm:$0xff]
      %v1221 = vld [vmem:[%s1162 + $0x1d0] sm:$0xff]
      %v1222 = vld [vmem:[%s1162 + $0x1d8] sm:$0xff]
      %v1223 = vld [vmem:[%s1162 + $0x1e0] sm:$0xff]
      %v1224 = vld [vmem:[%s1162 + $0x1e8] sm:$0xff]
      %v1225 = vld [vmem:[%s1162 + $0x1f0] sm:$0xff]
      %v1226 = vld [vmem:[%s1162 + $0x1f8] sm:$0xff]
      %v1227 = vrot.slane %v687, 2
      %v1228 = vrot.slane %v688, 2
      %v1229 = vsel %vm422, %v1227, %v1228
      %v1230 = vrot.slane %v689, 2
      %v1231 = vsel %vm422, %v1228, %v1230
      %1235 = vmatprep.subr.mxu0 %v1224
      %1236 = vmatpush1.msra.mxu0 %v1223
      %1237 = vmatprep.subr.mxu0 %v1220
      %1238 = vmatpush1.msra.mxu0 %v1219
      %1239 = vmatprep.subr.mxu0 %v1216
      %1240 = vmatpush1.msra.mxu0 %v1215
      %1241 = vmatprep.subr.mxu0 %v1212
      %1242 = vmatpush1.msra.mxu0 %v1211
      %1243 = vmatprep.subr.mxu0 %v1208
      %1244 = vmatpush1.msra.mxu0 %v1207
      %1245 = vmatprep.subr.mxu0 %v1204
      %1246 = vmatpush1.msra.mxu0 %v1203
      %1247 = vmatprep.subr.mxu0 %v1200
      %1248 = vmatpush1.msra.mxu0 %v1199
      %1249 = vmatprep.subr.mxu0 %v1196
      %1250 = vmatpush1.msra.mxu0 %v1195
      %1251 = vmatprep.subr.mxu0 %v1192
      %1252 = vmatpush1.msra.mxu0 %v1191
      %1253 = vmatprep.subr.mxu0 %v1188
      %1254 = vmatpush1.msra.mxu0 %v1187
      %1255 = vmatprep.subr.mxu0 %v1184
      %1256 = vmatpush1.msra.mxu0 %v1183
      %1257 = vmatprep.subr.mxu0 %v1180
      %1258 = vmatpush1.msra.mxu0 %v1179
      %1259 = vmatprep.subr.mxu0 %v1176
      %1260 = vmatpush1.msra.mxu0 %v1175
      %1261 = vmatprep.subr.mxu0 %v1172
      %1262 = vmatpush1.msra.mxu0 %v1171
      %1263 = vmatprep.subr.mxu0 %v1168
      %1264 = vmatpush1.msra.mxu0 %v1167
      %1265 = vmatprep.subr.mxu0 %v1164
      %1266 = vmatpush1.msra.mxu0 %v1163
      %1267 = vmatprep.subr.mxu0 0.0
      %1268 = vmatpush2.msra.mxu0 0.0
      %1269 = vmatprep.subr.mxu0 0.0
      %1270 = vmatpush2.msra.mxu0 0.0
      %1271 = vmatprep.subr.mxu0 0.0
      %1272 = vmatpush2.msra.mxu0 0.0
      %1273 = vmatprep.subr.mxu0 0.0
      %1274 = vmatpush2.msra.mxu0 0.0
      %1275 = vmatprep.subr.mxu0 0.0
      %1276 = vmatpush2.msra.mxu0 0.0
      %1277 = vmatprep.subr.mxu0 0.0
      %1278 = vmatpush2.msra.mxu0 0.0
      %1279 = vmatprep.subr.mxu0 0.0
      %1280 = vmatpush2.msra.mxu0 0.0
      %1281 = vmatprep.subr.mxu0 0.0
      %1282 = vmatpush2.msra.mxu0 0.0
      %1283 = vmatprep.subr.mxu0 0.0
      %1284 = vmatpush2.msra.mxu0 0.0
      %1285 = vmatprep.subr.mxu0 0.0
      %1286 = vmatpush2.msra.mxu0 0.0
      %1287 = vmatprep.subr.mxu0 0.0
      %1288 = vmatpush2.msra.mxu0 0.0
      %1289 = vmatprep.subr.mxu0 0.0
      %1290 = vmatpush2.msra.mxu0 0.0
      %1291 = vmatprep.subr.mxu0 0.0
      %1292 = vmatpush2.msra.mxu0 0.0
      %1293 = vmatprep.subr.mxu0 0.0
      %1294 = vmatpush2.msra.mxu0 0.0
      %1295 = vmatprep.subr.mxu0 0.0
      %1296 = vmatpush2.msra.mxu0 0.0
      %1297 = vmatprep.subr.mxu0 0.0
      %1298 = vmatpush2.msra.mxu0 0.0
      %1299 = vmatprep.mubr.f32.mxu0 0.0
      %1300 = vmatmul.mubr.f32.gmra.mxu0 %v1229
      %v1301 = vpop.f32.mrf.mxu0
      %v1302 = vadd.f32 0.0, %v1301
      %v1303 = vpop.f32.mrf.mxu0
      %v1304 = vadd.f32 0.0, %v1303
      %1305 = vmatprep.mubr.f32.mxu0 0.0
      %1306 = vmatmul.mubr.f32.gmra.mxu0 %v1231
      %v1307 = vpop.f32.mrf.mxu0
      %v1308 = vadd.f32 0.0, %v1307
      %v1309 = vpop.f32.mrf.mxu0
      %v1310 = vadd.f32 0.0, %v1309
      %1311 = vmatprep.mubr.f32.mxu0 0.0
      %1312 = vmatmul.mubr.f32.gmra.mxu0 %v1230
      %v1313 = vpop.f32.mrf.mxu0
      %v1314 = vadd.f32 0.0, %v1313
      %v1315 = vpop.f32.mrf.mxu0
      %v1316 = vadd.f32 0.0, %v1315
      %1317 = vdwg.mxu0
      %1318 = vmatprep.subr.mxu0 %v1226
      %1319 = vmatpush1.msra.mxu0 %v1225
      %1320 = vmatprep.subr.mxu0 %v1222
      %1321 = vmatpush1.msra.mxu0 %v1221
      %1322 = vmatprep.subr.mxu0 %v1218
      %1323 = vmatpush1.msra.mxu0 %v1217
      %1324 = vmatprep.subr.mxu0 %v1214
      %1325 = vmatpush1.msra.mxu0 %v1213
      %1326 = vmatprep.subr.mxu0 %v1210
      %1327 = vmatpush1.msra.mxu0 %v1209
      %1328 = vmatprep.subr.mxu0 %v1206
      %1329 = vmatpush1.msra.mxu0 %v1205
      %1330 = vmatprep.subr.mxu0 %v1202
      %1331 = vmatpush1.msra.mxu0 %v1201
      %1332 = vmatprep.subr.mxu0 %v1198
      %1333 = vmatpush1.msra.mxu0 %v1197
      %1334 = vmatprep.subr.mxu0 %v1194
      %1335 = vmatpush1.msra.mxu0 %v1193
      %1336 = vmatprep.subr.mxu0 %v1190
      %1337 = vmatpush1.msra.mxu0 %v1189
      %1338 = vmatprep.subr.mxu0 %v1186
      %1339 = vmatpush1.msra.mxu0 %v1185
      %1340 = vmatprep.subr.mxu0 %v1182
      %1341 = vmatpush1.msra.mxu0 %v1181
      %1342 = vmatprep.subr.mxu0 %v1178
      %1343 = vmatpush1.msra.mxu0 %v1177
      %1344 = vmatprep.subr.mxu0 %v1174
      %1345 = vmatpush1.msra.mxu0 %v1173
      %1346 = vmatprep.subr.mxu0 %v1170
      %1347 = vmatpush1.msra.mxu0 %v1169
      %1348 = vmatprep.subr.mxu0 %v1166
      %1349 = vmatpush1.msra.mxu0 %v1165
      %1350 = vmatprep.subr.mxu0 0.0
      %1351 = vmatpush2.msra.mxu0 0.0
      %1352 = vmatprep.subr.mxu0 0.0
      %1353 = vmatpush2.msra.mxu0 0.0
      %1354 = vmatprep.subr.mxu0 0.0
      %1355 = vmatpush2.msra.mxu0 0.0
      %1356 = vmatprep.subr.mxu0 0.0
      %1357 = vmatpush2.msra.mxu0 0.0
      %1358 = vmatprep.subr.mxu0 0.0
      %1359 = vmatpush2.msra.mxu0 0.0
      %1360 = vmatprep.subr.mxu0 0.0
      %1361 = vmatpush2.msra.mxu0 0.0
      %1362 = vmatprep.subr.mxu0 0.0
      %1363 = vmatpush2.msra.mxu0 0.0
      %1364 = vmatprep.subr.mxu0 0.0
      %1365 = vmatpush2.msra.mxu0 0.0
      %1366 = vmatprep.subr.mxu0 0.0
      %1367 = vmatpush2.msra.mxu0 0.0
      %1368 = vmatprep.subr.mxu0 0.0
      %1369 = vmatpush2.msra.mxu0 0.0
      %1370 = vmatprep.subr.mxu0 0.0
      %1371 = vmatpush2.msra.mxu0 0.0
      %1372 = vmatprep.subr.mxu0 0.0
      %1373 = vmatpush2.msra.mxu0 0.0
      %1374 = vmatprep.subr.mxu0 0.0
      %1375 = vmatpush2.msra.mxu0 0.0
      %1376 = vmatprep.subr.mxu0 0.0
      %1377 = vmatpush2.msra.mxu0 0.0
      %1378 = vmatprep.subr.mxu0 0.0
      %1379 = vmatpush2.msra.mxu0 0.0
      %1380 = vmatprep.subr.mxu0 0.0
      %1381 = vmatpush2.msra.mxu0 0.0
      %1382 = vmatprep.mubr.f32.mxu0 0.0
      %1383 = vmatmul.mubr.f32.gmra.mxu0 %v1229
      %v1384 = vpop.f32.mrf.mxu0
      %v1385 = vadd.f32 0.0, %v1384
      %v1386 = vpop.f32.mrf.mxu0
      %v1387 = vadd.f32 0.0, %v1386
      %1388 = vmatprep.mubr.f32.mxu0 0.0
      %1389 = vmatmul.mubr.f32.gmra.mxu0 %v1231
      %v1390 = vpop.f32.mrf.mxu0
      %v1391 = vadd.f32 0.0, %v1390
      %v1392 = vpop.f32.mrf.mxu0
      %v1393 = vadd.f32 0.0, %v1392
      %1394 = vmatprep.mubr.f32.mxu0 0.0
      %1395 = vmatmul.mubr.f32.gmra.mxu0 %v1230
      %v1396 = vpop.f32.mrf.mxu0
      %v1397 = vadd.f32 0.0, %v1396
      %v1398 = vpop.f32.mrf.mxu0
      %v1399 = vadd.f32 0.0, %v1398
      %1400 = vdwg.mxu0
      %v1401 = vadd.f32 %v1063, %v1302
      %v1402 = vadd.f32 %v1065, %v1304
      %v1403 = vadd.f32 %v1146, %v1385
      %v1404 = vadd.f32 %v1148, %v1387
      %v1405 = vadd.f32 %v1069, %v1308
      %v1406 = vadd.f32 %v1071, %v1310
      %v1407 = vadd.f32 %v1152, %v1391
      %v1408 = vadd.f32 %v1154, %v1393
      %v1409 = vadd.f32 %v1075, %v1314
      %v1410 = vadd.f32 %v1077, %v1316
      %v1411 = vadd.f32 %v1158, %v1397
      %v1412 = vadd.f32 %v1160, %v1399
      %v1413 = vld [vmem:[%s4] sm:$0xf]
      %v1415 = vlaneseq
      %v1416 = vshrl.u32 %v1415, 7
      %v1417 = vsub.s32 0, %v1416
      %v1418 = vrot.slane %v1413, %v1417
      %v1419 = vlaneseq
      %v1420 = vshrl.u32 %v1419, 7
      %v1421 = vsub.s32 1, %v1420
      %v1422 = vrot.slane %v1413, %v1421
      %v1423 = vlaneseq
      %v1424 = vshrl.u32 %v1423, 7
      %v1425 = vsub.s32 2, %v1424
      %v1426 = vrot.slane %v1413, %v1425
      %v1427 = vlaneseq
      %v1428 = vshrl.u32 %v1427, 7
      %v1429 = vsub.s32 3, %v1428
      %v1430 = vrot.slane %v1413, %v1429
      %v1435 = vadd.f32 %v1401, %v1418
      %v1436 = vadd.f32 %v1402, %v1422
      %v1437 = vadd.f32 %v1403, %v1426
      %v1438 = vadd.f32 %v1404, %v1430
      %v1439 = vadd.f32 %v1405, %v1418
      %v1440 = vadd.f32 %v1406, %v1422
      %v1441 = vadd.f32 %v1407, %v1426
      %v1442 = vadd.f32 %v1408, %v1430
      %v1443 = vadd.f32 %v1409, %v1418
      %v1444 = vadd.f32 %v1410, %v1422
      %v1445 = vadd.f32 %v1411, %v1426
      %v1446 = vadd.f32 %v1412, %v1430
      %vm1447 = vcmp.gt.f32.partialorder %v1435, 0.0
      %vm1448 = vcmp.gt.f32.partialorder %v1436, 0.0
      %vm1449 = vcmp.gt.f32.partialorder %v1437, 0.0
      %vm1450 = vcmp.gt.f32.partialorder %v1438, 0.0
      %vm1451 = vcmp.gt.f32.partialorder %v1439, 0.0
      %vm1452 = vcmp.gt.f32.partialorder %v1440, 0.0
      %vm1453 = vcmp.gt.f32.partialorder %v1441, 0.0
      %vm1454 = vcmp.gt.f32.partialorder %v1442, 0.0
      %vm1455 = vcmp.gt.f32.partialorder %v1443, 0.0
      %vm1456 = vcmp.gt.f32.partialorder %v1444, 0.0
      %vm1457 = vcmp.gt.f32.partialorder %v1445, 0.0
      %vm1458 = vcmp.gt.f32.partialorder %v1446, 0.0
      %v1459 = vmul.f32 %v1435, 0.2
      %v1460 = vmul.f32 %v1436, 0.2
      %v1461 = vmul.f32 %v1437, 0.2
      %v1462 = vmul.f32 %v1438, 0.2
      %v1463 = vmul.f32 %v1439, 0.2
      %v1464 = vmul.f32 %v1440, 0.2
      %v1465 = vmul.f32 %v1441, 0.2
      %v1466 = vmul.f32 %v1442, 0.2
      %v1467 = vmul.f32 %v1443, 0.2
      %v1468 = vmul.f32 %v1444, 0.2
      %v1469 = vmul.f32 %v1445, 0.2
      %v1470 = vmul.f32 %v1446, 0.2
      %v1471 = vsel %vm1447, %v1435, %v1459
      %v1472 = vsel %vm1448, %v1436, %v1460
      %v1473 = vsel %vm1449, %v1437, %v1461
      %v1474 = vsel %vm1450, %v1438, %v1462
      %v1475 = vsel %vm1451, %v1439, %v1463
      %v1476 = vsel %vm1452, %v1440, %v1464
      %v1477 = vsel %vm1453, %v1441, %v1465
      %v1478 = vsel %vm1454, %v1442, %v1466
      %v1479 = vsel %vm1455, %v1443, %v1467
      %v1480 = vsel %vm1456, %v1444, %v1468
      %v1481 = vsel %vm1457, %v1445, %v1469
      %v1482 = vsel %vm1458, %v1446, %v1470
      %v1483 = vadd.s32 %v466, 24
      %v1484 = vadd.s32 %v466, 32
      %v1485 = vadd.s32 %v466, 40
      %vm1486 = vcmp.eq.s32.totalorder %v1483, %v472
      %vm1487 = vcmp.eq.s32.totalorder %v1484, %v472
      %vm1488 = vcmp.eq.s32.totalorder %v1485, %v472
      %v1489 = vsel %vm1486, 1, 0
      %v1490 = vsel %vm1487, 1, 0
      %v1491 = vsel %vm1488, 1, 0
      %v1492 = vcvt.s32.f32 %v1489
      %v1493 = vcvt.s32.f32 %v1490
      %v1494 = vcvt.s32.f32 %v1491
      %vm1495 = vcmp.eq.s32.totalorder %v1483, %v482
      %vm1496 = vcmp.eq.s32.totalorder %v1484, %v482
      %vm1497 = vcmp.eq.s32.totalorder %v1485, %v482
      %v1498 = vsel %vm1495, 1, 0
      %v1499 = vsel %vm1496, 1, 0
      %v1500 = vsel %vm1497, 1, 0
      %v1501 = vcvt.s32.f32 %v1498
      %v1502 = vcvt.s32.f32 %v1499
      %v1503 = vcvt.s32.f32 %v1500
      %vm1504 = vcmask 171008
      %v1505 = vsel %vm1504, %v489, 0
      %v1507 = vsel %vm1504, %v490, 0
      %v1509 = vsel %vm1504, %v491, 0
      %v1512 = vsel %vm1504, %v1501, 0
      %v1515 = vsel %vm1504, %v1502, 0
      %v1518 = vsel %vm1504, %v1503, 0
      %vm1520 = vcmask 1044480
      %v1522 = vsel %vm1520, %v1481, 0
      %v1525 = vsel %vm1520, %v1482, 0
      %1527 = vmatprep.subr.mxu0 0.0
      %1528 = vmatpush1.msra.mxu0 0.0
      %1529 = vmatprep.subr.mxu0 0.0
      %1530 = vmatpush1.msra.mxu0 0.0
      %1531 = vmatprep.subr.mxu0 0.0
      %1532 = vmatpush1.msra.mxu0 0.0
      %1533 = vmatprep.subr.mxu0 0.0
      %1534 = vmatpush1.msra.mxu0 0.0
      %1535 = vmatprep.subr.mxu0 0.0
      %1536 = vmatpush1.msra.mxu0 0.0
      %1537 = vmatprep.subr.mxu0 0.0
      %1538 = vmatpush1.msra.mxu0 0.0
      %1539 = vmatprep.subr.mxu0 0.0
      %1540 = vmatpush1.msra.mxu0 0.0
      %1541 = vmatprep.subr.mxu0 0.0
      %1542 = vmatpush1.msra.mxu0 0.0
      %1543 = vmatprep.subr.mxu0 0.0
      %1544 = vmatpush1.msra.mxu0 0.0
      %1545 = vmatprep.subr.mxu0 0.0
      %1546 = vmatpush1.msra.mxu0 0.0
      %1547 = vmatprep.subr.mxu0 0.0
      %1548 = vmatpush1.msra.mxu0 0.0
      %1549 = vmatprep.subr.mxu0 0.0
      %1550 = vmatpush1.msra.mxu0 0.0
      %1551 = vmatprep.subr.mxu0 0.0
      %1552 = vmatpush1.msra.mxu0 0.0
      %1553 = vmatprep.subr.mxu0 %v1525
      %1554 = vmatpush1.msra.mxu0 %v1522
      %1555 = vmatprep.subr.mxu0 %v1478
      %1556 = vmatpush1.msra.mxu0 %v1477
      %1557 = vmatprep.subr.mxu0 %v1474
      %1558 = vmatpush1.msra.mxu0 %v1473
      %1559 = vmatprep.subr.mxu0 0.0
      %1560 = vmatpush2.msra.mxu0 0.0
      %1561 = vmatprep.subr.mxu0 0.0
      %1562 = vmatpush2.msra.mxu0 0.0
      %1563 = vmatprep.subr.mxu0 0.0
      %1564 = vmatpush2.msra.mxu0 0.0
      %1565 = vmatprep.subr.mxu0 0.0
      %1566 = vmatpush2.msra.mxu0 0.0
      %1567 = vmatprep.subr.mxu0 0.0
      %1568 = vmatpush2.msra.mxu0 0.0
      %1569 = vmatprep.subr.mxu0 0.0
      %1570 = vmatpush2.msra.mxu0 0.0
      %1571 = vmatprep.subr.mxu0 0.0
      %1572 = vmatpush2.msra.mxu0 0.0
      %1573 = vmatprep.subr.mxu0 0.0
      %1574 = vmatpush2.msra.mxu0 0.0
      %1575 = vmatprep.subr.mxu0 0.0
      %1576 = vmatpush2.msra.mxu0 0.0
      %1577 = vmatprep.subr.mxu0 0.0
      %1578 = vmatpush2.msra.mxu0 0.0
      %1579 = vmatprep.subr.mxu0 0.0
      %1580 = vmatpush2.msra.mxu0 0.0
      %1581 = vmatprep.subr.mxu0 0.0
      %1582 = vmatpush2.msra.mxu0 0.0
      %1583 = vmatprep.subr.mxu0 0.0
      %1584 = vmatpush2.msra.mxu0 0.0
      %1585 = vmatprep.subr.mxu0 0.0
      %1586 = vmatpush2.msra.mxu0 0.0
      %1587 = vmatprep.subr.mxu0 0.0
      %1588 = vmatpush2.msra.mxu0 0.0
      %1589 = vmatprep.subr.mxu0 0.0
      %1590 = vmatpush2.msra.mxu0 0.0
      %1591 = vmatprep.mubr.f32.mxu0 0.0
      %1592 = vmatmul.mubr.f32.gmra.mxu0 %v1505
      %v1593 = vpop.f32.mrf.mxu0
      %v1594 = vadd.f32 0.0, %v1593
      %v1595 = vpop.f32.mrf.mxu0
      %v1596 = vadd.f32 0.0, %v1595
      %1597 = vmatprep.mubr.f32.mxu0 0.0
      %1598 = vmatmul.mubr.f32.gmra.mxu0 %v1507
      %v1599 = vpop.f32.mrf.mxu0
      %v1600 = vadd.f32 0.0, %v1599
      %v1601 = vpop.f32.mrf.mxu0
      %v1602 = vadd.f32 0.0, %v1601
      %1603 = vmatprep.mubr.f32.mxu0 0.0
      %1604 = vmatmul.mubr.f32.gmra.mxu0 %v1509
      %v1605 = vpop.f32.mrf.mxu0
      %v1606 = vadd.f32 0.0, %v1605
      %v1607 = vpop.f32.mrf.mxu0
      %v1608 = vadd.f32 0.0, %v1607
      %1609 = vmatprep.mubr.f32.mxu0 0.0
      %1610 = vmatmul.mubr.f32.gmra.mxu0 %v1512
      %v1611 = vpop.f32.mrf.mxu0
      %v1612 = vadd.f32 0.0, %v1611
      %v1613 = vpop.f32.mrf.mxu0
      %v1614 = vadd.f32 0.0, %v1613
      %1615 = vmatprep.mubr.f32.mxu0 0.0
      %1616 = vmatmul.mubr.f32.gmra.mxu0 %v1515
      %v1617 = vpop.f32.mrf.mxu0
      %v1618 = vadd.f32 0.0, %v1617
      %v1619 = vpop.f32.mrf.mxu0
      %v1620 = vadd.f32 0.0, %v1619
      %1621 = vmatprep.mubr.f32.mxu0 0.0
      %1622 = vmatmul.mubr.f32.gmra.mxu0 %v1518
      %v1623 = vpop.f32.mrf.mxu0
      %v1624 = vadd.f32 0.0, %v1623
      %v1625 = vpop.f32.mrf.mxu0
      %v1626 = vadd.f32 0.0, %v1625
      %1627 = vdwg.mxu0
      %v1628 = vsel %vm1504, %v479, 0
      %v1630 = vsel %vm1504, %v480, 0
      %v1632 = vsel %vm1504, %v481, 0
      %v1635 = vsel %vm1504, %v1492, 0
      %v1638 = vsel %vm1504, %v1493, 0
      %v1641 = vsel %vm1504, %v1494, 0
      %v1644 = vsel %vm1520, %v1479, 0
      %v1647 = vsel %vm1520, %v1480, 0
      %1649 = vmatprep.subr.mxu0 0.0
      %1650 = vmatpush1.msra.mxu0 0.0
      %1651 = vmatprep.subr.mxu0 0.0
      %1652 = vmatpush1.msra.mxu0 0.0
      %1653 = vmatprep.subr.mxu0 0.0
      %1654 = vmatpush1.msra.mxu0 0.0
      %1655 = vmatprep.subr.mxu0 0.0
      %1656 = vmatpush1.msra.mxu0 0.0
      %1657 = vmatprep.subr.mxu0 0.0
      %1658 = vmatpush1.msra.mxu0 0.0
      %1659 = vmatprep.subr.mxu0 0.0
      %1660 = vmatpush1.msra.mxu0 0.0
      %1661 = vmatprep.subr.mxu0 0.0
      %1662 = vmatpush1.msra.mxu0 0.0
      %1663 = vmatprep.subr.mxu0 0.0
      %1664 = vmatpush1.msra.mxu0 0.0
      %1665 = vmatprep.subr.mxu0 0.0
      %1666 = vmatpush1.msra.mxu0 0.0
      %1667 = vmatprep.subr.mxu0 0.0
      %1668 = vmatpush1.msra.mxu0 0.0
      %1669 = vmatprep.subr.mxu0 0.0
      %1670 = vmatpush1.msra.mxu0 0.0
      %1671 = vmatprep.subr.mxu0 0.0
      %1672 = vmatpush1.msra.mxu0 0.0
      %1673 = vmatprep.subr.mxu0 0.0
      %1674 = vmatpush1.msra.mxu0 0.0
      %1675 = vmatprep.subr.mxu0 %v1647
      %1676 = vmatpush1.msra.mxu0 %v1644
      %1677 = vmatprep.subr.mxu0 %v1476
      %1678 = vmatpush1.msra.mxu0 %v1475
      %1679 = vmatprep.subr.mxu0 %v1472
      %1680 = vmatpush1.msra.mxu0 %v1471
      %1681 = vmatprep.subr.mxu0 0.0
      %1682 = vmatpush2.msra.mxu0 0.0
      %1683 = vmatprep.subr.mxu0 0.0
      %1684 = vmatpush2.msra.mxu0 0.0
      %1685 = vmatprep.subr.mxu0 0.0
      %1686 = vmatpush2.msra.mxu0 0.0
      %1687 = vmatprep.subr.mxu0 0.0
      %1688 = vmatpush2.msra.mxu0 0.0
      %1689 = vmatprep.subr.mxu0 0.0
      %1690 = vmatpush2.msra.mxu0 0.0
      %1691 = vmatprep.subr.mxu0 0.0
      %1692 = vmatpush2.msra.mxu0 0.0
      %1693 = vmatprep.subr.mxu0 0.0
      %1694 = vmatpush2.msra.mxu0 0.0
      %1695 = vmatprep.subr.mxu0 0.0
      %1696 = vmatpush2.msra.mxu0 0.0
      %1697 = vmatprep.subr.mxu0 0.0
      %1698 = vmatpush2.msra.mxu0 0.0
      %1699 = vmatprep.subr.mxu0 0.0
      %1700 = vmatpush2.msra.mxu0 0.0
      %1701 = vmatprep.subr.mxu0 0.0
      %1702 = vmatpush2.msra.mxu0 0.0
      %1703 = vmatprep.subr.mxu0 0.0
      %1704 = vmatpush2.msra.mxu0 0.0
      %1705 = vmatprep.subr.mxu0 0.0
      %1706 = vmatpush2.msra.mxu0 0.0
      %1707 = vmatprep.subr.mxu0 0.0
      %1708 = vmatpush2.msra.mxu0 0.0
      %1709 = vmatprep.subr.mxu0 0.0
      %1710 = vmatpush2.msra.mxu0 0.0
      %1711 = vmatprep.subr.mxu0 0.0
      %1712 = vmatpush2.msra.mxu0 0.0
      %1713 = vmatprep.mubr.f32.mxu0 0.0
      %1714 = vmatmul.mubr.f32.gmra.mxu0 %v1628
      %v1715 = vpop.f32.mrf.mxu0
      %v1716 = vadd.f32 %v1594, %v1715
      %v1717 = vpop.f32.mrf.mxu0
      %v1718 = vadd.f32 %v1596, %v1717
      %1719 = vmatprep.mubr.f32.mxu0 0.0
      %1720 = vmatmul.mubr.f32.gmra.mxu0 %v1630
      %v1721 = vpop.f32.mrf.mxu0
      %v1722 = vadd.f32 %v1600, %v1721
      %v1723 = vpop.f32.mrf.mxu0
      %v1724 = vadd.f32 %v1602, %v1723
      %1725 = vmatprep.mubr.f32.mxu0 0.0
      %1726 = vmatmul.mubr.f32.gmra.mxu0 %v1632
      %v1727 = vpop.f32.mrf.mxu0
      %v1728 = vadd.f32 %v1606, %v1727
      %v1729 = vpop.f32.mrf.mxu0
      %v1730 = vadd.f32 %v1608, %v1729
      %1731 = vmatprep.mubr.f32.mxu0 0.0
      %1732 = vmatmul.mubr.f32.gmra.mxu0 %v1635
      %v1733 = vpop.f32.mrf.mxu0
      %v1734 = vadd.f32 %v1612, %v1733
      %v1735 = vpop.f32.mrf.mxu0
      %v1736 = vadd.f32 %v1614, %v1735
      %1737 = vmatprep.mubr.f32.mxu0 0.0
      %1738 = vmatmul.mubr.f32.gmra.mxu0 %v1638
      %v1739 = vpop.f32.mrf.mxu0
      %v1740 = vadd.f32 %v1618, %v1739
      %v1741 = vpop.f32.mrf.mxu0
      %v1742 = vadd.f32 %v1620, %v1741
      %1743 = vmatprep.mubr.f32.mxu0 0.0
      %1744 = vmatmul.mubr.f32.gmra.mxu0 %v1641
      %v1745 = vpop.f32.mrf.mxu0
      %v1746 = vadd.f32 %v1624, %v1745
      %v1747 = vpop.f32.mrf.mxu0
      %v1748 = vadd.f32 %v1626, %v1747
      %1749 = vdwg.mxu0
      %vm1750 = vcmp.lt.s32.totalorder %v466, 43
      %vm1751 = vcmp.lt.s32.totalorder %v467, 43
      %vm1752 = vcmp.lt.s32.totalorder %v468, 43
      %vm1753 = vcmp.lt.s32.totalorder %v1483, 43
      %vm1754 = vcmp.lt.s32.totalorder %v1484, 43
      %vm1755 = vcmp.lt.s32.totalorder %v1485, 43
      %v1756 = vsel %vm1750, 1, 0
      %v1757 = vsel %vm1751, 1, 0
      %v1758 = vsel %vm1752, 1, 0
      %v1759 = vsel %vm1753, 1, 0
      %v1760 = vsel %vm1754, 1, 0
      %v1761 = vsel %vm1755, 1, 0
      %vm1762 = vcmp.eq.s32.totalorder %v1756, 1
      %vm1763 = vcmp.eq.s32.totalorder %v1757, 1
      %vm1764 = vcmp.eq.s32.totalorder %v1758, 1
      %vm1765 = vcmp.eq.s32.totalorder %v1759, 1
      %vm1766 = vcmp.eq.s32.totalorder %v1760, 1
      %vm1767 = vcmp.eq.s32.totalorder %v1761, 1
      %v1768 = vsel %vm1762, %v1716, 0.0
      %v1769 = vsel %vm1762, %v1718, 0.0
      %v1770 = vsel %vm1763, %v1722, 0.0
      %v1771 = vsel %vm1763, %v1724, 0.0
      %v1772 = vsel %vm1764, %v1728, 0.0
      %v1773 = vsel %vm1764, %v1730, 0.0
      %v1774 = vsel %vm1765, %v1734, 0.0
      %v1775 = vsel %vm1765, %v1736, 0.0
      %v1776 = vsel %vm1766, %v1740, 0.0
      %v1777 = vsel %vm1766, %v1742, 0.0
      %v1778 = vsel %vm1767, %v1746, 0.0
      %v1779 = vsel %vm1767, %v1748, 0.0
      %v1780 = vld [vmem:[%s5] sm:$0xff]
      %v1781 = vld [vmem:[%s5 + $0x8] sm:$0xff]
      %v1782 = vld [vmem:[%s5 + $0x10] sm:$0xff]
      %v1783 = vld [vmem:[%s5 + $0x18] sm:$0xff]
      %v1784 = vld [vmem:[%s5 + $0x20] sm:$0xff]
      %v1785 = vld [vmem:[%s5 + $0x28] sm:$0xff]
      %v1786 = vld [vmem:[%s5 + $0x30] sm:$0xff]
      %v1787 = vld [vmem:[%s5 + $0x38] sm:$0xff]
      %v1788 = vld [vmem:[%s5 + $0x40] sm:$0xff]
      %v1789 = vld [vmem:[%s5 + $0x48] sm:$0xff]
      %v1790 = vld [vmem:[%s5 + $0x50] sm:$0xff]
      %v1791 = vld [vmem:[%s5 + $0x58] sm:$0xff]
      %v1792 = vld [vmem:[%s5 + $0x60] sm:$0xff]
      %v1793 = vld [vmem:[%s5 + $0x68] sm:$0xff]
      %v1794 = vld [vmem:[%s5 + $0x70] sm:$0xff]
      %v1795 = vld [vmem:[%s5 + $0x78] sm:$0xff]
      %v1796 = vld [vmem:[%s5 + $0x80] sm:$0xff]
      %v1797 = vld [vmem:[%s5 + $0x88] sm:$0xff]
      %v1798 = vld [vmem:[%s5 + $0x90] sm:$0xff]
      %v1799 = vld [vmem:[%s5 + $0x98] sm:$0xff]
      %v1800 = vld [vmem:[%s5 + $0xa0] sm:$0xff]
      %v1801 = vld [vmem:[%s5 + $0xa8] sm:$0xff]
      %v1802 = vld [vmem:[%s5 + $0xb0] sm:$0xff]
      %v1803 = vld [vmem:[%s5 + $0xb8] sm:$0xff]
      %v1804 = vld [vmem:[%s5 + $0xc0] sm:$0xff]
      %v1805 = vld [vmem:[%s5 + $0xc8] sm:$0xff]
      %v1806 = vld [vmem:[%s5 + $0xd0] sm:$0xff]
      %v1807 = vld [vmem:[%s5 + $0xd8] sm:$0xff]
      %v1808 = vld [vmem:[%s5 + $0xe0] sm:$0xff]
      %v1809 = vld [vmem:[%s5 + $0xe8] sm:$0xff]
      %v1810 = vld [vmem:[%s5 + $0xf0] sm:$0xff]
      %v1811 = vld [vmem:[%s5 + $0xf8] sm:$0xff]
      %v1812 = vld [vmem:[%s5 + $0x100] sm:$0xff]
      %v1813 = vld [vmem:[%s5 + $0x108] sm:$0xff]
      %v1814 = vld [vmem:[%s5 + $0x110] sm:$0xff]
      %v1815 = vld [vmem:[%s5 + $0x118] sm:$0xff]
      %v1816 = vld [vmem:[%s5 + $0x120] sm:$0xff]
      %v1817 = vld [vmem:[%s5 + $0x128] sm:$0xff]
      %v1818 = vld [vmem:[%s5 + $0x130] sm:$0xff]
      %v1819 = vld [vmem:[%s5 + $0x138] sm:$0xff]
      %v1820 = vld [vmem:[%s5 + $0x140] sm:$0xff]
      %v1821 = vld [vmem:[%s5 + $0x148] sm:$0xff]
      %v1822 = vld [vmem:[%s5 + $0x150] sm:$0xff]
      %v1823 = vld [vmem:[%s5 + $0x158] sm:$0xff]
      %v1824 = vld [vmem:[%s5 + $0x160] sm:$0xff]
      %v1825 = vld [vmem:[%s5 + $0x168] sm:$0xff]
      %v1826 = vld [vmem:[%s5 + $0x170] sm:$0xff]
      %v1827 = vld [vmem:[%s5 + $0x178] sm:$0xff]
      %v1828 = vld [vmem:[%s5 + $0x180] sm:$0xff]
      %v1829 = vld [vmem:[%s5 + $0x188] sm:$0xff]
      %v1830 = vld [vmem:[%s5 + $0x190] sm:$0xff]
      %v1831 = vld [vmem:[%s5 + $0x198] sm:$0xff]
      %v1832 = vld [vmem:[%s5 + $0x1a0] sm:$0xff]
      %v1833 = vld [vmem:[%s5 + $0x1a8] sm:$0xff]
      %v1834 = vld [vmem:[%s5 + $0x1b0] sm:$0xff]
      %v1835 = vld [vmem:[%s5 + $0x1b8] sm:$0xff]
      %v1836 = vld [vmem:[%s5 + $0x1c0] sm:$0xff]
      %v1837 = vld [vmem:[%s5 + $0x1c8] sm:$0xff]
      %v1838 = vld [vmem:[%s5 + $0x1d0] sm:$0xff]
      %v1839 = vld [vmem:[%s5 + $0x1d8] sm:$0xff]
      %v1840 = vld [vmem:[%s5 + $0x1e0] sm:$0xff]
      %v1841 = vld [vmem:[%s5 + $0x1e8] sm:$0xff]
      %v1842 = vld [vmem:[%s5 + $0x1f0] sm:$0xff]
      %v1843 = vld [vmem:[%s5 + $0x1f8] sm:$0xff]
      %s1844 = scalar_lea.vmem %s5, 512
      %v1845 = vld [vmem:[%s1844] sm:$0xff]
      %v1846 = vld [vmem:[%s1844 + $0x8] sm:$0xff]
      %v1847 = vld [vmem:[%s1844 + $0x10] sm:$0xff]
      %v1848 = vld [vmem:[%s1844 + $0x18] sm:$0xff]
      %v1849 = vld [vmem:[%s1844 + $0x20] sm:$0xff]
      %v1850 = vld [vmem:[%s1844 + $0x28] sm:$0xff]
      %v1851 = vld [vmem:[%s1844 + $0x30] sm:$0xff]
      %v1852 = vld [vmem:[%s1844 + $0x38] sm:$0xff]
      %v1853 = vld [vmem:[%s1844 + $0x40] sm:$0xff]
      %v1854 = vld [vmem:[%s1844 + $0x48] sm:$0xff]
      %v1855 = vld [vmem:[%s1844 + $0x50] sm:$0xff]
      %v1856 = vld [vmem:[%s1844 + $0x58] sm:$0xff]
      %v1857 = vld [vmem:[%s1844 + $0x60] sm:$0xff]
      %v1858 = vld [vmem:[%s1844 + $0x68] sm:$0xff]
      %v1859 = vld [vmem:[%s1844 + $0x70] sm:$0xff]
      %v1860 = vld [vmem:[%s1844 + $0x78] sm:$0xff]
      %v1861 = vld [vmem:[%s1844 + $0x80] sm:$0xff]
      %v1862 = vld [vmem:[%s1844 + $0x88] sm:$0xff]
      %v1863 = vld [vmem:[%s1844 + $0x90] sm:$0xff]
      %v1864 = vld [vmem:[%s1844 + $0x98] sm:$0xff]
      %v1865 = vld [vmem:[%s1844 + $0xa0] sm:$0xff]
      %v1866 = vld [vmem:[%s1844 + $0xa8] sm:$0xff]
      %v1867 = vld [vmem:[%s1844 + $0xb0] sm:$0xff]
      %v1868 = vld [vmem:[%s1844 + $0xb8] sm:$0xff]
      %v1869 = vld [vmem:[%s1844 + $0xc0] sm:$0xff]
      %v1870 = vld [vmem:[%s1844 + $0xc8] sm:$0xff]
      %v1871 = vld [vmem:[%s1844 + $0xd0] sm:$0xff]
      %v1872 = vld [vmem:[%s1844 + $0xd8] sm:$0xff]
      %v1873 = vld [vmem:[%s1844 + $0xe0] sm:$0xff]
      %v1874 = vld [vmem:[%s1844 + $0xe8] sm:$0xff]
      %v1875 = vld [vmem:[%s1844 + $0xf0] sm:$0xff]
      %v1876 = vld [vmem:[%s1844 + $0xf8] sm:$0xff]
      %v1877 = vld [vmem:[%s1844 + $0x100] sm:$0xff]
      %v1878 = vld [vmem:[%s1844 + $0x108] sm:$0xff]
      %v1879 = vld [vmem:[%s1844 + $0x110] sm:$0xff]
      %v1880 = vld [vmem:[%s1844 + $0x118] sm:$0xff]
      %v1881 = vld [vmem:[%s1844 + $0x120] sm:$0xff]
      %v1882 = vld [vmem:[%s1844 + $0x128] sm:$0xff]
      %v1883 = vld [vmem:[%s1844 + $0x130] sm:$0xff]
      %v1884 = vld [vmem:[%s1844 + $0x138] sm:$0xff]
      %v1885 = vld [vmem:[%s1844 + $0x140] sm:$0xff]
      %v1886 = vld [vmem:[%s1844 + $0x148] sm:$0xff]
      %v1887 = vld [vmem:[%s1844 + $0x150] sm:$0xff]
      %v1888 = vld [vmem:[%s1844 + $0x158] sm:$0xff]
      %v1889 = vld [vmem:[%s1844 + $0x160] sm:$0xff]
      %v1890 = vld [vmem:[%s1844 + $0x168] sm:$0xff]
      %v1891 = vld [vmem:[%s1844 + $0x170] sm:$0xff]
      %v1892 = vld [vmem:[%s1844 + $0x178] sm:$0xff]
      %v1893 = vld [vmem:[%s1844 + $0x180] sm:$0xff]
      %v1894 = vld [vmem:[%s1844 + $0x188] sm:$0xff]
      %v1895 = vld [vmem:[%s1844 + $0x190] sm:$0xff]
      %v1896 = vld [vmem:[%s1844 + $0x198] sm:$0xff]
      %v1897 = vld [vmem:[%s1844 + $0x1a0] sm:$0xff]
      %v1898 = vld [vmem:[%s1844 + $0x1a8] sm:$0xff]
      %v1899 = vld [vmem:[%s1844 + $0x1b0] sm:$0xff]
      %v1900 = vld [vmem:[%s1844 + $0x1b8] sm:$0xff]
      %v1901 = vld [vmem:[%s1844 + $0x1c0] sm:$0xff]
      %v1902 = vld [vmem:[%s1844 + $0x1c8] sm:$0xff]
      %v1903 = vld [vmem:[%s1844 + $0x1d0] sm:$0xff]
      %v1904 = vld [vmem:[%s1844 + $0x1d8] sm:$0xff]
      %v1905 = vld [vmem:[%s1844 + $0x1e0] sm:$0xff]
      %v1906 = vld [vmem:[%s1844 + $0x1e8] sm:$0xff]
      %v1907 = vld [vmem:[%s1844 + $0x1f0] sm:$0xff]
      %v1908 = vld [vmem:[%s1844 + $0x1f8] sm:$0xff]
      %v1921 = vrot.slane %v1768, 1
      %v1922 = vrot.slane %v1770, 1
      %v1923 = vsel %vm386, %v1921, %v1922
      %v1924 = vrot.slane %v1769, 1
      %v1925 = vrot.slane %v1771, 1
      %v1926 = vsel %vm386, %v1924, %v1925
      %v1927 = vrot.slane %v1772, 1
      %v1928 = vsel %vm386, %v1922, %v1927
      %v1929 = vrot.slane %v1773, 1
      %v1930 = vsel %vm386, %v1925, %v1929
      %v1931 = vrot.slane %v1774, 1
      %v1932 = vsel %vm386, %v1927, %v1931
      %v1933 = vrot.slane %v1775, 1
      %v1934 = vsel %vm386, %v1929, %v1933
      %v1935 = vrot.slane %v1776, 1
      %v1936 = vsel %vm386, %v1931, %v1935
      %v1937 = vrot.slane %v1777, 1
      %v1938 = vsel %vm386, %v1933, %v1937
      %v1939 = vrot.slane %v1778, 1
      %v1940 = vsel %vm386, %v1935, %v1939
      %v1941 = vrot.slane %v1779, 1
      %v1942 = vsel %vm386, %v1937, %v1941
      %1955 = vmatprep.subr.mxu0 %v1876
      %1956 = vmatpush1.msra.mxu0 %v1875
      %1957 = vmatprep.subr.mxu0 %v1874
      %1958 = vmatpush1.msra.mxu0 %v1873
      %1959 = vmatprep.subr.mxu0 %v1872
      %1960 = vmatpush1.msra.mxu0 %v1871
      %1961 = vmatprep.subr.mxu0 %v1870
      %1962 = vmatpush1.msra.mxu0 %v1869
      %1963 = vmatprep.subr.mxu0 %v1868
      %1964 = vmatpush1.msra.mxu0 %v1867
      %1965 = vmatprep.subr.mxu0 %v1866
      %1966 = vmatpush1.msra.mxu0 %v1865
      %1967 = vmatprep.subr.mxu0 %v1864
      %1968 = vmatpush1.msra.mxu0 %v1863
      %1969 = vmatprep.subr.mxu0 %v1862
      %1970 = vmatpush1.msra.mxu0 %v1861
      %1971 = vmatprep.subr.mxu0 %v1860
      %1972 = vmatpush1.msra.mxu0 %v1859
      %1973 = vmatprep.subr.mxu0 %v1858
      %1974 = vmatpush1.msra.mxu0 %v1857
      %1975 = vmatprep.subr.mxu0 %v1856
      %1976 = vmatpush1.msra.mxu0 %v1855
      %1977 = vmatprep.subr.mxu0 %v1854
      %1978 = vmatpush1.msra.mxu0 %v1853
      %1979 = vmatprep.subr.mxu0 %v1852
      %1980 = vmatpush1.msra.mxu0 %v1851
      %1981 = vmatprep.subr.mxu0 %v1850
      %1982 = vmatpush1.msra.mxu0 %v1849
      %1983 = vmatprep.subr.mxu0 %v1848
      %1984 = vmatpush1.msra.mxu0 %v1847
      %1985 = vmatprep.subr.mxu0 %v1846
      %1986 = vmatpush1.msra.mxu0 %v1845
      %1987 = vmatprep.subr.mxu0 %v1908
      %1988 = vmatpush2.msra.mxu0 %v1907
      %1989 = vmatprep.subr.mxu0 %v1906
      %1990 = vmatpush2.msra.mxu0 %v1905
      %1991 = vmatprep.subr.mxu0 %v1904
      %1992 = vmatpush2.msra.mxu0 %v1903
      %1993 = vmatprep.subr.mxu0 %v1902
      %1994 = vmatpush2.msra.mxu0 %v1901
      %1995 = vmatprep.subr.mxu0 %v1900
      %1996 = vmatpush2.msra.mxu0 %v1899
      %1997 = vmatprep.subr.mxu0 %v1898
      %1998 = vmatpush2.msra.mxu0 %v1897
      %1999 = vmatprep.subr.mxu0 %v1896
      %2000 = vmatpush2.msra.mxu0 %v1895
      %2001 = vmatprep.subr.mxu0 %v1894
      %2002 = vmatpush2.msra.mxu0 %v1893
      %2003 = vmatprep.subr.mxu0 %v1892
      %2004 = vmatpush2.msra.mxu0 %v1891
      %2005 = vmatprep.subr.mxu0 %v1890
      %2006 = vmatpush2.msra.mxu0 %v1889
      %2007 = vmatprep.subr.mxu0 %v1888
      %2008 = vmatpush2.msra.mxu0 %v1887
      %2009 = vmatprep.subr.mxu0 %v1886
      %2010 = vmatpush2.msra.mxu0 %v1885
      %2011 = vmatprep.subr.mxu0 %v1884
      %2012 = vmatpush2.msra.mxu0 %v1883
      %2013 = vmatprep.subr.mxu0 %v1882
      %2014 = vmatpush2.msra.mxu0 %v1881
      %2015 = vmatprep.subr.mxu0 %v1880
      %2016 = vmatpush2.msra.mxu0 %v1879
      %2017 = vmatprep.subr.mxu0 %v1878
      %2018 = vmatpush2.msra.mxu0 %v1877
      %2019 = vmatprep.mubr.f32.mxu0 %v1926
      %2020 = vmatmul.mubr.f32.gmra.mxu0 %v1923
      %v2021 = vpop.f32.mrf.mxu0
      %v2022 = vadd.f32 0.0, %v2021
      %v2023 = vpop.f32.mrf.mxu0
      %v2024 = vadd.f32 0.0, %v2023
      %2025 = vmatprep.mubr.f32.mxu0 %v1930
      %2026 = vmatmul.mubr.f32.gmra.mxu0 %v1928
      %v2027 = vpop.f32.mrf.mxu0
      %v2028 = vadd.f32 0.0, %v2027
      %v2029 = vpop.f32.mrf.mxu0
      %v2030 = vadd.f32 0.0, %v2029
      %2031 = vmatprep.mubr.f32.mxu0 %v1934
      %2032 = vmatmul.mubr.f32.gmra.mxu0 %v1932
      %v2033 = vpop.f32.mrf.mxu0
      %v2034 = vadd.f32 0.0, %v2033
      %v2035 = vpop.f32.mrf.mxu0
      %v2036 = vadd.f32 0.0, %v2035
      %2037 = vmatprep.mubr.f32.mxu0 %v1938
      %2038 = vmatmul.mubr.f32.gmra.mxu0 %v1936
      %v2039 = vpop.f32.mrf.mxu0
      %v2040 = vadd.f32 0.0, %v2039
      %v2041 = vpop.f32.mrf.mxu0
      %v2042 = vadd.f32 0.0, %v2041
      %2043 = vmatprep.mubr.f32.mxu0 %v1942
      %2044 = vmatmul.mubr.f32.gmra.mxu0 %v1940
      %v2045 = vpop.f32.mrf.mxu0
      %v2046 = vadd.f32 0.0, %v2045
      %v2047 = vpop.f32.mrf.mxu0
      %v2048 = vadd.f32 0.0, %v2047
      %2049 = vmatprep.mubr.f32.mxu0 %v1941
      %2050 = vmatmul.mubr.f32.gmra.mxu0 %v1939
      %v2051 = vpop.f32.mrf.mxu0
      %v2052 = vadd.f32 0.0, %v2051
      %v2053 = vpop.f32.mrf.mxu0
      %v2054 = vadd.f32 0.0, %v2053
      %2055 = vdwg.mxu0
      %2056 = vmatprep.subr.mxu0 %v1811
      %2057 = vmatpush1.msra.mxu0 %v1810
      %2058 = vmatprep.subr.mxu0 %v1809
      %2059 = vmatpush1.msra.mxu0 %v1808
      %2060 = vmatprep.subr.mxu0 %v1807
      %2061 = vmatpush1.msra.mxu0 %v1806
      %2062 = vmatprep.subr.mxu0 %v1805
      %2063 = vmatpush1.msra.mxu0 %v1804
      %2064 = vmatprep.subr.mxu0 %v1803
      %2065 = vmatpush1.msra.mxu0 %v1802
      %2066 = vmatprep.subr.mxu0 %v1801
      %2067 = vmatpush1.msra.mxu0 %v1800
      %2068 = vmatprep.subr.mxu0 %v1799
      %2069 = vmatpush1.msra.mxu0 %v1798
      %2070 = vmatprep.subr.mxu0 %v1797
      %2071 = vmatpush1.msra.mxu0 %v1796
      %2072 = vmatprep.subr.mxu0 %v1795
      %2073 = vmatpush1.msra.mxu0 %v1794
      %2074 = vmatprep.subr.mxu0 %v1793
      %2075 = vmatpush1.msra.mxu0 %v1792
      %2076 = vmatprep.subr.mxu0 %v1791
      %2077 = vmatpush1.msra.mxu0 %v1790
      %2078 = vmatprep.subr.mxu0 %v1789
      %2079 = vmatpush1.msra.mxu0 %v1788
      %2080 = vmatprep.subr.mxu0 %v1787
      %2081 = vmatpush1.msra.mxu0 %v1786
      %2082 = vmatprep.subr.mxu0 %v1785
      %2083 = vmatpush1.msra.mxu0 %v1784
      %2084 = vmatprep.subr.mxu0 %v1783
      %2085 = vmatpush1.msra.mxu0 %v1782
      %2086 = vmatprep.subr.mxu0 %v1781
      %2087 = vmatpush1.msra.mxu0 %v1780
      %2088 = vmatprep.subr.mxu0 %v1843
      %2089 = vmatpush2.msra.mxu0 %v1842
      %2090 = vmatprep.subr.mxu0 %v1841
      %2091 = vmatpush2.msra.mxu0 %v1840
      %2092 = vmatprep.subr.mxu0 %v1839
      %2093 = vmatpush2.msra.mxu0 %v1838
      %2094 = vmatprep.subr.mxu0 %v1837
      %2095 = vmatpush2.msra.mxu0 %v1836
      %2096 = vmatprep.subr.mxu0 %v1835
      %2097 = vmatpush2.msra.mxu0 %v1834
      %2098 = vmatprep.subr.mxu0 %v1833
      %2099 = vmatpush2.msra.mxu0 %v1832
      %2100 = vmatprep.subr.mxu0 %v1831
      %2101 = vmatpush2.msra.mxu0 %v1830
      %2102 = vmatprep.subr.mxu0 %v1829
      %2103 = vmatpush2.msra.mxu0 %v1828
      %2104 = vmatprep.subr.mxu0 %v1827
      %2105 = vmatpush2.msra.mxu0 %v1826
      %2106 = vmatprep.subr.mxu0 %v1825
      %2107 = vmatpush2.msra.mxu0 %v1824
      %2108 = vmatprep.subr.mxu0 %v1823
      %2109 = vmatpush2.msra.mxu0 %v1822
      %2110 = vmatprep.subr.mxu0 %v1821
      %2111 = vmatpush2.msra.mxu0 %v1820
      %2112 = vmatprep.subr.mxu0 %v1819
      %2113 = vmatpush2.msra.mxu0 %v1818
      %2114 = vmatprep.subr.mxu0 %v1817
      %2115 = vmatpush2.msra.mxu0 %v1816
      %2116 = vmatprep.subr.mxu0 %v1815
      %2117 = vmatpush2.msra.mxu0 %v1814
      %2118 = vmatprep.subr.mxu0 %v1813
      %2119 = vmatpush2.msra.mxu0 %v1812
      %2120 = vmatprep.mubr.f32.mxu0 %v1769
      %2121 = vmatmul.mubr.f32.gmra.mxu0 %v1768
      %v2122 = vpop.f32.mrf.mxu0
      %v2123 = vadd.f32 %v2022, %v2122
      %v2124 = vpop.f32.mrf.mxu0
      %v2125 = vadd.f32 %v2024, %v2124
      %2126 = vmatprep.mubr.f32.mxu0 %v1771
      %2127 = vmatmul.mubr.f32.gmra.mxu0 %v1770
      %v2128 = vpop.f32.mrf.mxu0
      %v2129 = vadd.f32 %v2028, %v2128
      %v2130 = vpop.f32.mrf.mxu0
      %v2131 = vadd.f32 %v2030, %v2130
      %2132 = vmatprep.mubr.f32.mxu0 %v1773
      %2133 = vmatmul.mubr.f32.gmra.mxu0 %v1772
      %v2134 = vpop.f32.mrf.mxu0
      %v2135 = vadd.f32 %v2034, %v2134
      %v2136 = vpop.f32.mrf.mxu0
      %v2137 = vadd.f32 %v2036, %v2136
      %2138 = vmatprep.mubr.f32.mxu0 %v1775
      %2139 = vmatmul.mubr.f32.gmra.mxu0 %v1774
      %v2140 = vpop.f32.mrf.mxu0
      %v2141 = vadd.f32 %v2040, %v2140
      %v2142 = vpop.f32.mrf.mxu0
      %v2143 = vadd.f32 %v2042, %v2142
      %2144 = vmatprep.mubr.f32.mxu0 %v1777
      %2145 = vmatmul.mubr.f32.gmra.mxu0 %v1776
      %v2146 = vpop.f32.mrf.mxu0
      %v2147 = vadd.f32 %v2046, %v2146
      %v2148 = vpop.f32.mrf.mxu0
      %v2149 = vadd.f32 %v2048, %v2148
      %2150 = vmatprep.mubr.f32.mxu0 %v1779
      %2151 = vmatmul.mubr.f32.gmra.mxu0 %v1778
      %v2152 = vpop.f32.mrf.mxu0
      %v2153 = vadd.f32 %v2052, %v2152
      %v2154 = vpop.f32.mrf.mxu0
      %v2155 = vadd.f32 %v2054, %v2154
      %2156 = vdwg.mxu0
      %s2157 = scalar_lea.vmem %s5, 1024
      %v2158 = vld [vmem:[%s2157] sm:$0xff]
      %v2159 = vld [vmem:[%s2157 + $0x8] sm:$0xff]
      %v2160 = vld [vmem:[%s2157 + $0x10] sm:$0xff]
      %v2161 = vld [vmem:[%s2157 + $0x18] sm:$0xff]
      %v2162 = vld [vmem:[%s2157 + $0x20] sm:$0xff]
      %v2163 = vld [vmem:[%s2157 + $0x28] sm:$0xff]
      %v2164 = vld [vmem:[%s2157 + $0x30] sm:$0xff]
      %v2165 = vld [vmem:[%s2157 + $0x38] sm:$0xff]
      %v2166 = vld [vmem:[%s2157 + $0x40] sm:$0xff]
      %v2167 = vld [vmem:[%s2157 + $0x48] sm:$0xff]
      %v2168 = vld [vmem:[%s2157 + $0x50] sm:$0xff]
      %v2169 = vld [vmem:[%s2157 + $0x58] sm:$0xff]
      %v2170 = vld [vmem:[%s2157 + $0x60] sm:$0xff]
      %v2171 = vld [vmem:[%s2157 + $0x68] sm:$0xff]
      %v2172 = vld [vmem:[%s2157 + $0x70] sm:$0xff]
      %v2173 = vld [vmem:[%s2157 + $0x78] sm:$0xff]
      %v2174 = vld [vmem:[%s2157 + $0x80] sm:$0xff]
      %v2175 = vld [vmem:[%s2157 + $0x88] sm:$0xff]
      %v2176 = vld [vmem:[%s2157 + $0x90] sm:$0xff]
      %v2177 = vld [vmem:[%s2157 + $0x98] sm:$0xff]
      %v2178 = vld [vmem:[%s2157 + $0xa0] sm:$0xff]
      %v2179 = vld [vmem:[%s2157 + $0xa8] sm:$0xff]
      %v2180 = vld [vmem:[%s2157 + $0xb0] sm:$0xff]
      %v2181 = vld [vmem:[%s2157 + $0xb8] sm:$0xff]
      %v2182 = vld [vmem:[%s2157 + $0xc0] sm:$0xff]
      %v2183 = vld [vmem:[%s2157 + $0xc8] sm:$0xff]
      %v2184 = vld [vmem:[%s2157 + $0xd0] sm:$0xff]
      %v2185 = vld [vmem:[%s2157 + $0xd8] sm:$0xff]
      %v2186 = vld [vmem:[%s2157 + $0xe0] sm:$0xff]
      %v2187 = vld [vmem:[%s2157 + $0xe8] sm:$0xff]
      %v2188 = vld [vmem:[%s2157 + $0xf0] sm:$0xff]
      %v2189 = vld [vmem:[%s2157 + $0xf8] sm:$0xff]
      %v2190 = vld [vmem:[%s2157 + $0x100] sm:$0xff]
      %v2191 = vld [vmem:[%s2157 + $0x108] sm:$0xff]
      %v2192 = vld [vmem:[%s2157 + $0x110] sm:$0xff]
      %v2193 = vld [vmem:[%s2157 + $0x118] sm:$0xff]
      %v2194 = vld [vmem:[%s2157 + $0x120] sm:$0xff]
      %v2195 = vld [vmem:[%s2157 + $0x128] sm:$0xff]
      %v2196 = vld [vmem:[%s2157 + $0x130] sm:$0xff]
      %v2197 = vld [vmem:[%s2157 + $0x138] sm:$0xff]
      %v2198 = vld [vmem:[%s2157 + $0x140] sm:$0xff]
      %v2199 = vld [vmem:[%s2157 + $0x148] sm:$0xff]
      %v2200 = vld [vmem:[%s2157 + $0x150] sm:$0xff]
      %v2201 = vld [vmem:[%s2157 + $0x158] sm:$0xff]
      %v2202 = vld [vmem:[%s2157 + $0x160] sm:$0xff]
      %v2203 = vld [vmem:[%s2157 + $0x168] sm:$0xff]
      %v2204 = vld [vmem:[%s2157 + $0x170] sm:$0xff]
      %v2205 = vld [vmem:[%s2157 + $0x178] sm:$0xff]
      %v2206 = vld [vmem:[%s2157 + $0x180] sm:$0xff]
      %v2207 = vld [vmem:[%s2157 + $0x188] sm:$0xff]
      %v2208 = vld [vmem:[%s2157 + $0x190] sm:$0xff]
      %v2209 = vld [vmem:[%s2157 + $0x198] sm:$0xff]
      %v2210 = vld [vmem:[%s2157 + $0x1a0] sm:$0xff]
      %v2211 = vld [vmem:[%s2157 + $0x1a8] sm:$0xff]
      %v2212 = vld [vmem:[%s2157 + $0x1b0] sm:$0xff]
      %v2213 = vld [vmem:[%s2157 + $0x1b8] sm:$0xff]
      %v2214 = vld [vmem:[%s2157 + $0x1c0] sm:$0xff]
      %v2215 = vld [vmem:[%s2157 + $0x1c8] sm:$0xff]
      %v2216 = vld [vmem:[%s2157 + $0x1d0] sm:$0xff]
      %v2217 = vld [vmem:[%s2157 + $0x1d8] sm:$0xff]
      %v2218 = vld [vmem:[%s2157 + $0x1e0] sm:$0xff]
      %v2219 = vld [vmem:[%s2157 + $0x1e8] sm:$0xff]
      %v2220 = vld [vmem:[%s2157 + $0x1f0] sm:$0xff]
      %v2221 = vld [vmem:[%s2157 + $0x1f8] sm:$0xff]
      %v2222 = vrot.slane %v1768, 2
      %v2223 = vrot.slane %v1770, 2
      %v2224 = vsel %vm422, %v2222, %v2223
      %v2225 = vrot.slane %v1769, 2
      %v2226 = vrot.slane %v1771, 2
      %v2227 = vsel %vm422, %v2225, %v2226
      %v2228 = vrot.slane %v1772, 2
      %v2229 = vsel %vm422, %v2223, %v2228
      %v2230 = vrot.slane %v1773, 2
      %v2231 = vsel %vm422, %v2226, %v2230
      %v2232 = vrot.slane %v1774, 2
      %v2233 = vsel %vm422, %v2228, %v2232
      %v2234 = vrot.slane %v1775, 2
      %v2235 = vsel %vm422, %v2230, %v2234
      %v2236 = vrot.slane %v1776, 2
      %v2237 = vsel %vm422, %v2232, %v2236
      %v2238 = vrot.slane %v1777, 2
      %v2239 = vsel %vm422, %v2234, %v2238
      %v2240 = vrot.slane %v1778, 2
      %v2241 = vsel %vm422, %v2236, %v2240
      %v2242 = vrot.slane %v1779, 2
      %v2243 = vsel %vm422, %v2238, %v2242
      %2256 = vmatprep.subr.mxu0 %v2189
      %2257 = vmatpush1.msra.mxu0 %v2188
      %2258 = vmatprep.subr.mxu0 %v2187
      %2259 = vmatpush1.msra.mxu0 %v2186
      %2260 = vmatprep.subr.mxu0 %v2185
      %2261 = vmatpush1.msra.mxu0 %v2184
      %2262 = vmatprep.subr.mxu0 %v2183
      %2263 = vmatpush1.msra.mxu0 %v2182
      %2264 = vmatprep.subr.mxu0 %v2181
      %2265 = vmatpush1.msra.mxu0 %v2180
      %2266 = vmatprep.subr.mxu0 %v2179
      %2267 = vmatpush1.msra.mxu0 %v2178
      %2268 = vmatprep.subr.mxu0 %v2177
      %2269 = vmatpush1.msra.mxu0 %v2176
      %2270 = vmatprep.subr.mxu0 %v2175
      %2271 = vmatpush1.msra.mxu0 %v2174
      %2272 = vmatprep.subr.mxu0 %v2173
      %2273 = vmatpush1.msra.mxu0 %v2172
      %2274 = vmatprep.subr.mxu0 %v2171
      %2275 = vmatpush1.msra.mxu0 %v2170
      %2276 = vmatprep.subr.mxu0 %v2169
      %2277 = vmatpush1.msra.mxu0 %v2168
      %2278 = vmatprep.subr.mxu0 %v2167
      %2279 = vmatpush1.msra.mxu0 %v2166
      %2280 = vmatprep.subr.mxu0 %v2165
      %2281 = vmatpush1.msra.mxu0 %v2164
      %2282 = vmatprep.subr.mxu0 %v2163
      %2283 = vmatpush1.msra.mxu0 %v2162
      %2284 = vmatprep.subr.mxu0 %v2161
      %2285 = vmatpush1.msra.mxu0 %v2160
      %2286 = vmatprep.subr.mxu0 %v2159
      %2287 = vmatpush1.msra.mxu0 %v2158
      %2288 = vmatprep.subr.mxu0 %v2221
      %2289 = vmatpush2.msra.mxu0 %v2220
      %2290 = vmatprep.subr.mxu0 %v2219
      %2291 = vmatpush2.msra.mxu0 %v2218
      %2292 = vmatprep.subr.mxu0 %v2217
      %2293 = vmatpush2.msra.mxu0 %v2216
      %2294 = vmatprep.subr.mxu0 %v2215
      %2295 = vmatpush2.msra.mxu0 %v2214
      %2296 = vmatprep.subr.mxu0 %v2213
      %2297 = vmatpush2.msra.mxu0 %v2212
      %2298 = vmatprep.subr.mxu0 %v2211
      %2299 = vmatpush2.msra.mxu0 %v2210
      %2300 = vmatprep.subr.mxu0 %v2209
      %2301 = vmatpush2.msra.mxu0 %v2208
      %2302 = vmatprep.subr.mxu0 %v2207
      %2303 = vmatpush2.msra.mxu0 %v2206
      %2304 = vmatprep.subr.mxu0 %v2205
      %2305 = vmatpush2.msra.mxu0 %v2204
      %2306 = vmatprep.subr.mxu0 %v2203
      %2307 = vmatpush2.msra.mxu0 %v2202
      %2308 = vmatprep.subr.mxu0 %v2201
      %2309 = vmatpush2.msra.mxu0 %v2200
      %2310 = vmatprep.subr.mxu0 %v2199
      %2311 = vmatpush2.msra.mxu0 %v2198
      %2312 = vmatprep.subr.mxu0 %v2197
      %2313 = vmatpush2.msra.mxu0 %v2196
      %2314 = vmatprep.subr.mxu0 %v2195
      %2315 = vmatpush2.msra.mxu0 %v2194
      %2316 = vmatprep.subr.mxu0 %v2193
      %2317 = vmatpush2.msra.mxu0 %v2192
      %2318 = vmatprep.subr.mxu0 %v2191
      %2319 = vmatpush2.msra.mxu0 %v2190
      %2320 = vmatprep.mubr.f32.mxu0 %v2227
      %2321 = vmatmul.mubr.f32.gmra.mxu0 %v2224
      %v2322 = vpop.f32.mrf.mxu0
      %v2323 = vadd.f32 0.0, %v2322
      %v2324 = vpop.f32.mrf.mxu0
      %v2325 = vadd.f32 0.0, %v2324
      %2326 = vmatprep.mubr.f32.mxu0 %v2231
      %2327 = vmatmul.mubr.f32.gmra.mxu0 %v2229
      %v2328 = vpop.f32.mrf.mxu0
      %v2329 = vadd.f32 0.0, %v2328
      %v2330 = vpop.f32.mrf.mxu0
      %v2331 = vadd.f32 0.0, %v2330
      %2332 = vmatprep.mubr.f32.mxu0 %v2235
      %2333 = vmatmul.mubr.f32.gmra.mxu0 %v2233
      %v2334 = vpop.f32.mrf.mxu0
      %v2335 = vadd.f32 0.0, %v2334
      %v2336 = vpop.f32.mrf.mxu0
      %v2337 = vadd.f32 0.0, %v2336
      %2338 = vmatprep.mubr.f32.mxu0 %v2239
      %2339 = vmatmul.mubr.f32.gmra.mxu0 %v2237
      %v2340 = vpop.f32.mrf.mxu0
      %v2341 = vadd.f32 0.0, %v2340
      %v2342 = vpop.f32.mrf.mxu0
      %v2343 = vadd.f32 0.0, %v2342
      %2344 = vmatprep.mubr.f32.mxu0 %v2243
      %2345 = vmatmul.mubr.f32.gmra.mxu0 %v2241
      %v2346 = vpop.f32.mrf.mxu0
      %v2347 = vadd.f32 0.0, %v2346
      %v2348 = vpop.f32.mrf.mxu0
      %v2349 = vadd.f32 0.0, %v2348
      %2350 = vmatprep.mubr.f32.mxu0 %v2242
      %2351 = vmatmul.mubr.f32.gmra.mxu0 %v2240
      %v2352 = vpop.f32.mrf.mxu0
      %v2353 = vadd.f32 0.0, %v2352
      %v2354 = vpop.f32.mrf.mxu0
      %v2355 = vadd.f32 0.0, %v2354
      %2356 = vdwg.mxu0
      %v2357 = vadd.f32 %v2123, %v2323
      %v2358 = vadd.f32 %v2125, %v2325
      %v2359 = vadd.f32 %v2129, %v2329
      %v2360 = vadd.f32 %v2131, %v2331
      %v2361 = vadd.f32 %v2135, %v2335
      %v2362 = vadd.f32 %v2137, %v2337
      %v2363 = vadd.f32 %v2141, %v2341
      %v2364 = vadd.f32 %v2143, %v2343
      %v2365 = vadd.f32 %v2147, %v2347
      %v2366 = vadd.f32 %v2149, %v2349
      %v2367 = vadd.f32 %v2153, %v2353
      %v2368 = vadd.f32 %v2155, %v2355
      %v2369 = vld [vmem:[%s6] sm:$0x3]
      %v2371 = vlaneseq
      %v2372 = vshrl.u32 %v2371, 7
      %v2373 = vsub.s32 0, %v2372
      %v2374 = vrot.slane %v2369, %v2373
      %v2375 = vlaneseq
      %v2376 = vshrl.u32 %v2375, 7
      %v2377 = vsub.s32 1, %v2376
      %v2378 = vrot.slane %v2369, %v2377
      %v2381 = vadd.f32 %v2357, %v2374
      %v2382 = vadd.f32 %v2358, %v2378
      %v2383 = vadd.f32 %v2359, %v2374
      %v2384 = vadd.f32 %v2360, %v2378
      %v2385 = vadd.f32 %v2361, %v2374
      %v2386 = vadd.f32 %v2362, %v2378
      %v2387 = vadd.f32 %v2363, %v2374
      %v2388 = vadd.f32 %v2364, %v2378
      %v2389 = vadd.f32 %v2365, %v2374
      %v2390 = vadd.f32 %v2366, %v2378
      %v2391 = vadd.f32 %v2367, %v2374
      %v2392 = vadd.f32 %v2368, %v2378
      %vm2393 = vcmp.gt.f32.partialorder %v2381, 0.0
      %vm2394 = vcmp.gt.f32.partialorder %v2382, 0.0
      %vm2395 = vcmp.gt.f32.partialorder %v2383, 0.0
      %vm2396 = vcmp.gt.f32.partialorder %v2384, 0.0
      %vm2397 = vcmp.gt.f32.partialorder %v2385, 0.0
      %vm2398 = vcmp.gt.f32.partialorder %v2386, 0.0
      %vm2399 = vcmp.gt.f32.partialorder %v2387, 0.0
      %vm2400 = vcmp.gt.f32.partialorder %v2388, 0.0
      %vm2401 = vcmp.gt.f32.partialorder %v2389, 0.0
      %vm2402 = vcmp.gt.f32.partialorder %v2390, 0.0
      %vm2403 = vcmp.gt.f32.partialorder %v2391, 0.0
      %vm2404 = vcmp.gt.f32.partialorder %v2392, 0.0
      %v2405 = vmul.f32 %v2381, 0.2
      %v2406 = vmul.f32 %v2382, 0.2
      %v2407 = vmul.f32 %v2383, 0.2
      %v2408 = vmul.f32 %v2384, 0.2
      %v2409 = vmul.f32 %v2385, 0.2
      %v2410 = vmul.f32 %v2386, 0.2
      %v2411 = vmul.f32 %v2387, 0.2
      %v2412 = vmul.f32 %v2388, 0.2
      %v2413 = vmul.f32 %v2389, 0.2
      %v2414 = vmul.f32 %v2390, 0.2
      %v2415 = vmul.f32 %v2391, 0.2
      %v2416 = vmul.f32 %v2392, 0.2
      %v2417 = vsel %vm2393, %v2381, %v2405
      %v2418 = vsel %vm2394, %v2382, %v2406
      %v2419 = vsel %vm2395, %v2383, %v2407
      %v2420 = vsel %vm2396, %v2384, %v2408
      %v2421 = vsel %vm2397, %v2385, %v2409
      %v2422 = vsel %vm2398, %v2386, %v2410
      %v2423 = vsel %vm2399, %v2387, %v2411
      %v2424 = vsel %vm2400, %v2388, %v2412
      %v2425 = vsel %vm2401, %v2389, %v2413
      %v2426 = vsel %vm2402, %v2390, %v2414
      %v2427 = vsel %vm2403, %v2391, %v2415
      %v2428 = vsel %vm2404, %v2392, %v2416
      %v2429 = vadd.s32 %v466, 48
      %v2430 = vadd.s32 %v466, 56
      %v2431 = vadd.s32 %v466, 64
      %v2432 = vadd.s32 %v466, 72
      %v2433 = vadd.s32 %v466, 80
      %v2434 = vadd.s32 %v466, 88
      %vm2435 = vcmp.eq.s32.totalorder %v2429, %v472
      %vm2436 = vcmp.eq.s32.totalorder %v2430, %v472
      %vm2437 = vcmp.eq.s32.totalorder %v2431, %v472
      %vm2438 = vcmp.eq.s32.totalorder %v2432, %v472
      %vm2439 = vcmp.eq.s32.totalorder %v2433, %v472
      %vm2440 = vcmp.eq.s32.totalorder %v2434, %v472
      %v2441 = vsel %vm2435, 1, 0
      %v2442 = vsel %vm2436, 1, 0
      %v2443 = vsel %vm2437, 1, 0
      %v2444 = vsel %vm2438, 1, 0
      %v2445 = vsel %vm2439, 1, 0
      %v2446 = vsel %vm2440, 1, 0
      %v2447 = vcvt.s32.f32 %v2441
      %v2448 = vcvt.s32.f32 %v2442
      %v2449 = vcvt.s32.f32 %v2443
      %v2450 = vcvt.s32.f32 %v2444
      %v2451 = vcvt.s32.f32 %v2445
      %v2452 = vcvt.s32.f32 %v2446
      %vm2453 = vcmp.eq.s32.totalorder %v2429, %v482
      %vm2454 = vcmp.eq.s32.totalorder %v2430, %v482
      %vm2455 = vcmp.eq.s32.totalorder %v2431, %v482
      %vm2456 = vcmp.eq.s32.totalorder %v2432, %v482
      %vm2457 = vcmp.eq.s32.totalorder %v2433, %v482
      %vm2458 = vcmp.eq.s32.totalorder %v2434, %v482
      %v2459 = vsel %vm2453, 1, 0
      %v2460 = vsel %vm2454, 1, 0
      %v2461 = vsel %vm2455, 1, 0
      %v2462 = vsel %vm2456, 1, 0
      %v2463 = vsel %vm2457, 1, 0
      %v2464 = vsel %vm2458, 1, 0
      %v2465 = vcvt.s32.f32 %v2459
      %v2466 = vcvt.s32.f32 %v2460
      %v2467 = vcvt.s32.f32 %v2461
      %v2468 = vcvt.s32.f32 %v2462
      %v2469 = vcvt.s32.f32 %v2463
      %v2470 = vcvt.s32.f32 %v2464
      %vm2471 = vcmask 351232
      %v2472 = vsel %vm2471, %v489, 0
      %v2474 = vsel %vm2471, %v490, 0
      %v2476 = vsel %vm2471, %v491, 0
      %v2478 = vsel %vm2471, %v1501, 0
      %v2480 = vsel %vm2471, %v1502, 0
      %v2482 = vsel %vm2471, %v1503, 0
      %v2485 = vsel %vm2471, %v2465, 0
      %v2488 = vsel %vm2471, %v2466, 0
      %v2491 = vsel %vm2471, %v2467, 0
      %v2494 = vsel %vm2471, %v2468, 0
      %v2497 = vsel %vm2471, %v2469, 0
      %v2500 = vsel %vm2471, %v2470, 0
      %vm2502 = vcmask 1042432
      %v2504 = vsel %vm2502, %v2428, 0
      %2506 = vmatprep.subr.mxu0 0.0
      %2507 = vmatpush1.msra.mxu0 0.0
      %2508 = vmatprep.subr.mxu0 0.0
      %2509 = vmatpush1.msra.mxu0 0.0
      %2510 = vmatprep.subr.mxu0 0.0
      %2511 = vmatpush1.msra.mxu0 0.0
      %2512 = vmatprep.subr.mxu0 0.0
      %2513 = vmatpush1.msra.mxu0 0.0
      %2514 = vmatprep.subr.mxu0 0.0
      %2515 = vmatpush1.msra.mxu0 0.0
      %2516 = vmatprep.subr.mxu0 0.0
      %2517 = vmatpush1.msra.mxu0 0.0
      %2518 = vmatprep.subr.mxu0 0.0
      %2519 = vmatpush1.msra.mxu0 0.0
      %2520 = vmatprep.subr.mxu0 0.0
      %2521 = vmatpush1.msra.mxu0 0.0
      %2522 = vmatprep.subr.mxu0 0.0
      %2523 = vmatpush1.msra.mxu0 0.0
      %2524 = vmatprep.subr.mxu0 0.0
      %2525 = vmatpush1.msra.mxu0 0.0
      %2526 = vmatprep.subr.mxu0 0.0
      %2527 = vmatpush1.msra.mxu0 %v2504
      %2528 = vmatprep.subr.mxu0 0.0
      %2529 = vmatpush1.msra.mxu0 %v2426
      %2530 = vmatprep.subr.mxu0 0.0
      %2531 = vmatpush1.msra.mxu0 %v2424
      %2532 = vmatprep.subr.mxu0 0.0
      %2533 = vmatpush1.msra.mxu0 %v2422
      %2534 = vmatprep.subr.mxu0 0.0
      %2535 = vmatpush1.msra.mxu0 %v2420
      %2536 = vmatprep.subr.mxu0 0.0
      %2537 = vmatpush1.msra.mxu0 %v2418
      %2538 = vmatprep.subr.mxu0 0.0
      %2539 = vmatpush2.msra.mxu0 0.0
      %2540 = vmatprep.subr.mxu0 0.0
      %2541 = vmatpush2.msra.mxu0 0.0
      %2542 = vmatprep.subr.mxu0 0.0
      %2543 = vmatpush2.msra.mxu0 0.0
      %2544 = vmatprep.subr.mxu0 0.0
      %2545 = vmatpush2.msra.mxu0 0.0
      %2546 = vmatprep.subr.mxu0 0.0
      %2547 = vmatpush2.msra.mxu0 0.0
      %2548 = vmatprep.subr.mxu0 0.0
      %2549 = vmatpush2.msra.mxu0 0.0
      %2550 = vmatprep.subr.mxu0 0.0
      %2551 = vmatpush2.msra.mxu0 0.0
      %2552 = vmatprep.subr.mxu0 0.0
      %2553 = vmatpush2.msra.mxu0 0.0
      %2554 = vmatprep.subr.mxu0 0.0
      %2555 = vmatpush2.msra.mxu0 0.0
      %2556 = vmatprep.subr.mxu0 0.0
      %2557 = vmatpush2.msra.mxu0 0.0
      %2558 = vmatprep.subr.mxu0 0.0
      %2559 = vmatpush2.msra.mxu0 0.0
      %2560 = vmatprep.subr.mxu0 0.0
      %2561 = vmatpush2.msra.mxu0 0.0
      %2562 = vmatprep.subr.mxu0 0.0
      %2563 = vmatpush2.msra.mxu0 0.0
      %2564 = vmatprep.subr.mxu0 0.0
      %2565 = vmatpush2.msra.mxu0 0.0
      %2566 = vmatprep.subr.mxu0 0.0
      %2567 = vmatpush2.msra.mxu0 0.0
      %2568 = vmatprep.subr.mxu0 0.0
      %2569 = vmatpush2.msra.mxu0 0.0
      %2570 = vmatprep.mubr.f32.mxu0 0.0
      %2571 = vmatmul.mubr.f32.gmra.mxu0 %v2472
      %v2572 = vpop.f32.mrf.mxu0
      %v2573 = vadd.f32 0.0, %v2572
      %v2574 = vpop.f32.mrf.mxu0
      %2575 = vmatprep.mubr.f32.mxu0 0.0
      %2576 = vmatmul.mubr.f32.gmra.mxu0 %v2474
      %v2577 = vpop.f32.mrf.mxu0
      %v2578 = vadd.f32 0.0, %v2577
      %v2579 = vpop.f32.mrf.mxu0
      %2580 = vmatprep.mubr.f32.mxu0 0.0
      %2581 = vmatmul.mubr.f32.gmra.mxu0 %v2476
      %v2582 = vpop.f32.mrf.mxu0
      %v2583 = vadd.f32 0.0, %v2582
      %v2584 = vpop.f32.mrf.mxu0
      %2585 = vmatprep.mubr.f32.mxu0 0.0
      %2586 = vmatmul.mubr.f32.gmra.mxu0 %v2478
      %v2587 = vpop.f32.mrf.mxu0
      %v2588 = vadd.f32 0.0, %v2587
      %v2589 = vpop.f32.mrf.mxu0
      %2590 = vmatprep.mubr.f32.mxu0 0.0
      %2591 = vmatmul.mubr.f32.gmra.mxu0 %v2480
      %v2592 = vpop.f32.mrf.mxu0
      %v2593 = vadd.f32 0.0, %v2592
      %v2594 = vpop.f32.mrf.mxu0
      %2595 = vmatprep.mubr.f32.mxu0 0.0
      %2596 = vmatmul.mubr.f32.gmra.mxu0 %v2482
      %v2597 = vpop.f32.mrf.mxu0
      %v2598 = vadd.f32 0.0, %v2597
      %v2599 = vpop.f32.mrf.mxu0
      %2600 = vmatprep.mubr.f32.mxu0 0.0
      %2601 = vmatmul.mubr.f32.gmra.mxu0 %v2485
      %v2602 = vpop.f32.mrf.mxu0
      %v2603 = vadd.f32 0.0, %v2602
      %v2604 = vpop.f32.mrf.mxu0
      %2605 = vmatprep.mubr.f32.mxu0 0.0
      %2606 = vmatmul.mubr.f32.gmra.mxu0 %v2488
      %v2607 = vpop.f32.mrf.mxu0
      %v2608 = vadd.f32 0.0, %v2607
      %v2609 = vpop.f32.mrf.mxu0
      %2610 = vmatprep.mubr.f32.mxu0 0.0
      %2611 = vmatmul.mubr.f32.gmra.mxu0 %v2491
      %v2612 = vpop.f32.mrf.mxu0
      %v2613 = vadd.f32 0.0, %v2612
      %v2614 = vpop.f32.mrf.mxu0
      %2615 = vmatprep.mubr.f32.mxu0 0.0
      %2616 = vmatmul.mubr.f32.gmra.mxu0 %v2494
      %v2617 = vpop.f32.mrf.mxu0
      %v2618 = vadd.f32 0.0, %v2617
      %v2619 = vpop.f32.mrf.mxu0
      %2620 = vmatprep.mubr.f32.mxu0 0.0
      %2621 = vmatmul.mubr.f32.gmra.mxu0 %v2497
      %v2622 = vpop.f32.mrf.mxu0
      %v2623 = vadd.f32 0.0, %v2622
      %v2624 = vpop.f32.mrf.mxu0
      %2625 = vmatprep.mubr.f32.mxu0 0.0
      %2626 = vmatmul.mubr.f32.gmra.mxu0 %v2500
      %v2627 = vpop.f32.mrf.mxu0
      %v2628 = vadd.f32 0.0, %v2627
      %v2629 = vpop.f32.mrf.mxu0
      %2630 = vdwg.mxu0
      %v2631 = vsel %vm2471, %v479, 0
      %v2633 = vsel %vm2471, %v480, 0
      %v2635 = vsel %vm2471, %v481, 0
      %v2637 = vsel %vm2471, %v1492, 0
      %v2639 = vsel %vm2471, %v1493, 0
      %v2641 = vsel %vm2471, %v1494, 0
      %v2644 = vsel %vm2471, %v2447, 0
      %v2647 = vsel %vm2471, %v2448, 0
      %v2650 = vsel %vm2471, %v2449, 0
      %v2653 = vsel %vm2471, %v2450, 0
      %v2656 = vsel %vm2471, %v2451, 0
      %v2659 = vsel %vm2471, %v2452, 0
      %v2662 = vsel %vm2502, %v2427, 0
      %2664 = vmatprep.subr.mxu0 0.0
      %2665 = vmatpush1.msra.mxu0 0.0
      %2666 = vmatprep.subr.mxu0 0.0
      %2667 = vmatpush1.msra.mxu0 0.0
      %2668 = vmatprep.subr.mxu0 0.0
      %2669 = vmatpush1.msra.mxu0 0.0
      %2670 = vmatprep.subr.mxu0 0.0
      %2671 = vmatpush1.msra.mxu0 0.0
      %2672 = vmatprep.subr.mxu0 0.0
      %2673 = vmatpush1.msra.mxu0 0.0
      %2674 = vmatprep.subr.mxu0 0.0
      %2675 = vmatpush1.msra.mxu0 0.0
      %2676 = vmatprep.subr.mxu0 0.0
      %2677 = vmatpush1.msra.mxu0 0.0
      %2678 = vmatprep.subr.mxu0 0.0
      %2679 = vmatpush1.msra.mxu0 0.0
      %2680 = vmatprep.subr.mxu0 0.0
      %2681 = vmatpush1.msra.mxu0 0.0
      %2682 = vmatprep.subr.mxu0 0.0
      %2683 = vmatpush1.msra.mxu0 0.0
      %2684 = vmatprep.subr.mxu0 0.0
      %2685 = vmatpush1.msra.mxu0 %v2662
      %2686 = vmatprep.subr.mxu0 0.0
      %2687 = vmatpush1.msra.mxu0 %v2425
      %2688 = vmatprep.subr.mxu0 0.0
      %2689 = vmatpush1.msra.mxu0 %v2423
      %2690 = vmatprep.subr.mxu0 0.0
      %2691 = vmatpush1.msra.mxu0 %v2421
      %2692 = vmatprep.subr.mxu0 0.0
      %2693 = vmatpush1.msra.mxu0 %v2419
      %2694 = vmatprep.subr.mxu0 0.0
      %2695 = vmatpush1.msra.mxu0 %v2417
      %2696 = vmatprep.subr.mxu0 0.0
      %2697 = vmatpush2.msra.mxu0 0.0
      %2698 = vmatprep.subr.mxu0 0.0
      %2699 = vmatpush2.msra.mxu0 0.0
      %2700 = vmatprep.subr.mxu0 0.0
      %2701 = vmatpush2.msra.mxu0 0.0
      %2702 = vmatprep.subr.mxu0 0.0
      %2703 = vmatpush2.msra.mxu0 0.0
      %2704 = vmatprep.subr.mxu0 0.0
      %2705 = vmatpush2.msra.mxu0 0.0
      %2706 = vmatprep.subr.mxu0 0.0
      %2707 = vmatpush2.msra.mxu0 0.0
      %2708 = vmatprep.subr.mxu0 0.0
      %2709 = vmatpush2.msra.mxu0 0.0
      %2710 = vmatprep.subr.mxu0 0.0
      %2711 = vmatpush2.msra.mxu0 0.0
      %2712 = vmatprep.subr.mxu0 0.0
      %2713 = vmatpush2.msra.mxu0 0.0
      %2714 = vmatprep.subr.mxu0 0.0
      %2715 = vmatpush2.msra.mxu0 0.0
      %2716 = vmatprep.subr.mxu0 0.0
      %2717 = vmatpush2.msra.mxu0 0.0
      %2718 = vmatprep.subr.mxu0 0.0
      %2719 = vmatpush2.msra.mxu0 0.0
      %2720 = vmatprep.subr.mxu0 0.0
      %2721 = vmatpush2.msra.mxu0 0.0
      %2722 = vmatprep.subr.mxu0 0.0
      %2723 = vmatpush2.msra.mxu0 0.0
      %2724 = vmatprep.subr.mxu0 0.0
      %2725 = vmatpush2.msra.mxu0 0.0
      %2726 = vmatprep.subr.mxu0 0.0
      %2727 = vmatpush2.msra.mxu0 0.0
      %2728 = vmatprep.mubr.f32.mxu0 0.0
      %2729 = vmatmul.mubr.f32.gmra.mxu0 %v2631
      %v2730 = vpop.f32.mrf.mxu0
      %v2731 = vadd.f32 %v2573, %v2730
      %v2732 = vpop.f32.mrf.mxu0
      %2733 = vmatprep.mubr.f32.mxu0 0.0
      %2734 = vmatmul.mubr.f32.gmra.mxu0 %v2633
      %v2735 = vpop.f32.mrf.mxu0
      %v2736 = vadd.f32 %v2578, %v2735
      %v2737 = vpop.f32.mrf.mxu0
      %2738 = vmatprep.mubr.f32.mxu0 0.0
      %2739 = vmatmul.mubr.f32.gmra.mxu0 %v2635
      %v2740 = vpop.f32.mrf.mxu0
      %v2741 = vadd.f32 %v2583, %v2740
      %v2742 = vpop.f32.mrf.mxu0
      %2743 = vmatprep.mubr.f32.mxu0 0.0
      %2744 = vmatmul.mubr.f32.gmra.mxu0 %v2637
      %v2745 = vpop.f32.mrf.mxu0
      %v2746 = vadd.f32 %v2588, %v2745
      %v2747 = vpop.f32.mrf.mxu0
      %2748 = vmatprep.mubr.f32.mxu0 0.0
      %2749 = vmatmul.mubr.f32.gmra.mxu0 %v2639
      %v2750 = vpop.f32.mrf.mxu0
      %v2751 = vadd.f32 %v2593, %v2750
      %v2752 = vpop.f32.mrf.mxu0
      %2753 = vmatprep.mubr.f32.mxu0 0.0
      %2754 = vmatmul.mubr.f32.gmra.mxu0 %v2641
      %v2755 = vpop.f32.mrf.mxu0
      %v2756 = vadd.f32 %v2598, %v2755
      %v2757 = vpop.f32.mrf.mxu0
      %2758 = vmatprep.mubr.f32.mxu0 0.0
      %2759 = vmatmul.mubr.f32.gmra.mxu0 %v2644
      %v2760 = vpop.f32.mrf.mxu0
      %v2761 = vadd.f32 %v2603, %v2760
      %v2762 = vpop.f32.mrf.mxu0
      %2763 = vmatprep.mubr.f32.mxu0 0.0
      %2764 = vmatmul.mubr.f32.gmra.mxu0 %v2647
      %v2765 = vpop.f32.mrf.mxu0
      %v2766 = vadd.f32 %v2608, %v2765
      %v2767 = vpop.f32.mrf.mxu0
      %2768 = vmatprep.mubr.f32.mxu0 0.0
      %2769 = vmatmul.mubr.f32.gmra.mxu0 %v2650
      %v2770 = vpop.f32.mrf.mxu0
      %v2771 = vadd.f32 %v2613, %v2770
      %v2772 = vpop.f32.mrf.mxu0
      %2773 = vmatprep.mubr.f32.mxu0 0.0
      %2774 = vmatmul.mubr.f32.gmra.mxu0 %v2653
      %v2775 = vpop.f32.mrf.mxu0
      %v2776 = vadd.f32 %v2618, %v2775
      %v2777 = vpop.f32.mrf.mxu0
      %2778 = vmatprep.mubr.f32.mxu0 0.0
      %2779 = vmatmul.mubr.f32.gmra.mxu0 %v2656
      %v2780 = vpop.f32.mrf.mxu0
      %v2781 = vadd.f32 %v2623, %v2780
      %v2782 = vpop.f32.mrf.mxu0
      %2783 = vmatprep.mubr.f32.mxu0 0.0
      %2784 = vmatmul.mubr.f32.gmra.mxu0 %v2659
      %v2785 = vpop.f32.mrf.mxu0
      %v2786 = vadd.f32 %v2628, %v2785
      %v2787 = vpop.f32.mrf.mxu0
      %2788 = vdwg.mxu0
      %vm2789 = vcmp.lt.s32.totalorder %v466, 87
      %vm2790 = vcmp.lt.s32.totalorder %v467, 87
      %vm2791 = vcmp.lt.s32.totalorder %v468, 87
      %vm2792 = vcmp.lt.s32.totalorder %v1483, 87
      %vm2793 = vcmp.lt.s32.totalorder %v1484, 87
      %vm2794 = vcmp.lt.s32.totalorder %v1485, 87
      %vm2795 = vcmp.lt.s32.totalorder %v2429, 87
      %vm2796 = vcmp.lt.s32.totalorder %v2430, 87
      %vm2797 = vcmp.lt.s32.totalorder %v2431, 87
      %vm2798 = vcmp.lt.s32.totalorder %v2432, 87
      %vm2799 = vcmp.lt.s32.totalorder %v2433, 87
      %vm2800 = vcmp.lt.s32.totalorder %v2434, 87
      %v2801 = vsel %vm2789, 1, 0
      %v2802 = vsel %vm2790, 1, 0
      %v2803 = vsel %vm2791, 1, 0
      %v2804 = vsel %vm2792, 1, 0
      %v2805 = vsel %vm2793, 1, 0
      %v2806 = vsel %vm2794, 1, 0
      %v2807 = vsel %vm2795, 1, 0
      %v2808 = vsel %vm2796, 1, 0
      %v2809 = vsel %vm2797, 1, 0
      %v2810 = vsel %vm2798, 1, 0
      %v2811 = vsel %vm2799, 1, 0
      %v2812 = vsel %vm2800, 1, 0
      %vm2813 = vcmp.eq.s32.totalorder %v2801, 1
      %vm2814 = vcmp.eq.s32.totalorder %v2802, 1
      %vm2815 = vcmp.eq.s32.totalorder %v2803, 1
      %vm2816 = vcmp.eq.s32.totalorder %v2804, 1
      %vm2817 = vcmp.eq.s32.totalorder %v2805, 1
      %vm2818 = vcmp.eq.s32.totalorder %v2806, 1
      %vm2819 = vcmp.eq.s32.totalorder %v2807, 1
      %vm2820 = vcmp.eq.s32.totalorder %v2808, 1
      %vm2821 = vcmp.eq.s32.totalorder %v2809, 1
      %vm2822 = vcmp.eq.s32.totalorder %v2810, 1
      %vm2823 = vcmp.eq.s32.totalorder %v2811, 1
      %vm2824 = vcmp.eq.s32.totalorder %v2812, 1
      %v2825 = vsel %vm2813, %v2731, 0.0
      %v2826 = vsel %vm2814, %v2736, 0.0
      %v2827 = vsel %vm2815, %v2741, 0.0
      %v2828 = vsel %vm2816, %v2746, 0.0
      %v2829 = vsel %vm2817, %v2751, 0.0
      %v2830 = vsel %vm2818, %v2756, 0.0
      %v2831 = vsel %vm2819, %v2761, 0.0
      %v2832 = vsel %vm2820, %v2766, 0.0
      %v2833 = vsel %vm2821, %v2771, 0.0
      %v2834 = vsel %vm2822, %v2776, 0.0
      %v2835 = vsel %vm2823, %v2781, 0.0
      %v2836 = vsel %vm2824, %v2786, 0.0
      %v2837 = vld [vmem:[%s7] sm:$0xff]
      %v2838 = vld [vmem:[%s7 + $0x8] sm:$0xff]
      %v2839 = vld [vmem:[%s7 + $0x10] sm:$0xff]
      %v2840 = vld [vmem:[%s7 + $0x18] sm:$0xff]
      %v2841 = vld [vmem:[%s7 + $0x20] sm:$0xff]
      %v2842 = vld [vmem:[%s7 + $0x28] sm:$0xff]
      %v2843 = vld [vmem:[%s7 + $0x30] sm:$0xff]
      %v2844 = vld [vmem:[%s7 + $0x38] sm:$0xff]
      %v2845 = vld [vmem:[%s7 + $0x40] sm:$0xff]
      %v2846 = vld [vmem:[%s7 + $0x48] sm:$0xff]
      %v2847 = vld [vmem:[%s7 + $0x50] sm:$0xff]
      %v2848 = vld [vmem:[%s7 + $0x58] sm:$0xff]
      %v2849 = vld [vmem:[%s7 + $0x60] sm:$0xff]
      %v2850 = vld [vmem:[%s7 + $0x68] sm:$0xff]
      %v2851 = vld [vmem:[%s7 + $0x70] sm:$0xff]
      %v2852 = vld [vmem:[%s7 + $0x78] sm:$0xff]
      %s2853 = scalar_lea.vmem %s7, 128
      %v2854 = vld [vmem:[%s2853] sm:$0xff]
      %v2855 = vld [vmem:[%s2853 + $0x8] sm:$0xff]
      %v2856 = vld [vmem:[%s2853 + $0x10] sm:$0xff]
      %v2857 = vld [vmem:[%s2853 + $0x18] sm:$0xff]
      %v2858 = vld [vmem:[%s2853 + $0x20] sm:$0xff]
      %v2859 = vld [vmem:[%s2853 + $0x28] sm:$0xff]
      %v2860 = vld [vmem:[%s2853 + $0x30] sm:$0xff]
      %v2861 = vld [vmem:[%s2853 + $0x38] sm:$0xff]
      %v2862 = vld [vmem:[%s2853 + $0x40] sm:$0xff]
      %v2863 = vld [vmem:[%s2853 + $0x48] sm:$0xff]
      %v2864 = vld [vmem:[%s2853 + $0x50] sm:$0xff]
      %v2865 = vld [vmem:[%s2853 + $0x58] sm:$0xff]
      %v2866 = vld [vmem:[%s2853 + $0x60] sm:$0xff]
      %v2867 = vld [vmem:[%s2853 + $0x68] sm:$0xff]
      %v2868 = vld [vmem:[%s2853 + $0x70] sm:$0xff]
      %v2869 = vld [vmem:[%s2853 + $0x78] sm:$0xff]
      %v2882 = vrot.slane %v2825, 1
      %v2883 = vrot.slane %v2826, 1
      %v2884 = vsel %vm386, %v2882, %v2883
      %v2885 = vrot.slane %v2827, 1
      %v2886 = vsel %vm386, %v2883, %v2885
      %v2887 = vrot.slane %v2828, 1
      %v2888 = vsel %vm386, %v2885, %v2887
      %v2889 = vrot.slane %v2829, 1
      %v2890 = vsel %vm386, %v2887, %v2889
      %v2891 = vrot.slane %v2830, 1
      %v2892 = vsel %vm386, %v2889, %v2891
      %v2893 = vrot.slane %v2831, 1
      %v2894 = vsel %vm386, %v2891, %v2893
      %v2895 = vrot.slane %v2832, 1
      %v2896 = vsel %vm386, %v2893, %v2895
      %v2897 = vrot.slane %v2833, 1
      %v2898 = vsel %vm386, %v2895, %v2897
      %v2899 = vrot.slane %v2834, 1
      %v2900 = vsel %vm386, %v2897, %v2899
      %v2901 = vrot.slane %v2835, 1
      %v2902 = vsel %vm386, %v2899, %v2901
      %v2903 = vrot.slane %v2836, 1
      %v2904 = vsel %vm386, %v2901, %v2903
      %2916 = vmatprep.subr.mxu0 0.0
      %2917 = vmatpush1.msra.mxu0 %v2869
      %2918 = vmatprep.subr.mxu0 0.0
      %2919 = vmatpush1.msra.mxu0 %v2868
      %2920 = vmatprep.subr.mxu0 0.0
      %2921 = vmatpush1.msra.mxu0 %v2867
      %2922 = vmatprep.subr.mxu0 0.0
      %2923 = vmatpush1.msra.mxu0 %v2866
      %2924 = vmatprep.subr.mxu0 0.0
      %2925 = vmatpush1.msra.mxu0 %v2865
      %2926 = vmatprep.subr.mxu0 0.0
      %2927 = vmatpush1.msra.mxu0 %v2864
      %2928 = vmatprep.subr.mxu0 0.0
      %2929 = vmatpush1.msra.mxu0 %v2863
      %2930 = vmatprep.subr.mxu0 0.0
      %2931 = vmatpush1.msra.mxu0 %v2862
      %2932 = vmatprep.subr.mxu0 0.0
      %2933 = vmatpush1.msra.mxu0 %v2861
      %2934 = vmatprep.subr.mxu0 0.0
      %2935 = vmatpush1.msra.mxu0 %v2860
      %2936 = vmatprep.subr.mxu0 0.0
      %2937 = vmatpush1.msra.mxu0 %v2859
      %2938 = vmatprep.subr.mxu0 0.0
      %2939 = vmatpush1.msra.mxu0 %v2858
      %2940 = vmatprep.subr.mxu0 0.0
      %2941 = vmatpush1.msra.mxu0 %v2857
      %2942 = vmatprep.subr.mxu0 0.0
      %2943 = vmatpush1.msra.mxu0 %v2856
      %2944 = vmatprep.subr.mxu0 0.0
      %2945 = vmatpush1.msra.mxu0 %v2855
      %2946 = vmatprep.subr.mxu0 0.0
      %2947 = vmatpush1.msra.mxu0 %v2854
      %2948 = vmatprep.subr.mxu0 0.0
      %2949 = vmatpush2.msra.mxu0 0.0
      %2950 = vmatprep.subr.mxu0 0.0
      %2951 = vmatpush2.msra.mxu0 0.0
      %2952 = vmatprep.subr.mxu0 0.0
      %2953 = vmatpush2.msra.mxu0 0.0
      %2954 = vmatprep.subr.mxu0 0.0
      %2955 = vmatpush2.msra.mxu0 0.0
      %2956 = vmatprep.subr.mxu0 0.0
      %2957 = vmatpush2.msra.mxu0 0.0
      %2958 = vmatprep.subr.mxu0 0.0
      %2959 = vmatpush2.msra.mxu0 0.0
      %2960 = vmatprep.subr.mxu0 0.0
      %2961 = vmatpush2.msra.mxu0 0.0
      %2962 = vmatprep.subr.mxu0 0.0
      %2963 = vmatpush2.msra.mxu0 0.0
      %2964 = vmatprep.subr.mxu0 0.0
      %2965 = vmatpush2.msra.mxu0 0.0
      %2966 = vmatprep.subr.mxu0 0.0
      %2967 = vmatpush2.msra.mxu0 0.0
      %2968 = vmatprep.subr.mxu0 0.0
      %2969 = vmatpush2.msra.mxu0 0.0
      %2970 = vmatprep.subr.mxu0 0.0
      %2971 = vmatpush2.msra.mxu0 0.0
      %2972 = vmatprep.subr.mxu0 0.0
      %2973 = vmatpush2.msra.mxu0 0.0
      %2974 = vmatprep.subr.mxu0 0.0
      %2975 = vmatpush2.msra.mxu0 0.0
      %2976 = vmatprep.subr.mxu0 0.0
      %2977 = vmatpush2.msra.mxu0 0.0
      %2978 = vmatprep.subr.mxu0 0.0
      %2979 = vmatpush2.msra.mxu0 0.0
      %2980 = vmatprep.mubr.f32.mxu0 0.0
      %2981 = vmatmul.mubr.f32.gmra.mxu0 %v2884
      %v2982 = vpop.f32.mrf.mxu0
      %v2983 = vadd.f32 0.0, %v2982
      %v2984 = vpop.f32.mrf.mxu0
      %2985 = vmatprep.mubr.f32.mxu0 0.0
      %2986 = vmatmul.mubr.f32.gmra.mxu0 %v2886
      %v2987 = vpop.f32.mrf.mxu0
      %v2988 = vadd.f32 0.0, %v2987
      %v2989 = vpop.f32.mrf.mxu0
      %2990 = vmatprep.mubr.f32.mxu0 0.0
      %2991 = vmatmul.mubr.f32.gmra.mxu0 %v2888
      %v2992 = vpop.f32.mrf.mxu0
      %v2993 = vadd.f32 0.0, %v2992
      %v2994 = vpop.f32.mrf.mxu0
      %2995 = vmatprep.mubr.f32.mxu0 0.0
      %2996 = vmatmul.mubr.f32.gmra.mxu0 %v2890
      %v2997 = vpop.f32.mrf.mxu0
      %v2998 = vadd.f32 0.0, %v2997
      %v2999 = vpop.f32.mrf.mxu0
      %3000 = vmatprep.mubr.f32.mxu0 0.0
      %3001 = vmatmul.mubr.f32.gmra.mxu0 %v2892
      %v3002 = vpop.f32.mrf.mxu0
      %v3003 = vadd.f32 0.0, %v3002
      %v3004 = vpop.f32.mrf.mxu0
      %3005 = vmatprep.mubr.f32.mxu0 0.0
      %3006 = vmatmul.mubr.f32.gmra.mxu0 %v2894
      %v3007 = vpop.f32.mrf.mxu0
      %v3008 = vadd.f32 0.0, %v3007
      %v3009 = vpop.f32.mrf.mxu0
      %3010 = vmatprep.mubr.f32.mxu0 0.0
      %3011 = vmatmul.mubr.f32.gmra.mxu0 %v2896
      %v3012 = vpop.f32.mrf.mxu0
      %v3013 = vadd.f32 0.0, %v3012
      %v3014 = vpop.f32.mrf.mxu0
      %3015 = vmatprep.mubr.f32.mxu0 0.0
      %3016 = vmatmul.mubr.f32.gmra.mxu0 %v2898
      %v3017 = vpop.f32.mrf.mxu0
      %v3018 = vadd.f32 0.0, %v3017
      %v3019 = vpop.f32.mrf.mxu0
      %3020 = vmatprep.mubr.f32.mxu0 0.0
      %3021 = vmatmul.mubr.f32.gmra.mxu0 %v2900
      %v3022 = vpop.f32.mrf.mxu0
      %v3023 = vadd.f32 0.0, %v3022
      %v3024 = vpop.f32.mrf.mxu0
      %3025 = vmatprep.mubr.f32.mxu0 0.0
      %3026 = vmatmul.mubr.f32.gmra.mxu0 %v2902
      %v3027 = vpop.f32.mrf.mxu0
      %v3028 = vadd.f32 0.0, %v3027
      %v3029 = vpop.f32.mrf.mxu0
      %3030 = vmatprep.mubr.f32.mxu0 0.0
      %3031 = vmatmul.mubr.f32.gmra.mxu0 %v2904
      %v3032 = vpop.f32.mrf.mxu0
      %v3033 = vadd.f32 0.0, %v3032
      %v3034 = vpop.f32.mrf.mxu0
      %3035 = vdwg.mxu0
      %3036 = vmatprep.subr.mxu0 0.0
      %3037 = vmatpush1.msra.mxu0 %v2852
      %3038 = vmatprep.subr.mxu0 0.0
      %3039 = vmatpush1.msra.mxu0 %v2851
      %3040 = vmatprep.subr.mxu0 0.0
      %3041 = vmatpush1.msra.mxu0 %v2850
      %3042 = vmatprep.subr.mxu0 0.0
      %3043 = vmatpush1.msra.mxu0 %v2849
      %3044 = vmatprep.subr.mxu0 0.0
      %3045 = vmatpush1.msra.mxu0 %v2848
      %3046 = vmatprep.subr.mxu0 0.0
      %3047 = vmatpush1.msra.mxu0 %v2847
      %3048 = vmatprep.subr.mxu0 0.0
      %3049 = vmatpush1.msra.mxu0 %v2846
      %3050 = vmatprep.subr.mxu0 0.0
      %3051 = vmatpush1.msra.mxu0 %v2845
      %3052 = vmatprep.subr.mxu0 0.0
      %3053 = vmatpush1.msra.mxu0 %v2844
      %3054 = vmatprep.subr.mxu0 0.0
      %3055 = vmatpush1.msra.mxu0 %v2843
      %3056 = vmatprep.subr.mxu0 0.0
      %3057 = vmatpush1.msra.mxu0 %v2842
      %3058 = vmatprep.subr.mxu0 0.0
      %3059 = vmatpush1.msra.mxu0 %v2841
      %3060 = vmatprep.subr.mxu0 0.0
      %3061 = vmatpush1.msra.mxu0 %v2840
      %3062 = vmatprep.subr.mxu0 0.0
      %3063 = vmatpush1.msra.mxu0 %v2839
      %3064 = vmatprep.subr.mxu0 0.0
      %3065 = vmatpush1.msra.mxu0 %v2838
      %3066 = vmatprep.subr.mxu0 0.0
      %3067 = vmatpush1.msra.mxu0 %v2837
      %3068 = vmatprep.subr.mxu0 0.0
      %3069 = vmatpush2.msra.mxu0 0.0
      %3070 = vmatprep.subr.mxu0 0.0
      %3071 = vmatpush2.msra.mxu0 0.0
      %3072 = vmatprep.subr.mxu0 0.0
      %3073 = vmatpush2.msra.mxu0 0.0
      %3074 = vmatprep.subr.mxu0 0.0
      %3075 = vmatpush2.msra.mxu0 0.0
      %3076 = vmatprep.subr.mxu0 0.0
      %3077 = vmatpush2.msra.mxu0 0.0
      %3078 = vmatprep.subr.mxu0 0.0
      %3079 = vmatpush2.msra.mxu0 0.0
      %3080 = vmatprep.subr.mxu0 0.0
      %3081 = vmatpush2.msra.mxu0 0.0
      %3082 = vmatprep.subr.mxu0 0.0
      %3083 = vmatpush2.msra.mxu0 0.0
      %3084 = vmatprep.subr.mxu0 0.0
      %3085 = vmatpush2.msra.mxu0 0.0
      %3086 = vmatprep.subr.mxu0 0.0
      %3087 = vmatpush2.msra.mxu0 0.0
      %3088 = vmatprep.subr.mxu0 0.0
      %3089 = vmatpush2.msra.mxu0 0.0
      %3090 = vmatprep.subr.mxu0 0.0
      %3091 = vmatpush2.msra.mxu0 0.0
      %3092 = vmatprep.subr.mxu0 0.0
      %3093 = vmatpush2.msra.mxu0 0.0
      %3094 = vmatprep.subr.mxu0 0.0
      %3095 = vmatpush2.msra.mxu0 0.0
      %3096 = vmatprep.subr.mxu0 0.0
      %3097 = vmatpush2.msra.mxu0 0.0
      %3098 = vmatprep.subr.mxu0 0.0
      %3099 = vmatpush2.msra.mxu0 0.0
      %3100 = vmatprep.mubr.f32.mxu0 0.0
      %3101 = vmatmul.mubr.f32.gmra.mxu0 %v2825
      %v3102 = vpop.f32.mrf.mxu0
      %v3103 = vadd.f32 %v2983, %v3102
      %v3104 = vpop.f32.mrf.mxu0
      %3105 = vmatprep.mubr.f32.mxu0 0.0
      %3106 = vmatmul.mubr.f32.gmra.mxu0 %v2826
      %v3107 = vpop.f32.mrf.mxu0
      %v3108 = vadd.f32 %v2988, %v3107
      %v3109 = vpop.f32.mrf.mxu0
      %3110 = vmatprep.mubr.f32.mxu0 0.0
      %3111 = vmatmul.mubr.f32.gmra.mxu0 %v2827
      %v3112 = vpop.f32.mrf.mxu0
      %v3113 = vadd.f32 %v2993, %v3112
      %v3114 = vpop.f32.mrf.mxu0
      %3115 = vmatprep.mubr.f32.mxu0 0.0
      %3116 = vmatmul.mubr.f32.gmra.mxu0 %v2828
      %v3117 = vpop.f32.mrf.mxu0
      %v3118 = vadd.f32 %v2998, %v3117
      %v3119 = vpop.f32.mrf.mxu0
      %3120 = vmatprep.mubr.f32.mxu0 0.0
      %3121 = vmatmul.mubr.f32.gmra.mxu0 %v2829
      %v3122 = vpop.f32.mrf.mxu0
      %v3123 = vadd.f32 %v3003, %v3122
      %v3124 = vpop.f32.mrf.mxu0
      %3125 = vmatprep.mubr.f32.mxu0 0.0
      %3126 = vmatmul.mubr.f32.gmra.mxu0 %v2830
      %v3127 = vpop.f32.mrf.mxu0
      %v3128 = vadd.f32 %v3008, %v3127
      %v3129 = vpop.f32.mrf.mxu0
      %3130 = vmatprep.mubr.f32.mxu0 0.0
      %3131 = vmatmul.mubr.f32.gmra.mxu0 %v2831
      %v3132 = vpop.f32.mrf.mxu0
      %v3133 = vadd.f32 %v3013, %v3132
      %v3134 = vpop.f32.mrf.mxu0
      %3135 = vmatprep.mubr.f32.mxu0 0.0
      %3136 = vmatmul.mubr.f32.gmra.mxu0 %v2832
      %v3137 = vpop.f32.mrf.mxu0
      %v3138 = vadd.f32 %v3018, %v3137
      %v3139 = vpop.f32.mrf.mxu0
      %3140 = vmatprep.mubr.f32.mxu0 0.0
      %3141 = vmatmul.mubr.f32.gmra.mxu0 %v2833
      %v3142 = vpop.f32.mrf.mxu0
      %v3143 = vadd.f32 %v3023, %v3142
      %v3144 = vpop.f32.mrf.mxu0
      %3145 = vmatprep.mubr.f32.mxu0 0.0
      %3146 = vmatmul.mubr.f32.gmra.mxu0 %v2834
      %v3147 = vpop.f32.mrf.mxu0
      %v3148 = vadd.f32 %v3028, %v3147
      %v3149 = vpop.f32.mrf.mxu0
      %3150 = vmatprep.mubr.f32.mxu0 0.0
      %3151 = vmatmul.mubr.f32.gmra.mxu0 %v2835
      %v3152 = vpop.f32.mrf.mxu0
      %v3153 = vadd.f32 %v3033, %v3152
      %v3154 = vpop.f32.mrf.mxu0
      %3155 = vdwg.mxu0
      %s3156 = scalar_lea.vmem %s7, 256
      %v3157 = vld [vmem:[%s3156] sm:$0xff]
      %v3158 = vld [vmem:[%s3156 + $0x8] sm:$0xff]
      %v3159 = vld [vmem:[%s3156 + $0x10] sm:$0xff]
      %v3160 = vld [vmem:[%s3156 + $0x18] sm:$0xff]
      %v3161 = vld [vmem:[%s3156 + $0x20] sm:$0xff]
      %v3162 = vld [vmem:[%s3156 + $0x28] sm:$0xff]
      %v3163 = vld [vmem:[%s3156 + $0x30] sm:$0xff]
      %v3164 = vld [vmem:[%s3156 + $0x38] sm:$0xff]
      %v3165 = vld [vmem:[%s3156 + $0x40] sm:$0xff]
      %v3166 = vld [vmem:[%s3156 + $0x48] sm:$0xff]
      %v3167 = vld [vmem:[%s3156 + $0x50] sm:$0xff]
      %v3168 = vld [vmem:[%s3156 + $0x58] sm:$0xff]
      %v3169 = vld [vmem:[%s3156 + $0x60] sm:$0xff]
      %v3170 = vld [vmem:[%s3156 + $0x68] sm:$0xff]
      %v3171 = vld [vmem:[%s3156 + $0x70] sm:$0xff]
      %v3172 = vld [vmem:[%s3156 + $0x78] sm:$0xff]
      %v3173 = vrot.slane %v2825, 2
      %v3174 = vrot.slane %v2826, 2
      %v3175 = vsel %vm422, %v3173, %v3174
      %v3176 = vrot.slane %v2827, 2
      %v3177 = vsel %vm422, %v3174, %v3176
      %v3178 = vrot.slane %v2828, 2
      %v3179 = vsel %vm422, %v3176, %v3178
      %v3180 = vrot.slane %v2829, 2
      %v3181 = vsel %vm422, %v3178, %v3180
      %v3182 = vrot.slane %v2830, 2
      %v3183 = vsel %vm422, %v3180, %v3182
      %v3184 = vrot.slane %v2831, 2
      %v3185 = vsel %vm422, %v3182, %v3184
      %v3186 = vrot.slane %v2832, 2
      %v3187 = vsel %vm422, %v3184, %v3186
      %v3188 = vrot.slane %v2833, 2
      %v3189 = vsel %vm422, %v3186, %v3188
      %v3190 = vrot.slane %v2834, 2
      %v3191 = vsel %vm422, %v3188, %v3190
      %v3192 = vrot.slane %v2835, 2
      %v3193 = vsel %vm422, %v3190, %v3192
      %v3194 = vrot.slane %v2836, 2
      %v3195 = vsel %vm422, %v3192, %v3194
      %3207 = vmatprep.subr.mxu0 0.0
      %3208 = vmatpush1.msra.mxu0 %v3172
      %3209 = vmatprep.subr.mxu0 0.0
      %3210 = vmatpush1.msra.mxu0 %v3171
      %3211 = vmatprep.subr.mxu0 0.0
      %3212 = vmatpush1.msra.mxu0 %v3170
      %3213 = vmatprep.subr.mxu0 0.0
      %3214 = vmatpush1.msra.mxu0 %v3169
      %3215 = vmatprep.subr.mxu0 0.0
      %3216 = vmatpush1.msra.mxu0 %v3168
      %3217 = vmatprep.subr.mxu0 0.0
      %3218 = vmatpush1.msra.mxu0 %v3167
      %3219 = vmatprep.subr.mxu0 0.0
      %3220 = vmatpush1.msra.mxu0 %v3166
      %3221 = vmatprep.subr.mxu0 0.0
      %3222 = vmatpush1.msra.mxu0 %v3165
      %3223 = vmatprep.subr.mxu0 0.0
      %3224 = vmatpush1.msra.mxu0 %v3164
      %3225 = vmatprep.subr.mxu0 0.0
      %3226 = vmatpush1.msra.mxu0 %v3163
      %3227 = vmatprep.subr.mxu0 0.0
      %3228 = vmatpush1.msra.mxu0 %v3162
      %3229 = vmatprep.subr.mxu0 0.0
      %3230 = vmatpush1.msra.mxu0 %v3161
      %3231 = vmatprep.subr.mxu0 0.0
      %3232 = vmatpush1.msra.mxu0 %v3160
      %3233 = vmatprep.subr.mxu0 0.0
      %3234 = vmatpush1.msra.mxu0 %v3159
      %3235 = vmatprep.subr.mxu0 0.0
      %3236 = vmatpush1.msra.mxu0 %v3158
      %3237 = vmatprep.subr.mxu0 0.0
      %3238 = vmatpush1.msra.mxu0 %v3157
      %3239 = vmatprep.subr.mxu0 0.0
      %3240 = vmatpush2.msra.mxu0 0.0
      %3241 = vmatprep.subr.mxu0 0.0
      %3242 = vmatpush2.msra.mxu0 0.0
      %3243 = vmatprep.subr.mxu0 0.0
      %3244 = vmatpush2.msra.mxu0 0.0
      %3245 = vmatprep.subr.mxu0 0.0
      %3246 = vmatpush2.msra.mxu0 0.0
      %3247 = vmatprep.subr.mxu0 0.0
      %3248 = vmatpush2.msra.mxu0 0.0
      %3249 = vmatprep.subr.mxu0 0.0
      %3250 = vmatpush2.msra.mxu0 0.0
      %3251 = vmatprep.subr.mxu0 0.0
      %3252 = vmatpush2.msra.mxu0 0.0
      %3253 = vmatprep.subr.mxu0 0.0
      %3254 = vmatpush2.msra.mxu0 0.0
      %3255 = vmatprep.subr.mxu0 0.0
      %3256 = vmatpush2.msra.mxu0 0.0
      %3257 = vmatprep.subr.mxu0 0.0
      %3258 = vmatpush2.msra.mxu0 0.0
      %3259 = vmatprep.subr.mxu0 0.0
      %3260 = vmatpush2.msra.mxu0 0.0
      %3261 = vmatprep.subr.mxu0 0.0
      %3262 = vmatpush2.msra.mxu0 0.0
      %3263 = vmatprep.subr.mxu0 0.0
      %3264 = vmatpush2.msra.mxu0 0.0
      %3265 = vmatprep.subr.mxu0 0.0
      %3266 = vmatpush2.msra.mxu0 0.0
      %3267 = vmatprep.subr.mxu0 0.0
      %3268 = vmatpush2.msra.mxu0 0.0
      %3269 = vmatprep.subr.mxu0 0.0
      %3270 = vmatpush2.msra.mxu0 0.0
      %3271 = vmatprep.mubr.f32.mxu0 0.0
      %3272 = vmatmul.mubr.f32.gmra.mxu0 %v3175
      %v3273 = vpop.f32.mrf.mxu0
      %v3274 = vadd.f32 0.0, %v3273
      %v3275 = vpop.f32.mrf.mxu0
      %3276 = vmatprep.mubr.f32.mxu0 0.0
      %3277 = vmatmul.mubr.f32.gmra.mxu0 %v3177
      %v3278 = vpop.f32.mrf.mxu0
      %v3279 = vadd.f32 0.0, %v3278
      %v3280 = vpop.f32.mrf.mxu0
      %3281 = vmatprep.mubr.f32.mxu0 0.0
      %3282 = vmatmul.mubr.f32.gmra.mxu0 %v3179
      %v3283 = vpop.f32.mrf.mxu0
      %v3284 = vadd.f32 0.0, %v3283
      %v3285 = vpop.f32.mrf.mxu0
      %3286 = vmatprep.mubr.f32.mxu0 0.0
      %3287 = vmatmul.mubr.f32.gmra.mxu0 %v3181
      %v3288 = vpop.f32.mrf.mxu0
      %v3289 = vadd.f32 0.0, %v3288
      %v3290 = vpop.f32.mrf.mxu0
      %3291 = vmatprep.mubr.f32.mxu0 0.0
      %3292 = vmatmul.mubr.f32.gmra.mxu0 %v3183
      %v3293 = vpop.f32.mrf.mxu0
      %v3294 = vadd.f32 0.0, %v3293
      %v3295 = vpop.f32.mrf.mxu0
      %3296 = vmatprep.mubr.f32.mxu0 0.0
      %3297 = vmatmul.mubr.f32.gmra.mxu0 %v3185
      %v3298 = vpop.f32.mrf.mxu0
      %v3299 = vadd.f32 0.0, %v3298
      %v3300 = vpop.f32.mrf.mxu0
      %3301 = vmatprep.mubr.f32.mxu0 0.0
      %3302 = vmatmul.mubr.f32.gmra.mxu0 %v3187
      %v3303 = vpop.f32.mrf.mxu0
      %v3304 = vadd.f32 0.0, %v3303
      %v3305 = vpop.f32.mrf.mxu0
      %3306 = vmatprep.mubr.f32.mxu0 0.0
      %3307 = vmatmul.mubr.f32.gmra.mxu0 %v3189
      %v3308 = vpop.f32.mrf.mxu0
      %v3309 = vadd.f32 0.0, %v3308
      %v3310 = vpop.f32.mrf.mxu0
      %3311 = vmatprep.mubr.f32.mxu0 0.0
      %3312 = vmatmul.mubr.f32.gmra.mxu0 %v3191
      %v3313 = vpop.f32.mrf.mxu0
      %v3314 = vadd.f32 0.0, %v3313
      %v3315 = vpop.f32.mrf.mxu0
      %3316 = vmatprep.mubr.f32.mxu0 0.0
      %3317 = vmatmul.mubr.f32.gmra.mxu0 %v3193
      %v3318 = vpop.f32.mrf.mxu0
      %v3319 = vadd.f32 0.0, %v3318
      %v3320 = vpop.f32.mrf.mxu0
      %3321 = vmatprep.mubr.f32.mxu0 0.0
      %3322 = vmatmul.mubr.f32.gmra.mxu0 %v3195
      %v3323 = vpop.f32.mrf.mxu0
      %v3324 = vadd.f32 0.0, %v3323
      %v3325 = vpop.f32.mrf.mxu0
      %3326 = vdwg.mxu0
      %v3327 = vadd.f32 %v3103, %v3274
      %v3328 = vadd.f32 %v3108, %v3279
      %v3329 = vadd.f32 %v3113, %v3284
      %v3330 = vadd.f32 %v3118, %v3289
      %v3331 = vadd.f32 %v3123, %v3294
      %v3332 = vadd.f32 %v3128, %v3299
      %v3333 = vadd.f32 %v3133, %v3304
      %v3334 = vadd.f32 %v3138, %v3309
      %v3335 = vadd.f32 %v3143, %v3314
      %v3336 = vadd.f32 %v3148, %v3319
      %v3337 = vadd.f32 %v3153, %v3324
      %s3338 = scalar_lea.vmem %s7, 384
      %v3339 = vld [vmem:[%s3338] sm:$0xff]
      %v3340 = vld [vmem:[%s3338 + $0x8] sm:$0xff]
      %v3341 = vld [vmem:[%s3338 + $0x10] sm:$0xff]
      %v3342 = vld [vmem:[%s3338 + $0x18] sm:$0xff]
      %v3343 = vld [vmem:[%s3338 + $0x20] sm:$0xff]
      %v3344 = vld [vmem:[%s3338 + $0x28] sm:$0xff]
      %v3345 = vld [vmem:[%s3338 + $0x30] sm:$0xff]
      %v3346 = vld [vmem:[%s3338 + $0x38] sm:$0xff]
      %v3347 = vld [vmem:[%s3338 + $0x40] sm:$0xff]
      %v3348 = vld [vmem:[%s3338 + $0x48] sm:$0xff]
      %v3349 = vld [vmem:[%s3338 + $0x50] sm:$0xff]
      %v3350 = vld [vmem:[%s3338 + $0x58] sm:$0xff]
      %v3351 = vld [vmem:[%s3338 + $0x60] sm:$0xff]
      %v3352 = vld [vmem:[%s3338 + $0x68] sm:$0xff]
      %v3353 = vld [vmem:[%s3338 + $0x70] sm:$0xff]
      %v3354 = vld [vmem:[%s3338 + $0x78] sm:$0xff]
      %v3355 = vrot.slane %v2825, 3
      %v3356 = vrot.slane %v2826, 3
      %v3357 = vsel %vm1520, %v3355, %v3356
      %v3358 = vrot.slane %v2827, 3
      %v3359 = vsel %vm1520, %v3356, %v3358
      %v3360 = vrot.slane %v2828, 3
      %v3361 = vsel %vm1520, %v3358, %v3360
      %v3362 = vrot.slane %v2829, 3
      %v3363 = vsel %vm1520, %v3360, %v3362
      %v3364 = vrot.slane %v2830, 3
      %v3365 = vsel %vm1520, %v3362, %v3364
      %v3366 = vrot.slane %v2831, 3
      %v3367 = vsel %vm1520, %v3364, %v3366
      %v3368 = vrot.slane %v2832, 3
      %v3369 = vsel %vm1520, %v3366, %v3368
      %v3370 = vrot.slane %v2833, 3
      %v3371 = vsel %vm1520, %v3368, %v3370
      %v3372 = vrot.slane %v2834, 3
      %v3373 = vsel %vm1520, %v3370, %v3372
      %v3374 = vrot.slane %v2835, 3
      %v3375 = vsel %vm1520, %v3372, %v3374
      %v3376 = vrot.slane %v2836, 3
      %v3377 = vsel %vm1520, %v3374, %v3376
      %3389 = vmatprep.subr.mxu0 0.0
      %3390 = vmatpush1.msra.mxu0 %v3354
      %3391 = vmatprep.subr.mxu0 0.0
      %3392 = vmatpush1.msra.mxu0 %v3353
      %3393 = vmatprep.subr.mxu0 0.0
      %3394 = vmatpush1.msra.mxu0 %v3352
      %3395 = vmatprep.subr.mxu0 0.0
      %3396 = vmatpush1.msra.mxu0 %v3351
      %3397 = vmatprep.subr.mxu0 0.0
      %3398 = vmatpush1.msra.mxu0 %v3350
      %3399 = vmatprep.subr.mxu0 0.0
      %3400 = vmatpush1.msra.mxu0 %v3349
      %3401 = vmatprep.subr.mxu0 0.0
      %3402 = vmatpush1.msra.mxu0 %v3348
      %3403 = vmatprep.subr.mxu0 0.0
      %3404 = vmatpush1.msra.mxu0 %v3347
      %3405 = vmatprep.subr.mxu0 0.0
      %3406 = vmatpush1.msra.mxu0 %v3346
      %3407 = vmatprep.subr.mxu0 0.0
      %3408 = vmatpush1.msra.mxu0 %v3345
      %3409 = vmatprep.subr.mxu0 0.0
      %3410 = vmatpush1.msra.mxu0 %v3344
      %3411 = vmatprep.subr.mxu0 0.0
      %3412 = vmatpush1.msra.mxu0 %v3343
      %3413 = vmatprep.subr.mxu0 0.0
      %3414 = vmatpush1.msra.mxu0 %v3342
      %3415 = vmatprep.subr.mxu0 0.0
      %3416 = vmatpush1.msra.mxu0 %v3341
      %3417 = vmatprep.subr.mxu0 0.0
      %3418 = vmatpush1.msra.mxu0 %v3340
      %3419 = vmatprep.subr.mxu0 0.0
      %3420 = vmatpush1.msra.mxu0 %v3339
      %3421 = vmatprep.subr.mxu0 0.0
      %3422 = vmatpush2.msra.mxu0 0.0
      %3423 = vmatprep.subr.mxu0 0.0
      %3424 = vmatpush2.msra.mxu0 0.0
      %3425 = vmatprep.subr.mxu0 0.0
      %3426 = vmatpush2.msra.mxu0 0.0
      %3427 = vmatprep.subr.mxu0 0.0
      %3428 = vmatpush2.msra.mxu0 0.0
      %3429 = vmatprep.subr.mxu0 0.0
      %3430 = vmatpush2.msra.mxu0 0.0
      %3431 = vmatprep.subr.mxu0 0.0
      %3432 = vmatpush2.msra.mxu0 0.0
      %3433 = vmatprep.subr.mxu0 0.0
      %3434 = vmatpush2.msra.mxu0 0.0
      %3435 = vmatprep.subr.mxu0 0.0
      %3436 = vmatpush2.msra.mxu0 0.0
      %3437 = vmatprep.subr.mxu0 0.0
      %3438 = vmatpush2.msra.mxu0 0.0
      %3439 = vmatprep.subr.mxu0 0.0
      %3440 = vmatpush2.msra.mxu0 0.0
      %3441 = vmatprep.subr.mxu0 0.0
      %3442 = vmatpush2.msra.mxu0 0.0
      %3443 = vmatprep.subr.mxu0 0.0
      %3444 = vmatpush2.msra.mxu0 0.0
      %3445 = vmatprep.subr.mxu0 0.0
      %3446 = vmatpush2.msra.mxu0 0.0
      %3447 = vmatprep.subr.mxu0 0.0
      %3448 = vmatpush2.msra.mxu0 0.0
      %3449 = vmatprep.subr.mxu0 0.0
      %3450 = vmatpush2.msra.mxu0 0.0
      %3451 = vmatprep.subr.mxu0 0.0
      %3452 = vmatpush2.msra.mxu0 0.0
      %3453 = vmatprep.mubr.f32.mxu0 0.0
      %3454 = vmatmul.mubr.f32.gmra.mxu0 %v3357
      %v3455 = vpop.f32.mrf.mxu0
      %v3456 = vadd.f32 0.0, %v3455
      %v3457 = vpop.f32.mrf.mxu0
      %3458 = vmatprep.mubr.f32.mxu0 0.0
      %3459 = vmatmul.mubr.f32.gmra.mxu0 %v3359
      %v3460 = vpop.f32.mrf.mxu0
      %v3461 = vadd.f32 0.0, %v3460
      %v3462 = vpop.f32.mrf.mxu0
      %3463 = vmatprep.mubr.f32.mxu0 0.0
      %3464 = vmatmul.mubr.f32.gmra.mxu0 %v3361
      %v3465 = vpop.f32.mrf.mxu0
      %v3466 = vadd.f32 0.0, %v3465
      %v3467 = vpop.f32.mrf.mxu0
      %3468 = vmatprep.mubr.f32.mxu0 0.0
      %3469 = vmatmul.mubr.f32.gmra.mxu0 %v3363
      %v3470 = vpop.f32.mrf.mxu0
      %v3471 = vadd.f32 0.0, %v3470
      %v3472 = vpop.f32.mrf.mxu0
      %3473 = vmatprep.mubr.f32.mxu0 0.0
      %3474 = vmatmul.mubr.f32.gmra.mxu0 %v3365
      %v3475 = vpop.f32.mrf.mxu0
      %v3476 = vadd.f32 0.0, %v3475
      %v3477 = vpop.f32.mrf.mxu0
      %3478 = vmatprep.mubr.f32.mxu0 0.0
      %3479 = vmatmul.mubr.f32.gmra.mxu0 %v3367
      %v3480 = vpop.f32.mrf.mxu0
      %v3481 = vadd.f32 0.0, %v3480
      %v3482 = vpop.f32.mrf.mxu0
      %3483 = vmatprep.mubr.f32.mxu0 0.0
      %3484 = vmatmul.mubr.f32.gmra.mxu0 %v3369
      %v3485 = vpop.f32.mrf.mxu0
      %v3486 = vadd.f32 0.0, %v3485
      %v3487 = vpop.f32.mrf.mxu0
      %3488 = vmatprep.mubr.f32.mxu0 0.0
      %3489 = vmatmul.mubr.f32.gmra.mxu0 %v3371
      %v3490 = vpop.f32.mrf.mxu0
      %v3491 = vadd.f32 0.0, %v3490
      %v3492 = vpop.f32.mrf.mxu0
      %3493 = vmatprep.mubr.f32.mxu0 0.0
      %3494 = vmatmul.mubr.f32.gmra.mxu0 %v3373
      %v3495 = vpop.f32.mrf.mxu0
      %v3496 = vadd.f32 0.0, %v3495
      %v3497 = vpop.f32.mrf.mxu0
      %3498 = vmatprep.mubr.f32.mxu0 0.0
      %3499 = vmatmul.mubr.f32.gmra.mxu0 %v3375
      %v3500 = vpop.f32.mrf.mxu0
      %v3501 = vadd.f32 0.0, %v3500
      %v3502 = vpop.f32.mrf.mxu0
      %3503 = vmatprep.mubr.f32.mxu0 0.0
      %3504 = vmatmul.mubr.f32.gmra.mxu0 %v3377
      %v3505 = vpop.f32.mrf.mxu0
      %v3506 = vadd.f32 0.0, %v3505
      %v3507 = vpop.f32.mrf.mxu0
      %3508 = vdwg.mxu0
      %v3509 = vadd.f32 %v3327, %v3456
      %v3510 = vadd.f32 %v3328, %v3461
      %v3511 = vadd.f32 %v3329, %v3466
      %v3512 = vadd.f32 %v3330, %v3471
      %v3513 = vadd.f32 %v3331, %v3476
      %v3514 = vadd.f32 %v3332, %v3481
      %v3515 = vadd.f32 %v3333, %v3486
      %v3516 = vadd.f32 %v3334, %v3491
      %v3517 = vadd.f32 %v3335, %v3496
      %v3518 = vadd.f32 %v3336, %v3501
      %v3519 = vadd.f32 %v3337, %v3506
      %s3520 = scalar_lea.vmem %s7, 512
      %v3521 = vld [vmem:[%s3520] sm:$0xff]
      %v3522 = vld [vmem:[%s3520 + $0x8] sm:$0xff]
      %v3523 = vld [vmem:[%s3520 + $0x10] sm:$0xff]
      %v3524 = vld [vmem:[%s3520 + $0x18] sm:$0xff]
      %v3525 = vld [vmem:[%s3520 + $0x20] sm:$0xff]
      %v3526 = vld [vmem:[%s3520 + $0x28] sm:$0xff]
      %v3527 = vld [vmem:[%s3520 + $0x30] sm:$0xff]
      %v3528 = vld [vmem:[%s3520 + $0x38] sm:$0xff]
      %v3529 = vld [vmem:[%s3520 + $0x40] sm:$0xff]
      %v3530 = vld [vmem:[%s3520 + $0x48] sm:$0xff]
      %v3531 = vld [vmem:[%s3520 + $0x50] sm:$0xff]
      %v3532 = vld [vmem:[%s3520 + $0x58] sm:$0xff]
      %v3533 = vld [vmem:[%s3520 + $0x60] sm:$0xff]
      %v3534 = vld [vmem:[%s3520 + $0x68] sm:$0xff]
      %v3535 = vld [vmem:[%s3520 + $0x70] sm:$0xff]
      %v3536 = vld [vmem:[%s3520 + $0x78] sm:$0xff]
      %vm3537 = vcmask 1043456
      %v3538 = vrot.slane %v2825, 4
      %v3539 = vrot.slane %v2826, 4
      %v3540 = vsel %vm3537, %v3538, %v3539
      %v3541 = vrot.slane %v2827, 4
      %v3542 = vsel %vm3537, %v3539, %v3541
      %v3543 = vrot.slane %v2828, 4
      %v3544 = vsel %vm3537, %v3541, %v3543
      %v3545 = vrot.slane %v2829, 4
      %v3546 = vsel %vm3537, %v3543, %v3545
      %v3547 = vrot.slane %v2830, 4
      %v3548 = vsel %vm3537, %v3545, %v3547
      %v3549 = vrot.slane %v2831, 4
      %v3550 = vsel %vm3537, %v3547, %v3549
      %v3551 = vrot.slane %v2832, 4
      %v3552 = vsel %vm3537, %v3549, %v3551
      %v3553 = vrot.slane %v2833, 4
      %v3554 = vsel %vm3537, %v3551, %v3553
      %v3555 = vrot.slane %v2834, 4
      %v3556 = vsel %vm3537, %v3553, %v3555
      %v3557 = vrot.slane %v2835, 4
      %v3558 = vsel %vm3537, %v3555, %v3557
      %v3559 = vrot.slane %v2836, 4
      %v3560 = vsel %vm3537, %v3557, %v3559
      %3572 = vmatprep.subr.mxu0 0.0
      %3573 = vmatpush1.msra.mxu0 %v3536
      %3574 = vmatprep.subr.mxu0 0.0
      %3575 = vmatpush1.msra.mxu0 %v3535
      %3576 = vmatprep.subr.mxu0 0.0
      %3577 = vmatpush1.msra.mxu0 %v3534
      %3578 = vmatprep.subr.mxu0 0.0
      %3579 = vmatpush1.msra.mxu0 %v3533
      %3580 = vmatprep.subr.mxu0 0.0
      %3581 = vmatpush1.msra.mxu0 %v3532
      %3582 = vmatprep.subr.mxu0 0.0
      %3583 = vmatpush1.msra.mxu0 %v3531
      %3584 = vmatprep.subr.mxu0 0.0
      %3585 = vmatpush1.msra.mxu0 %v3530
      %3586 = vmatprep.subr.mxu0 0.0
      %3587 = vmatpush1.msra.mxu0 %v3529
      %3588 = vmatprep.subr.mxu0 0.0
      %3589 = vmatpush1.msra.mxu0 %v3528
      %3590 = vmatprep.subr.mxu0 0.0
      %3591 = vmatpush1.msra.mxu0 %v3527
      %3592 = vmatprep.subr.mxu0 0.0
      %3593 = vmatpush1.msra.mxu0 %v3526
      %3594 = vmatprep.subr.mxu0 0.0
      %3595 = vmatpush1.msra.mxu0 %v3525
      %3596 = vmatprep.subr.mxu0 0.0
      %3597 = vmatpush1.msra.mxu0 %v3524
      %3598 = vmatprep.subr.mxu0 0.0
      %3599 = vmatpush1.msra.mxu0 %v3523
      %3600 = vmatprep.subr.mxu0 0.0
      %3601 = vmatpush1.msra.mxu0 %v3522
      %3602 = vmatprep.subr.mxu0 0.0
      %3603 = vmatpush1.msra.mxu0 %v3521
      %3604 = vmatprep.subr.mxu0 0.0
      %3605 = vmatpush2.msra.mxu0 0.0
      %3606 = vmatprep.subr.mxu0 0.0
      %3607 = vmatpush2.msra.mxu0 0.0
      %3608 = vmatprep.subr.mxu0 0.0
      %3609 = vmatpush2.msra.mxu0 0.0
      %3610 = vmatprep.subr.mxu0 0.0
      %3611 = vmatpush2.msra.mxu0 0.0
      %3612 = vmatprep.subr.mxu0 0.0
      %3613 = vmatpush2.msra.mxu0 0.0
      %3614 = vmatprep.subr.mxu0 0.0
      %3615 = vmatpush2.msra.mxu0 0.0
      %3616 = vmatprep.subr.mxu0 0.0
      %3617 = vmatpush2.msra.mxu0 0.0
      %3618 = vmatprep.subr.mxu0 0.0
      %3619 = vmatpush2.msra.mxu0 0.0
      %3620 = vmatprep.subr.mxu0 0.0
      %3621 = vmatpush2.msra.mxu0 0.0
      %3622 = vmatprep.subr.mxu0 0.0
      %3623 = vmatpush2.msra.mxu0 0.0
      %3624 = vmatprep.subr.mxu0 0.0
      %3625 = vmatpush2.msra.mxu0 0.0
      %3626 = vmatprep.subr.mxu0 0.0
      %3627 = vmatpush2.msra.mxu0 0.0
      %3628 = vmatprep.subr.mxu0 0.0
      %3629 = vmatpush2.msra.mxu0 0.0
      %3630 = vmatprep.subr.mxu0 0.0
      %3631 = vmatpush2.msra.mxu0 0.0
      %3632 = vmatprep.subr.mxu0 0.0
      %3633 = vmatpush2.msra.mxu0 0.0
      %3634 = vmatprep.subr.mxu0 0.0
      %3635 = vmatpush2.msra.mxu0 0.0
      %3636 = vmatprep.mubr.f32.mxu0 0.0
      %3637 = vmatmul.mubr.f32.gmra.mxu0 %v3540
      %v3638 = vpop.f32.mrf.mxu0
      %v3639 = vadd.f32 0.0, %v3638
      %v3640 = vpop.f32.mrf.mxu0
      %3641 = vmatprep.mubr.f32.mxu0 0.0
      %3642 = vmatmul.mubr.f32.gmra.mxu0 %v3542
      %v3643 = vpop.f32.mrf.mxu0
      %v3644 = vadd.f32 0.0, %v3643
      %v3645 = vpop.f32.mrf.mxu0
      %3646 = vmatprep.mubr.f32.mxu0 0.0
      %3647 = vmatmul.mubr.f32.gmra.mxu0 %v3544
      %v3648 = vpop.f32.mrf.mxu0
      %v3649 = vadd.f32 0.0, %v3648
      %v3650 = vpop.f32.mrf.mxu0
      %3651 = vmatprep.mubr.f32.mxu0 0.0
      %3652 = vmatmul.mubr.f32.gmra.mxu0 %v3546
      %v3653 = vpop.f32.mrf.mxu0
      %v3654 = vadd.f32 0.0, %v3653
      %v3655 = vpop.f32.mrf.mxu0
      %3656 = vmatprep.mubr.f32.mxu0 0.0
      %3657 = vmatmul.mubr.f32.gmra.mxu0 %v3548
      %v3658 = vpop.f32.mrf.mxu0
      %v3659 = vadd.f32 0.0, %v3658
      %v3660 = vpop.f32.mrf.mxu0
      %3661 = vmatprep.mubr.f32.mxu0 0.0
      %3662 = vmatmul.mubr.f32.gmra.mxu0 %v3550
      %v3663 = vpop.f32.mrf.mxu0
      %v3664 = vadd.f32 0.0, %v3663
      %v3665 = vpop.f32.mrf.mxu0
      %3666 = vmatprep.mubr.f32.mxu0 0.0
      %3667 = vmatmul.mubr.f32.gmra.mxu0 %v3552
      %v3668 = vpop.f32.mrf.mxu0
      %v3669 = vadd.f32 0.0, %v3668
      %v3670 = vpop.f32.mrf.mxu0
      %3671 = vmatprep.mubr.f32.mxu0 0.0
      %3672 = vmatmul.mubr.f32.gmra.mxu0 %v3554
      %v3673 = vpop.f32.mrf.mxu0
      %v3674 = vadd.f32 0.0, %v3673
      %v3675 = vpop.f32.mrf.mxu0
      %3676 = vmatprep.mubr.f32.mxu0 0.0
      %3677 = vmatmul.mubr.f32.gmra.mxu0 %v3556
      %v3678 = vpop.f32.mrf.mxu0
      %v3679 = vadd.f32 0.0, %v3678
      %v3680 = vpop.f32.mrf.mxu0
      %3681 = vmatprep.mubr.f32.mxu0 0.0
      %3682 = vmatmul.mubr.f32.gmra.mxu0 %v3558
      %v3683 = vpop.f32.mrf.mxu0
      %v3684 = vadd.f32 0.0, %v3683
      %v3685 = vpop.f32.mrf.mxu0
      %3686 = vmatprep.mubr.f32.mxu0 0.0
      %3687 = vmatmul.mubr.f32.gmra.mxu0 %v3560
      %v3688 = vpop.f32.mrf.mxu0
      %v3689 = vadd.f32 0.0, %v3688
      %v3690 = vpop.f32.mrf.mxu0
      %3691 = vdwg.mxu0
      %v3692 = vadd.f32 %v3509, %v3639
      %v3693 = vadd.f32 %v3510, %v3644
      %v3694 = vadd.f32 %v3511, %v3649
      %v3695 = vadd.f32 %v3512, %v3654
      %v3696 = vadd.f32 %v3513, %v3659
      %v3697 = vadd.f32 %v3514, %v3664
      %v3698 = vadd.f32 %v3515, %v3669
      %v3699 = vadd.f32 %v3516, %v3674
      %v3700 = vadd.f32 %v3517, %v3679
      %v3701 = vadd.f32 %v3518, %v3684
      %v3702 = vadd.f32 %v3519, %v3689
      %v3703 = vld [vmem:[%s8] sm:$0x1]
      %v3705 = vlaneseq
      %v3706 = vshrl.u32 %v3705, 7
      %v3707 = vsub.s32 0, %v3706
      %v3708 = vrot.slane %v3703, %v3707
      %v3710 = vadd.f32 %v3692, %v3708
      %v3711 = vadd.f32 %v3693, %v3708
      %v3712 = vadd.f32 %v3694, %v3708
      %v3713 = vadd.f32 %v3695, %v3708
      %v3714 = vadd.f32 %v3696, %v3708
      %v3715 = vadd.f32 %v3697, %v3708
      %v3716 = vadd.f32 %v3698, %v3708
      %v3717 = vadd.f32 %v3699, %v3708
      %v3718 = vadd.f32 %v3700, %v3708
      %v3719 = vadd.f32 %v3701, %v3708
      %v3720 = vadd.f32 %v3702, %v3708
      %v3721 = vtanh.pop %v3710
      %v3722 = vtanh.pop %v3711
      %v3723 = vtanh.pop %v3712
      %v3724 = vtanh.pop %v3713
      %v3725 = vtanh.pop %v3714
      %v3726 = vtanh.pop %v3715
      %v3727 = vtanh.pop %v3716
      %v3728 = vtanh.pop %v3717
      %v3729 = vtanh.pop %v3718
      %v3730 = vtanh.pop %v3719
      %v3731 = vtanh.pop %v3720
      %3732 = vst [vmem:[%s332] sm:$0xff] %v3721
      %3733 = vst [vmem:[%s332 + $0x8] sm:$0xff] %v3722
      %3734 = vst [vmem:[%s332 + $0x10] sm:$0xff] %v3723
      %3735 = vst [vmem:[%s332 + $0x18] sm:$0xff] %v3724
      %3736 = vst [vmem:[%s332 + $0x20] sm:$0xff] %v3725
      %3737 = vst [vmem:[%s332 + $0x28] sm:$0xff] %v3726
      %3738 = vst [vmem:[%s332 + $0x30] sm:$0xff] %v3727
      %3739 = vst [vmem:[%s332 + $0x38] sm:$0xff] %v3728
      %3740 = vst [vmem:[%s332 + $0x40] sm:$0xff] %v3729
      %3741 = vst [vmem:[%s332 + $0x48] sm:$0xff] %v3730
      %3742 = vst [vmem:[%s332 + $0x50] sm:$0xff] %v3731
      %p3743 = scmp.lt.s32.totalorder %s20, 1
      %s3744 = scalar_select %p3743, %s20, 1
      %s3745 = smul.addr %s3744, 11
      %s3746 = smul.addr %s3745, 8
      %s3747 = scalar_lea.vmem %s9, %s3746
      // Predicated region
      $region57: #{generator_forward.1} parent=55 // pred_check
        %p3748 = pneg %p232
      $region58: #{generator_forward.1} parent=55 // pred_check_branch
        %3750 = sbr.rel (%p3748) target = $region60
      $region59: #{generator_forward.1} parent=55 // pred_region
        _
      $region60: #{generator_forward.1} parent=55 // pred_fallthru
        _
    $region56: #{generator_forward.1} parent=5 // pred_fallthru
      _
    %p3751 = scmp.le.s32.totalorder 2, %s15
    // Predicated region
    $region61: #{generator_forward.1} parent=5 // pred_check
      %p3752 = pneg %p3751
    $region62: #{generator_forward.1} parent=5 // pred_check_branch
      %3754 = sbr.rel (%p3752) target = $region64
    $region63: #{generator_forward.1} parent=5 // pred_region
      %s3755 = ssub.s32 %s15, 2
      // Predicated region
      $region65: #{generator_forward.1} parent=63 // pred_check
        %p3756 = pneg %p238
      $region66: #{generator_forward.1} parent=63 // pred_check_branch
        %3758 = sbr.rel (%p3756) target = $region68
      $region67: #{generator_forward.1} parent=63 // pred_region
        %p3759 = scmp.lt.s32.totalorder %s21, 1
        %s3760 = scalar_select %p3759, %s21, 1
        %s3761 = smul.addr %s3760, 11
        %s3762 = smul.addr %s3761, 8
        %s3763 = scalar_lea.vmem %s9, %s3762
      $region68: #{generator_forward.1} parent=63 // pred_fallthru
        _
    $region64: #{generator_forward.1} parent=5 // pred_fallthru
      _
  $region6: #{generator_forward.1} parent=0 // loop_footer
    %s19 = sadd.s32 1, %s15
  $region7: #{generator_forward.1} parent=0 // loop_footer_branch
    %14 = sbr.rel target = $region3
  $region8: #{generator_forward.1} parent=0 // loop_exit
    _

</llo_original>
